<compile_context>
chip_gen: v5e
topology: v5e:2x2
jax: 0.10.0
libtpu: 0.0.40
codegen_flags: <defaults>
</compile_context>

<pallas_src>
import functools

import numpy as np
import jax
import jax.numpy as jnp
from jax import lax
from jax.experimental import pallas as pl
from jax.experimental.pallas import tpu as pltpu

HID = 64           # hid_dim of Encoder/Decoder
N_LAYERS = 2       # n_layers of Encoder/Decoder


# ----------------------------------------------------------------------------- kernel

def _lstm_cell_fused(gx, h, c, whh, hid):
    """One LSTM cell update with fused gates.

    gx : (batch, 4H) input contribution + bias (gate order [i, f, o, g])
    whh: (H, 4H) packed recurrent weight (already transposed, same gate order)
    """
    acts = gx + jnp.dot(h, whh, preferred_element_type=jnp.float32)    # (batch, 4H)
    ifo = jax.nn.sigmoid(acts[:, : 3 * hid])                           # i, f, o together
    g = jnp.tanh(acts[:, 3 * hid:])
    i = ifo[:, :hid]
    f = ifo[:, hid:2 * hid]
    o = ifo[:, 2 * hid:]
    c_new = f * c + i * g
    h_new = o * jnp.tanh(c_new)
    return h_new, c_new


def seq2seq_kernel(x_ref,                                   # (seq*batch, 1)
                   e_wih0_ref, e_whh0_ref, e_b0_ref,        # (1,4H), (H,4H), (1,4H)
                   e_wih1_ref, e_whh1_ref, e_b1_ref,        # (H,4H), (H,4H), (1,4H)
                   d_whh0_ref, d_b0_ref,                    # (H,4H), (1,4H)
                   d_wih1_ref, d_whh1_ref, d_b1_ref,        # (H,4H), (H,4H), (1,4H)
                   fc_w_ref, fc_b_ref,                      # (1,H), (1,1)
                   out_ref,                                 # (seq*batch, 1)
                   h_sc, g_sc,                              # VMEM scratch: (S*B,H), (S*B,4H)
                   *, seq, batch, hid):
    B, H = batch, hid
    zeros = jnp.zeros((B, H), jnp.float32)

    # ---------------- encoder layer 0 --------------------------------------------------
    # Input projection + bias for ALL timesteps at once (input feature dim is 1, so this
    # is a broadcast multiply, not a matmul):  (S*B,1) * (1,4H) + (1,4H) -> (S*B,4H)
    g_sc[...] = x_ref[...] * e_wih0_ref[...] + e_b0_ref[...]
    whh = e_whh0_ref[...]                                   # hoisted out of the loop
    h, c = zeros, zeros
    for t in range(seq):                                    # fully unrolled recurrence
        gx = g_sc[pl.ds(t * B, B), :]
        h, c = _lstm_cell_fused(gx, h, c, whh, H)
        h_sc[pl.ds(t * B, B), :] = h
    enc_h0, enc_c0 = h, c

    # ---------------- encoder layer 1 --------------------------------------------------
    # All input projections as one (S*B, H) @ (H, 4H) matmul.
    g_sc[...] = (jnp.dot(h_sc[...], e_wih1_ref[...],
                         preferred_element_type=jnp.float32) + e_b1_ref[...])
    whh = e_whh1_ref[...]
    h, c = zeros, zeros
    for t in range(seq):
        gx = g_sc[pl.ds(t * B, B), :]
        h, c = _lstm_cell_fused(gx, h, c, whh, H)
    enc_h1, enc_c1 = h, c

    # ---------------- decoder layer 0 (input is all zeros => gate preact = bias) -------
    bias0 = d_b0_ref[...]                                   # (1,4H), broadcasts over batch
    whh = d_whh0_ref[...]
    h, c = enc_h0, enc_c0
    for t in range(seq):
        h, c = _lstm_cell_fused(bias0, h, c, whh, H)
        h_sc[pl.ds(t * B, B), :] = h

    # ---------------- decoder layer 1 --------------------------------------------------
    g_sc[...] = (jnp.dot(h_sc[...], d_wih1_ref[...],
                         preferred_element_type=jnp.float32) + d_b1_ref[...])
    whh = d_whh1_ref[...]
    h, c = enc_h1, enc_c1
    for t in range(seq):
        gx = g_sc[pl.ds(t * B, B), :]
        h, c = _lstm_cell_fused(gx, h, c, whh, H)
        h_sc[pl.ds(t * B, B), :] = h                        # buffer h1 for fc_out

    # ---------------- fc_out over all timesteps (out_dim=1 -> VPU mul + lane reduce) ---
    pred = jnp.sum(h_sc[...] * fc_w_ref[...], axis=-1, keepdims=True) + fc_b_ref[...]
    out_ref[...] = pred.astype(out_ref.dtype)               # one lane store


# ----------------------------------------------------------------------------- wrapper

def _pack_w(w, hid):
    # PyTorch (4H, in) with gate-row blocks [i,f,g,o] -> (in, 4H) with columns [i,f,o,g]
    wi, wf, wg, wo = jnp.split(w, 4, axis=0)                # each (H, in)
    return jnp.concatenate([wi, wf, wo, wg], axis=0).T      # (in, 4H)


def _pack_b(b_ih, b_hh, hid):
    b = b_ih + b_hh
    bi, bf, bg, bo = jnp.split(b, 4)
    return jnp.concatenate([bi, bf, bo, bg]).reshape(1, 4 * hid)


def seq2seq_forward(x, params):
    """x: (seq, batch) float32  ->  (seq, batch) float32 (matches Seq2Seq.forward, eval mode)."""
    seq, batch = x.shape
    hid = params["enc"][1]["w_hh"].shape[1]
    x2 = x.reshape(seq * batch, 1).astype(jnp.float32)      # row index = t*batch + b

    e0, e1 = params["enc"]
    d0, d1 = params["dec"]

    args = (
        x2,
        _pack_w(e0["w_ih"], hid), _pack_w(e0["w_hh"], hid), _pack_b(e0["b_ih"], e0["b_hh"], hid),
        _pack_w(e1["w_ih"], hid), _pack_w(e1["w_hh"], hid), _pack_b(e1["b_ih"], e1["b_hh"], hid),
        _pack_w(d0["w_hh"], hid), _pack_b(d0["b_ih"], d0["b_hh"], hid),
        _pack_w(d1["w_ih"], hid), _pack_w(d1["w_hh"], hid), _pack_b(d1["b_ih"], d1["b_hh"], hid),
        params["fc_w"].astype(jnp.float32),                 # (1, H)
        params["fc_b"].reshape(1, 1).astype(jnp.float32),   # (1, 1)
    )

    kernel = functools.partial(seq2seq_kernel, seq=seq, batch=batch, hid=hid)
    vmem = pltpu.MemorySpace.VMEM

    out = pl.pallas_call(
        kernel,
        out_shape=jax.ShapeDtypeStruct((seq * batch, 1), jnp.float32),
        in_specs=[pl.BlockSpec(memory_space=vmem)] * len(args),
        out_specs=pl.BlockSpec(memory_space=vmem),
        scratch_shapes=[
            pltpu.VMEM((seq * batch, hid), jnp.float32),       # per-layer hidden buffer
            pltpu.VMEM((seq * batch, 4 * hid), jnp.float32),   # per-layer gate preactivations
        ],
    )(*args)
    return out.reshape(seq, batch)


# ------------------------------------------------------------------- deterministic init

def init_params(key, hid=HID):
    bound = 1.0 / float(np.sqrt(hid))
    keys = jax.random.split(key, 32)
    it = iter(keys)

    def u(shape, b=bound):
        return jax.random.uniform(next(it), shape, jnp.float32, -b, b)

    def lstm_layer(in_dim):
        return dict(w_ih=u((4 * hid, in_dim)), w_hh=u((4 * hid, hid)),
                    b_ih=u((4 * hid,)), b_hh=u((4 * hid,)))

    return dict(
        enc=[lstm_layer(1), lstm_layer(hid)],     # Encoder: LSTM(1, 64, 2)
        dec=[lstm_layer(1), lstm_layer(hid)],     # Decoder: LSTM(1, 64, 2)
        fc_w=u((1, hid)),                         # fc_out: Linear(64, 1)
        fc_b=u((1,)),
    )


# -------------------------------------------------------------------- pure-JAX reference

def _lstm_layer_ref(x_seq, h0, c0, p):
    def step(carry, xt):
        h, c = carry
        g = xt @ p["w_ih"].T + h @ p["w_hh"].T + p["b_ih"] + p["b_hh"]
        i, f, gg, o = jnp.split(g, 4, axis=-1)
        c = jax.nn.sigmoid(f) * c + jax.nn.sigmoid(i) * jnp.tanh(gg)
        h = jax.nn.sigmoid(o) * jnp.tanh(c)
        return (h, c), h
    (h, c), ys = lax.scan(step, (h0, c0), x_seq)
    return ys, h, c


def seq2seq_ref(x, params):
    seq, batch = x.shape
    hid = params["enc"][1]["w_hh"].shape[1]
    x3 = x[:, :, None]
    zeros = jnp.zeros((batch, hid), jnp.float32)
    y, hs, cs = x3, [], []
    for p in params["enc"]:
        y, h, c = _lstm_layer_ref(y, zeros, zeros, p)
        hs.append(h); cs.append(c)
    y = jnp.zeros_like(x3)
    for l, p in enumerate(params["dec"]):
        y, h, c = _lstm_layer_ref(y, hs[l], cs[l], p)
    pred = y @ params["fc_w"].T + params["fc_b"]
    return pred[..., 0]


# --------------------------------------------------------------------------------- main

if __name__ == "__main__":
    seq_len, batch = 8, 2
    key = jax.random.PRNGKey(0)
    kx, kp = jax.random.split(key)

    x = jax.random.normal(kx, (seq_len, batch), jnp.float32)
    params = init_params(kp)

    out = seq2seq_forward(x, params)
    out = jax.block_until_ready(out)
    assert out.shape == (seq_len, batch), out.shape

    ref = seq2seq_ref(x, params)
    np.testing.assert_allclose(np.asarray(out), np.asarray(ref), atol=2e-2, rtol=2e-2)

    print("KERNEL_OK")
</pallas_src>

<mosaic_0001>
module attributes {stable_mosaic.version = 11 : i64} {
  func.func @seq2seq_kernel(%arg0: memref<16x1xf32, #tpu.memory_space<vmem>>, %arg1: memref<1x256xf32, #tpu.memory_space<vmem>>, %arg2: memref<64x256xf32, #tpu.memory_space<vmem>>, %arg3: memref<1x256xf32, #tpu.memory_space<vmem>>, %arg4: memref<64x256xf32, #tpu.memory_space<vmem>>, %arg5: memref<64x256xf32, #tpu.memory_space<vmem>>, %arg6: memref<1x256xf32, #tpu.memory_space<vmem>>, %arg7: memref<64x256xf32, #tpu.memory_space<vmem>>, %arg8: memref<1x256xf32, #tpu.memory_space<vmem>>, %arg9: memref<64x256xf32, #tpu.memory_space<vmem>>, %arg10: memref<64x256xf32, #tpu.memory_space<vmem>>, %arg11: memref<1x256xf32, #tpu.memory_space<vmem>>, %arg12: memref<1x64xf32, #tpu.memory_space<vmem>>, %arg13: memref<1x1xf32, #tpu.memory_space<vmem>>, %arg14: memref<16x1xf32, #tpu.memory_space<vmem>>, %arg15: memref<16x64xf32, #tpu.memory_space<vmem>>, %arg16: memref<16x256xf32, #tpu.memory_space<vmem>>) attributes {dimension_semantics = [], scalar_prefetch = 0 : i64, scratch_operands = 2 : i64, tpu.core_type = #tpu.core_type<tc>} {
    %cst = arith.constant 0.000000e+00 : f32
    %0 = vector.broadcast %cst : f32 to vector<2x64xf32>
    %c0 = arith.constant 0 : index
    %c0_0 = arith.constant 0 : index
    %1 = vector.load %arg0[%c0, %c0_0] : memref<16x1xf32, #tpu.memory_space<vmem>>, vector<16x1xf32>
    %c0_1 = arith.constant 0 : index
    %c0_2 = arith.constant 0 : index
    %2 = vector.load %arg1[%c0_1, %c0_2] : memref<1x256xf32, #tpu.memory_space<vmem>>, vector<1x256xf32>
    %3 = vector.broadcast %1 : vector<16x1xf32> to vector<16x256xf32>
    %4 = vector.broadcast %2 : vector<1x256xf32> to vector<16x256xf32>
    %5 = arith.mulf %3, %4 : vector<16x256xf32>
    %c0_3 = arith.constant 0 : index
    %c0_4 = arith.constant 0 : index
    %6 = vector.load %arg3[%c0_3, %c0_4] : memref<1x256xf32, #tpu.memory_space<vmem>>, vector<1x256xf32>
    %7 = vector.broadcast %6 : vector<1x256xf32> to vector<16x256xf32>
    %8 = arith.addf %5, %7 : vector<16x256xf32>
    %c0_5 = arith.constant 0 : index
    %c0_6 = arith.constant 0 : index
    %9 = vector.load %arg16[%c0_5, %c0_6] : memref<16x256xf32, #tpu.memory_space<vmem>>, vector<16x256xf32>
    tpu.vector_store %arg16[%c0_5, %c0_6], %8 {strides = array<i32>} : memref<16x256xf32, #tpu.memory_space<vmem>>, vector<16x256xf32>,
    %c0_7 = arith.constant 0 : index
    %c0_8 = arith.constant 0 : index
    %10 = vector.load %arg2[%c0_7, %c0_8] : memref<64x256xf32, #tpu.memory_space<vmem>>, vector<64x256xf32>
    %c0_9 = arith.constant 0 : index
    %c0_10 = arith.constant 0 : index
    %11 = vector.load %arg16[%c0_9, %c0_10] : memref<16x256xf32, #tpu.memory_space<vmem>>, vector<2x256xf32>
    %cst_11 = arith.constant dense<0.000000e+00> : vector<2x256xf32>
    %12 = tpu.matmul %0, %10, %cst_11 {dimension_numbers = #tpu.dot_dimension_numbers<[1], [0], [0], [1], [0, 0, 1, 1], [], []>} : vector<2x64xf32>, vector<64x256xf32>, vector<2x256xf32> -> vector<2x256xf32>
    %13 = arith.addf %11, %12 : vector<2x256xf32>
    %14 = vector.extract_strided_slice %13 {offsets = [0, 0], sizes = [2, 192], strides = [1, 1]} : vector<2x256xf32> to vector<2x192xf32>
    %15 = arith.negf %14 : vector<2x192xf32>
    %16 = math.exp %15 : vector<2x192xf32>
    %cst_12 = arith.constant 1.000000e+00 : f32
    %17 = vector.broadcast %cst_12 : f32 to vector<2x192xf32>
    %18 = arith.addf %17, %16 : vector<2x192xf32>
    %19 = arith.divf %17, %18 : vector<2x192xf32>
    %20 = vector.extract_strided_slice %13 {offsets = [0, 192], sizes = [2, 64], strides = [1, 1]} : vector<2x256xf32> to vector<2x64xf32>
    %21 = math.tanh %20 : vector<2x64xf32>
    %22 = vector.extract_strided_slice %19 {offsets = [0, 0], sizes = [2, 64], strides = [1, 1]} : vector<2x192xf32> to vector<2x64xf32>
    %23 = vector.extract_strided_slice %19 {offsets = [0, 64], sizes = [2, 64], strides = [1, 1]} : vector<2x192xf32> to vector<2x64xf32>
    %24 = vector.extract_strided_slice %19 {offsets = [0, 128], sizes = [2, 64], strides = [1, 1]} : vector<2x192xf32> to vector<2x64xf32>
    %25 = arith.mulf %23, %0 : vector<2x64xf32>
    %26 = arith.mulf %22, %21 : vector<2x64xf32>
    %27 = arith.addf %25, %26 : vector<2x64xf32>
    %28 = math.tanh %27 : vector<2x64xf32>
    %29 = arith.mulf %24, %28 : vector<2x64xf32>
    %c0_13 = arith.constant 0 : index
    %c0_14 = arith.constant 0 : index
    %30 = vector.load %arg15[%c0_13, %c0_14] : memref<16x64xf32, #tpu.memory_space<vmem>>, vector<2x64xf32>
    tpu.vector_store %arg15[%c0_13, %c0_14], %29 {strides = array<i32>} : memref<16x64xf32, #tpu.memory_space<vmem>>, vector<2x64xf32>,
    %c2 = arith.constant 2 : index
    %c0_15 = arith.constant 0 : index
    %31 = vector.load %arg16[%c2, %c0_15] : memref<16x256xf32, #tpu.memory_space<vmem>>, vector<2x256xf32>
    %cst_16 = arith.constant dense<0.000000e+00> : vector<2x256xf32>
    %32 = tpu.matmul %29, %10, %cst_16 {dimension_numbers = #tpu.dot_dimension_numbers<[1], [0], [0], [1], [0, 0, 1, 1], [], []>} : vector<2x64xf32>, vector<64x256xf32>, vector<2x256xf32> -> vector<2x256xf32>
    %33 = arith.addf %31, %32 : vector<2x256xf32>
    %34 = vector.extract_strided_slice %33 {offsets = [0, 0], sizes = [2, 192], strides = [1, 1]} : vector<2x256xf32> to vector<2x192xf32>
    %35 = arith.negf %34 : vector<2x192xf32>
    %36 = math.exp %35 : vector<2x192xf32>
    %cst_17 = arith.constant 1.000000e+00 : f32
    %37 = vector.broadcast %cst_17 : f32 to vector<2x192xf32>
    %38 = arith.addf %37, %36 : vector<2x192xf32>
    %39 = arith.divf %37, %38 : vector<2x192xf32>
    %40 = vector.extract_strided_slice %33 {offsets = [0, 192], sizes = [2, 64], strides = [1, 1]} : vector<2x256xf32> to vector<2x64xf32>
    %41 = math.tanh %40 : vector<2x64xf32>
    %42 = vector.extract_strided_slice %39 {offsets = [0, 0], sizes = [2, 64], strides = [1, 1]} : vector<2x192xf32> to vector<2x64xf32>
    %43 = vector.extract_strided_slice %39 {offsets = [0, 64], sizes = [2, 64], strides = [1, 1]} : vector<2x192xf32> to vector<2x64xf32>
    %44 = vector.extract_strided_slice %39 {offsets = [0, 128], sizes = [2, 64], strides = [1, 1]} : vector<2x192xf32> to vector<2x64xf32>
    %45 = arith.mulf %43, %27 : vector<2x64xf32>
    %46 = arith.mulf %42, %41 : vector<2x64xf32>
    %47 = arith.addf %45, %46 : vector<2x64xf32>
    %48 = math.tanh %47 : vector<2x64xf32>
    %49 = arith.mulf %44, %48 : vector<2x64xf32>
    %c2_18 = arith.constant 2 : index
    %c0_19 = arith.constant 0 : index
    %50 = vector.load %arg15[%c2_18, %c0_19] : memref<16x64xf32, #tpu.memory_space<vmem>>, vector<2x64xf32>
    tpu.vector_store %arg15[%c2_18, %c0_19], %49 {strides = array<i32>} : memref<16x64xf32, #tpu.memory_space<vmem>>, vector<2x64xf32>,
    %c4 = arith.constant 4 : index
    %c0_20 = arith.constant 0 : index
    %51 = vector.load %arg16[%c4, %c0_20] : memref<16x256xf32, #tpu.memory_space<vmem>>, vector<2x256xf32>
    %cst_21 = arith.constant dense<0.000000e+00> : vector<2x256xf32>
    %52 = tpu.matmul %49, %10, %cst_21 {dimension_numbers = #tpu.dot_dimension_numbers<[1], [0], [0], [1], [0, 0, 1, 1], [], []>} : vector<2x64xf32>, vector<64x256xf32>, vector<2x256xf32> -> vector<2x256xf32>
    %53 = arith.addf %51, %52 : vector<2x256xf32>
    %54 = vector.extract_strided_slice %53 {offsets = [0, 0], sizes = [2, 192], strides = [1, 1]} : vector<2x256xf32> to vector<2x192xf32>
    %55 = arith.negf %54 : vector<2x192xf32>
    %56 = math.exp %55 : vector<2x192xf32>
    %cst_22 = arith.constant 1.000000e+00 : f32
    %57 = vector.broadcast %cst_22 : f32 to vector<2x192xf32>
    %58 = arith.addf %57, %56 : vector<2x192xf32>
    %59 = arith.divf %57, %58 : vector<2x192xf32>
    %60 = vector.extract_strided_slice %53 {offsets = [0, 192], sizes = [2, 64], strides = [1, 1]} : vector<2x256xf32> to vector<2x64xf32>
    %61 = math.tanh %60 : vector<2x64xf32>
    %62 = vector.extract_strided_slice %59 {offsets = [0, 0], sizes = [2, 64], strides = [1, 1]} : vector<2x192xf32> to vector<2x64xf32>
    %63 = vector.extract_strided_slice %59 {offsets = [0, 64], sizes = [2, 64], strides = [1, 1]} : vector<2x192xf32> to vector<2x64xf32>
    %64 = vector.extract_strided_slice %59 {offsets = [0, 128], sizes = [2, 64], strides = [1, 1]} : vector<2x192xf32> to vector<2x64xf32>
    %65 = arith.mulf %63, %47 : vector<2x64xf32>
    %66 = arith.mulf %62, %61 : vector<2x64xf32>
    %67 = arith.addf %65, %66 : vector<2x64xf32>
    %68 = math.tanh %67 : vector<2x64xf32>
    %69 = arith.mulf %64, %68 : vector<2x64xf32>
    %c4_23 = arith.constant 4 : index
    %c0_24 = arith.constant 0 : index
    %70 = vector.load %arg15[%c4_23, %c0_24] : memref<16x64xf32, #tpu.memory_space<vmem>>, vector<2x64xf32>
    tpu.vector_store %arg15[%c4_23, %c0_24], %69 {strides = array<i32>} : memref<16x64xf32, #tpu.memory_space<vmem>>, vector<2x64xf32>,
    %c6 = arith.constant 6 : index
    %c0_25 = arith.constant 0 : index
    %71 = vector.load %arg16[%c6, %c0_25] : memref<16x256xf32, #tpu.memory_space<vmem>>, vector<2x256xf32>
    %cst_26 = arith.constant dense<0.000000e+00> : vector<2x256xf32>
    %72 = tpu.matmul %69, %10, %cst_26 {dimension_numbers = #tpu.dot_dimension_numbers<[1], [0], [0], [1], [0, 0, 1, 1], [], []>} : vector<2x64xf32>, vector<64x256xf32>, vector<2x256xf32> -> vector<2x256xf32>
    %73 = arith.addf %71, %72 : vector<2x256xf32>
    %74 = vector.extract_strided_slice %73 {offsets = [0, 0], sizes = [2, 192], strides = [1, 1]} : vector<2x256xf32> to vector<2x192xf32>
    %75 = arith.negf %74 : vector<2x192xf32>
    %76 = math.exp %75 : vector<2x192xf32>
    %cst_27 = arith.constant 1.000000e+00 : f32
    %77 = vector.broadcast %cst_27 : f32 to vector<2x192xf32>
    %78 = arith.addf %77, %76 : vector<2x192xf32>
    %79 = arith.divf %77, %78 : vector<2x192xf32>
    %80 = vector.extract_strided_slice %73 {offsets = [0, 192], sizes = [2, 64], strides = [1, 1]} : vector<2x256xf32> to vector<2x64xf32>
    %81 = math.tanh %80 : vector<2x64xf32>
    %82 = vector.extract_strided_slice %79 {offsets = [0, 0], sizes = [2, 64], strides = [1, 1]} : vector<2x192xf32> to vector<2x64xf32>
    %83 = vector.extract_strided_slice %79 {offsets = [0, 64], sizes = [2, 64], strides = [1, 1]} : vector<2x192xf32> to vector<2x64xf32>
    %84 = vector.extract_strided_slice %79 {offsets = [0, 128], sizes = [2, 64], strides = [1, 1]} : vector<2x192xf32> to vector<2x64xf32>
    %85 = arith.mulf %83, %67 : vector<2x64xf32>
    %86 = arith.mulf %82, %81 : vector<2x64xf32>
    %87 = arith.addf %85, %86 : vector<2x64xf32>
    %88 = math.tanh %87 : vector<2x64xf32>
    %89 = arith.mulf %84, %88 : vector<2x64xf32>
    %c6_28 = arith.constant 6 : index
    %c0_29 = arith.constant 0 : index
    %90 = vector.load %arg15[%c6_28, %c0_29] : memref<16x64xf32, #tpu.memory_space<vmem>>, vector<2x64xf32>
    tpu.vector_store %arg15[%c6_28, %c0_29], %89 {strides = array<i32>} : memref<16x64xf32, #tpu.memory_space<vmem>>, vector<2x64xf32>,
    %c8 = arith.constant 8 : index
    %c0_30 = arith.constant 0 : index
    %91 = vector.load %arg16[%c8, %c0_30] : memref<16x256xf32, #tpu.memory_space<vmem>>, vector<2x256xf32>
    %cst_31 = arith.constant dense<0.000000e+00> : vector<2x256xf32>
    %92 = tpu.matmul %89, %10, %cst_31 {dimension_numbers = #tpu.dot_dimension_numbers<[1], [0], [0], [1], [0, 0, 1, 1], [], []>} : vector<2x64xf32>, vector<64x256xf32>, vector<2x256xf32> -> vector<2x256xf32>
    %93 = arith.addf %91, %92 : vector<2x256xf32>
    %94 = vector.extract_strided_slice %93 {offsets = [0, 0], sizes = [2, 192], strides = [1, 1]} : vector<2x256xf32> to vector<2x192xf32>
    %95 = arith.negf %94 : vector<2x192xf32>
    %96 = math.exp %95 : vector<2x192xf32>
    %cst_32 = arith.constant 1.000000e+00 : f32
    %97 = vector.broadcast %cst_32 : f32 to vector<2x192xf32>
    %98 = arith.addf %97, %96 : vector<2x192xf32>
    %99 = arith.divf %97, %98 : vector<2x192xf32>
    %100 = vector.extract_strided_slice %93 {offsets = [0, 192], sizes = [2, 64], strides = [1, 1]} : vector<2x256xf32> to vector<2x64xf32>
    %101 = math.tanh %100 : vector<2x64xf32>
    %102 = vector.extract_strided_slice %99 {offsets = [0, 0], sizes = [2, 64], strides = [1, 1]} : vector<2x192xf32> to vector<2x64xf32>
    %103 = vector.extract_strided_slice %99 {offsets = [0, 64], sizes = [2, 64], strides = [1, 1]} : vector<2x192xf32> to vector<2x64xf32>
    %104 = vector.extract_strided_slice %99 {offsets = [0, 128], sizes = [2, 64], strides = [1, 1]} : vector<2x192xf32> to vector<2x64xf32>
    %105 = arith.mulf %103, %87 : vector<2x64xf32>
    %106 = arith.mulf %102, %101 : vector<2x64xf32>
    %107 = arith.addf %105, %106 : vector<2x64xf32>
    %108 = math.tanh %107 : vector<2x64xf32>
    %109 = arith.mulf %104, %108 : vector<2x64xf32>
    %c8_33 = arith.constant 8 : index
    %c0_34 = arith.constant 0 : index
    %110 = vector.load %arg15[%c8_33, %c0_34] : memref<16x64xf32, #tpu.memory_space<vmem>>, vector<2x64xf32>
    tpu.vector_store %arg15[%c8_33, %c0_34], %109 {strides = array<i32>} : memref<16x64xf32, #tpu.memory_space<vmem>>, vector<2x64xf32>,
    %c10 = arith.constant 10 : index
    %c0_35 = arith.constant 0 : index
    %111 = vector.load %arg16[%c10, %c0_35] : memref<16x256xf32, #tpu.memory_space<vmem>>, vector<2x256xf32>
    %cst_36 = arith.constant dense<0.000000e+00> : vector<2x256xf32>
    %112 = tpu.matmul %109, %10, %cst_36 {dimension_numbers = #tpu.dot_dimension_numbers<[1], [0], [0], [1], [0, 0, 1, 1], [], []>} : vector<2x64xf32>, vector<64x256xf32>, vector<2x256xf32> -> vector<2x256xf32>
    %113 = arith.addf %111, %112 : vector<2x256xf32>
    %114 = vector.extract_strided_slice %113 {offsets = [0, 0], sizes = [2, 192], strides = [1, 1]} : vector<2x256xf32> to vector<2x192xf32>
    %115 = arith.negf %114 : vector<2x192xf32>
    %116 = math.exp %115 : vector<2x192xf32>
    %cst_37 = arith.constant 1.000000e+00 : f32
    %117 = vector.broadcast %cst_37 : f32 to vector<2x192xf32>
    %118 = arith.addf %117, %116 : vector<2x192xf32>
    %119 = arith.divf %117, %118 : vector<2x192xf32>
    %120 = vector.extract_strided_slice %113 {offsets = [0, 192], sizes = [2, 64], strides = [1, 1]} : vector<2x256xf32> to vector<2x64xf32>
    %121 = math.tanh %120 : vector<2x64xf32>
    %122 = vector.extract_strided_slice %119 {offsets = [0, 0], sizes = [2, 64], strides = [1, 1]} : vector<2x192xf32> to vector<2x64xf32>
    %123 = vector.extract_strided_slice %119 {offsets = [0, 64], sizes = [2, 64], strides = [1, 1]} : vector<2x192xf32> to vector<2x64xf32>
    %124 = vector.extract_strided_slice %119 {offsets = [0, 128], sizes = [2, 64], strides = [1, 1]} : vector<2x192xf32> to vector<2x64xf32>
    %125 = arith.mulf %123, %107 : vector<2x64xf32>
    %126 = arith.mulf %122, %121 : vector<2x64xf32>
    %127 = arith.addf %125, %126 : vector<2x64xf32>
    %128 = math.tanh %127 : vector<2x64xf32>
    %129 = arith.mulf %124, %128 : vector<2x64xf32>
    %c10_38 = arith.constant 10 : index
    %c0_39 = arith.constant 0 : index
    %130 = vector.load %arg15[%c10_38, %c0_39] : memref<16x64xf32, #tpu.memory_space<vmem>>, vector<2x64xf32>
    tpu.vector_store %arg15[%c10_38, %c0_39], %129 {strides = array<i32>} : memref<16x64xf32, #tpu.memory_space<vmem>>, vector<2x64xf32>,
    %c12 = arith.constant 12 : index
    %c0_40 = arith.constant 0 : index
    %131 = vector.load %arg16[%c12, %c0_40] : memref<16x256xf32, #tpu.memory_space<vmem>>, vector<2x256xf32>
    %cst_41 = arith.constant dense<0.000000e+00> : vector<2x256xf32>
    %132 = tpu.matmul %129, %10, %cst_41 {dimension_numbers = #tpu.dot_dimension_numbers<[1], [0], [0], [1], [0, 0, 1, 1], [], []>} : vector<2x64xf32>, vector<64x256xf32>, vector<2x256xf32> -> vector<2x256xf32>
    %133 = arith.addf %131, %132 : vector<2x256xf32>
    %134 = vector.extract_strided_slice %133 {offsets = [0, 0], sizes = [2, 192], strides = [1, 1]} : vector<2x256xf32> to vector<2x192xf32>
    %135 = arith.negf %134 : vector<2x192xf32>
    %136 = math.exp %135 : vector<2x192xf32>
    %cst_42 = arith.constant 1.000000e+00 : f32
    %137 = vector.broadcast %cst_42 : f32 to vector<2x192xf32>
    %138 = arith.addf %137, %136 : vector<2x192xf32>
    %139 = arith.divf %137, %138 : vector<2x192xf32>
    %140 = vector.extract_strided_slice %133 {offsets = [0, 192], sizes = [2, 64], strides = [1, 1]} : vector<2x256xf32> to vector<2x64xf32>
    %141 = math.tanh %140 : vector<2x64xf32>
    %142 = vector.extract_strided_slice %139 {offsets = [0, 0], sizes = [2, 64], strides = [1, 1]} : vector<2x192xf32> to vector<2x64xf32>
    %143 = vector.extract_strided_slice %139 {offsets = [0, 64], sizes = [2, 64], strides = [1, 1]} : vector<2x192xf32> to vector<2x64xf32>
    %144 = vector.extract_strided_slice %139 {offsets = [0, 128], sizes = [2, 64], strides = [1, 1]} : vector<2x192xf32> to vector<2x64xf32>
    %145 = arith.mulf %143, %127 : vector<2x64xf32>
    %146 = arith.mulf %142, %141 : vector<2x64xf32>
    %147 = arith.addf %145, %146 : vector<2x64xf32>
    %148 = math.tanh %147 : vector<2x64xf32>
    %149 = arith.mulf %144, %148 : vector<2x64xf32>
    %c12_43 = arith.constant 12 : index
    %c0_44 = arith.constant 0 : index
    %150 = vector.load %arg15[%c12_43, %c0_44] : memref<16x64xf32, #tpu.memory_space<vmem>>, vector<2x64xf32>
    tpu.vector_store %arg15[%c12_43, %c0_44], %149 {strides = array<i32>} : memref<16x64xf32, #tpu.memory_space<vmem>>, vector<2x64xf32>,
    %c14 = arith.constant 14 : index
    %c0_45 = arith.constant 0 : index
    %151 = vector.load %arg16[%c14, %c0_45] : memref<16x256xf32, #tpu.memory_space<vmem>>, vector<2x256xf32>
    %cst_46 = arith.constant dense<0.000000e+00> : vector<2x256xf32>
    %152 = tpu.matmul %149, %10, %cst_46 {dimension_numbers = #tpu.dot_dimension_numbers<[1], [0], [0], [1], [0, 0, 1, 1], [], []>} : vector<2x64xf32>, vector<64x256xf32>, vector<2x256xf32> -> vector<2x256xf32>
    %153 = arith.addf %151, %152 : vector<2x256xf32>
    %154 = vector.extract_strided_slice %153 {offsets = [0, 0], sizes = [2, 192], strides = [1, 1]} : vector<2x256xf32> to vector<2x192xf32>
    %155 = arith.negf %154 : vector<2x192xf32>
    %156 = math.exp %155 : vector<2x192xf32>
    %cst_47 = arith.constant 1.000000e+00 : f32
    %157 = vector.broadcast %cst_47 : f32 to vector<2x192xf32>
    %158 = arith.addf %157, %156 : vector<2x192xf32>
    %159 = arith.divf %157, %158 : vector<2x192xf32>
    %160 = vector.extract_strided_slice %153 {offsets = [0, 192], sizes = [2, 64], strides = [1, 1]} : vector<2x256xf32> to vector<2x64xf32>
    %161 = math.tanh %160 : vector<2x64xf32>
    %162 = vector.extract_strided_slice %159 {offsets = [0, 0], sizes = [2, 64], strides = [1, 1]} : vector<2x192xf32> to vector<2x64xf32>
    %163 = vector.extract_strided_slice %159 {offsets = [0, 64], sizes = [2, 64], strides = [1, 1]} : vector<2x192xf32> to vector<2x64xf32>
    %164 = vector.extract_strided_slice %159 {offsets = [0, 128], sizes = [2, 64], strides = [1, 1]} : vector<2x192xf32> to vector<2x64xf32>
    %165 = arith.mulf %163, %147 : vector<2x64xf32>
    %166 = arith.mulf %162, %161 : vector<2x64xf32>
    %167 = arith.addf %165, %166 : vector<2x64xf32>
    %168 = math.tanh %167 : vector<2x64xf32>
    %169 = arith.mulf %164, %168 : vector<2x64xf32>
    %c14_48 = arith.constant 14 : index
    %c0_49 = arith.constant 0 : index
    %170 = vector.load %arg15[%c14_48, %c0_49] : memref<16x64xf32, #tpu.memory_space<vmem>>, vector<2x64xf32>
    tpu.vector_store %arg15[%c14_48, %c0_49], %169 {strides = array<i32>} : memref<16x64xf32, #tpu.memory_space<vmem>>, vector<2x64xf32>,
    %c0_50 = arith.constant 0 : index
    %c0_51 = arith.constant 0 : index
    %171 = vector.load %arg15[%c0_50, %c0_51] : memref<16x64xf32, #tpu.memory_space<vmem>>, vector<16x64xf32>
    %c0_52 = arith.constant 0 : index
    %c0_53 = arith.constant 0 : index
    %172 = vector.load %arg4[%c0_52, %c0_53] : memref<64x256xf32, #tpu.memory_space<vmem>>, vector<64x256xf32>
    %cst_54 = arith.constant dense<0.000000e+00> : vector<16x256xf32>
    %173 = tpu.matmul %171, %172, %cst_54 {dimension_numbers = #tpu.dot_dimension_numbers<[1], [0], [0], [1], [0, 0, 1, 1], [], []>} : vector<16x64xf32>, vector<64x256xf32>, vector<16x256xf32> -> vector<16x256xf32>
    %c0_55 = arith.constant 0 : index
    %c0_56 = arith.constant 0 : index
    %174 = vector.load %arg6[%c0_55, %c0_56] : memref<1x256xf32, #tpu.memory_space<vmem>>, vector<1x256xf32>
    %175 = vector.broadcast %174 : vector<1x256xf32> to vector<16x256xf32>
    %176 = arith.addf %173, %175 : vector<16x256xf32>
    %c0_57 = arith.constant 0 : index
    %c0_58 = arith.constant 0 : index
    %177 = vector.load %arg16[%c0_57, %c0_58] : memref<16x256xf32, #tpu.memory_space<vmem>>, vector<16x256xf32>
    tpu.vector_store %arg16[%c0_57, %c0_58], %176 {strides = array<i32>} : memref<16x256xf32, #tpu.memory_space<vmem>>, vector<16x256xf32>,
    %c0_59 = arith.constant 0 : index
    %c0_60 = arith.constant 0 : index
    %178 = vector.load %arg5[%c0_59, %c0_60] : memref<64x256xf32, #tpu.memory_space<vmem>>, vector<64x256xf32>
    %c0_61 = arith.constant 0 : index
    %c0_62 = arith.constant 0 : index
    %179 = vector.load %arg16[%c0_61, %c0_62] : memref<16x256xf32, #tpu.memory_space<vmem>>, vector<2x256xf32>
    %cst_63 = arith.constant dense<0.000000e+00> : vector<2x256xf32>
    %180 = tpu.matmul %0, %178, %cst_63 {dimension_numbers = #tpu.dot_dimension_numbers<[1], [0], [0], [1], [0, 0, 1, 1], [], []>} : vector<2x64xf32>, vector<64x256xf32>, vector<2x256xf32> -> vector<2x256xf32>
    %181 = arith.addf %179, %180 : vector<2x256xf32>
    %182 = vector.extract_strided_slice %181 {offsets = [0, 0], sizes = [2, 192], strides = [1, 1]} : vector<2x256xf32> to vector<2x192xf32>
    %183 = arith.negf %182 : vector<2x192xf32>
    %184 = math.exp %183 : vector<2x192xf32>
    %cst_64 = arith.constant 1.000000e+00 : f32
    %185 = vector.broadcast %cst_64 : f32 to vector<2x192xf32>
    %186 = arith.addf %185, %184 : vector<2x192xf32>
    %187 = arith.divf %185, %186 : vector<2x192xf32>
    %188 = vector.extract_strided_slice %181 {offsets = [0, 192], sizes = [2, 64], strides = [1, 1]} : vector<2x256xf32> to vector<2x64xf32>
    %189 = math.tanh %188 : vector<2x64xf32>
    %190 = vector.extract_strided_slice %187 {offsets = [0, 0], sizes = [2, 64], strides = [1, 1]} : vector<2x192xf32> to vector<2x64xf32>
    %191 = vector.extract_strided_slice %187 {offsets = [0, 64], sizes = [2, 64], strides = [1, 1]} : vector<2x192xf32> to vector<2x64xf32>
    %192 = vector.extract_strided_slice %187 {offsets = [0, 128], sizes = [2, 64], strides = [1, 1]} : vector<2x192xf32> to vector<2x64xf32>
    %193 = arith.mulf %191, %0 : vector<2x64xf32>
    %194 = arith.mulf %190, %189 : vector<2x64xf32>
    %195 = arith.addf %193, %194 : vector<2x64xf32>
    %196 = math.tanh %195 : vector<2x64xf32>
    %197 = arith.mulf %192, %196 : vector<2x64xf32>
    %c2_65 = arith.constant 2 : index
    %c0_66 = arith.constant 0 : index
    %198 = vector.load %arg16[%c2_65, %c0_66] : memref<16x256xf32, #tpu.memory_space<vmem>>, vector<2x256xf32>
    %cst_67 = arith.constant dense<0.000000e+00> : vector<2x256xf32>
    %199 = tpu.matmul %197, %178, %cst_67 {dimension_numbers = #tpu.dot_dimension_numbers<[1], [0], [0], [1], [0, 0, 1, 1], [], []>} : vector<2x64xf32>, vector<64x256xf32>, vector<2x256xf32> -> vector<2x256xf32>
    %200 = arith.addf %198, %199 : vector<2x256xf32>
    %201 = vector.extract_strided_slice %200 {offsets = [0, 0], sizes = [2, 192], strides = [1, 1]} : vector<2x256xf32> to vector<2x192xf32>
    %202 = arith.negf %201 : vector<2x192xf32>
    %203 = math.exp %202 : vector<2x192xf32>
    %cst_68 = arith.constant 1.000000e+00 : f32
    %204 = vector.broadcast %cst_68 : f32 to vector<2x192xf32>
    %205 = arith.addf %204, %203 : vector<2x192xf32>
    %206 = arith.divf %204, %205 : vector<2x192xf32>
    %207 = vector.extract_strided_slice %200 {offsets = [0, 192], sizes = [2, 64], strides = [1, 1]} : vector<2x256xf32> to vector<2x64xf32>
    %208 = math.tanh %207 : vector<2x64xf32>
    %209 = vector.extract_strided_slice %206 {offsets = [0, 0], sizes = [2, 64], strides = [1, 1]} : vector<2x192xf32> to vector<2x64xf32>
    %210 = vector.extract_strided_slice %206 {offsets = [0, 64], sizes = [2, 64], strides = [1, 1]} : vector<2x192xf32> to vector<2x64xf32>
    %211 = vector.extract_strided_slice %206 {offsets = [0, 128], sizes = [2, 64], strides = [1, 1]} : vector<2x192xf32> to vector<2x64xf32>
    %212 = arith.mulf %210, %195 : vector<2x64xf32>
    %213 = arith.mulf %209, %208 : vector<2x64xf32>
    %214 = arith.addf %212, %213 : vector<2x64xf32>
    %215 = math.tanh %214 : vector<2x64xf32>
    %216 = arith.mulf %211, %215 : vector<2x64xf32>
    %c4_69 = arith.constant 4 : index
    %c0_70 = arith.constant 0 : index
    %217 = vector.load %arg16[%c4_69, %c0_70] : memref<16x256xf32, #tpu.memory_space<vmem>>, vector<2x256xf32>
    %cst_71 = arith.constant dense<0.000000e+00> : vector<2x256xf32>
    %218 = tpu.matmul %216, %178, %cst_71 {dimension_numbers = #tpu.dot_dimension_numbers<[1], [0], [0], [1], [0, 0, 1, 1], [], []>} : vector<2x64xf32>, vector<64x256xf32>, vector<2x256xf32> -> vector<2x256xf32>
    %219 = arith.addf %217, %218 : vector<2x256xf32>
    %220 = vector.extract_strided_slice %219 {offsets = [0, 0], sizes = [2, 192], strides = [1, 1]} : vector<2x256xf32> to vector<2x192xf32>
    %221 = arith.negf %220 : vector<2x192xf32>
    %222 = math.exp %221 : vector<2x192xf32>
    %cst_72 = arith.constant 1.000000e+00 : f32
    %223 = vector.broadcast %cst_72 : f32 to vector<2x192xf32>
    %224 = arith.addf %223, %222 : vector<2x192xf32>
    %225 = arith.divf %223, %224 : vector<2x192xf32>
    %226 = vector.extract_strided_slice %219 {offsets = [0, 192], sizes = [2, 64], strides = [1, 1]} : vector<2x256xf32> to vector<2x64xf32>
    %227 = math.tanh %226 : vector<2x64xf32>
    %228 = vector.extract_strided_slice %225 {offsets = [0, 0], sizes = [2, 64], strides = [1, 1]} : vector<2x192xf32> to vector<2x64xf32>
    %229 = vector.extract_strided_slice %225 {offsets = [0, 64], sizes = [2, 64], strides = [1, 1]} : vector<2x192xf32> to vector<2x64xf32>
    %230 = vector.extract_strided_slice %225 {offsets = [0, 128], sizes = [2, 64], strides = [1, 1]} : vector<2x192xf32> to vector<2x64xf32>
    %231 = arith.mulf %229, %214 : vector<2x64xf32>
    %232 = arith.mulf %228, %227 : vector<2x64xf32>
    %233 = arith.addf %231, %232 : vector<2x64xf32>
    %234 = math.tanh %233 : vector<2x64xf32>
    %235 = arith.mulf %230, %234 : vector<2x64xf32>
    %c6_73 = arith.constant 6 : index
    %c0_74 = arith.constant 0 : index
    %236 = vector.load %arg16[%c6_73, %c0_74] : memref<16x256xf32, #tpu.memory_space<vmem>>, vector<2x256xf32>
    %cst_75 = arith.constant dense<0.000000e+00> : vector<2x256xf32>
    %237 = tpu.matmul %235, %178, %cst_75 {dimension_numbers = #tpu.dot_dimension_numbers<[1], [0], [0], [1], [0, 0, 1, 1], [], []>} : vector<2x64xf32>, vector<64x256xf32>, vector<2x256xf32> -> vector<2x256xf32>
    %238 = arith.addf %236, %237 : vector<2x256xf32>
    %239 = vector.extract_strided_slice %238 {offsets = [0, 0], sizes = [2, 192], strides = [1, 1]} : vector<2x256xf32> to vector<2x192xf32>
    %240 = arith.negf %239 : vector<2x192xf32>
    %241 = math.exp %240 : vector<2x192xf32>
    %cst_76 = arith.constant 1.000000e+00 : f32
    %242 = vector.broadcast %cst_76 : f32 to vector<2x192xf32>
    %243 = arith.addf %242, %241 : vector<2x192xf32>
    %244 = arith.divf %242, %243 : vector<2x192xf32>
    %245 = vector.extract_strided_slice %238 {offsets = [0, 192], sizes = [2, 64], strides = [1, 1]} : vector<2x256xf32> to vector<2x64xf32>
    %246 = math.tanh %245 : vector<2x64xf32>
    %247 = vector.extract_strided_slice %244 {offsets = [0, 0], sizes = [2, 64], strides = [1, 1]} : vector<2x192xf32> to vector<2x64xf32>
    %248 = vector.extract_strided_slice %244 {offsets = [0, 64], sizes = [2, 64], strides = [1, 1]} : vector<2x192xf32> to vector<2x64xf32>
    %249 = vector.extract_strided_slice %244 {offsets = [0, 128], sizes = [2, 64], strides = [1, 1]} : vector<2x192xf32> to vector<2x64xf32>
    %250 = arith.mulf %248, %233 : vector<2x64xf32>
    %251 = arith.mulf %247, %246 : vector<2x64xf32>
    %252 = arith.addf %250, %251 : vector<2x64xf32>
    %253 = math.tanh %252 : vector<2x64xf32>
    %254 = arith.mulf %249, %253 : vector<2x64xf32>
    %c8_77 = arith.constant 8 : index
    %c0_78 = arith.constant 0 : index
    %255 = vector.load %arg16[%c8_77, %c0_78] : memref<16x256xf32, #tpu.memory_space<vmem>>, vector<2x256xf32>
    %cst_79 = arith.constant dense<0.000000e+00> : vector<2x256xf32>
    %256 = tpu.matmul %254, %178, %cst_79 {dimension_numbers = #tpu.dot_dimension_numbers<[1], [0], [0], [1], [0, 0, 1, 1], [], []>} : vector<2x64xf32>, vector<64x256xf32>, vector<2x256xf32> -> vector<2x256xf32>
    %257 = arith.addf %255, %256 : vector<2x256xf32>
    %258 = vector.extract_strided_slice %257 {offsets = [0, 0], sizes = [2, 192], strides = [1, 1]} : vector<2x256xf32> to vector<2x192xf32>
    %259 = arith.negf %258 : vector<2x192xf32>
    %260 = math.exp %259 : vector<2x192xf32>
    %cst_80 = arith.constant 1.000000e+00 : f32
    %261 = vector.broadcast %cst_80 : f32 to vector<2x192xf32>
    %262 = arith.addf %261, %260 : vector<2x192xf32>
    %263 = arith.divf %261, %262 : vector<2x192xf32>
    %264 = vector.extract_strided_slice %257 {offsets = [0, 192], sizes = [2, 64], strides = [1, 1]} : vector<2x256xf32> to vector<2x64xf32>
    %265 = math.tanh %264 : vector<2x64xf32>
    %266 = vector.extract_strided_slice %263 {offsets = [0, 0], sizes = [2, 64], strides = [1, 1]} : vector<2x192xf32> to vector<2x64xf32>
    %267 = vector.extract_strided_slice %263 {offsets = [0, 64], sizes = [2, 64], strides = [1, 1]} : vector<2x192xf32> to vector<2x64xf32>
    %268 = vector.extract_strided_slice %263 {offsets = [0, 128], sizes = [2, 64], strides = [1, 1]} : vector<2x192xf32> to vector<2x64xf32>
    %269 = arith.mulf %267, %252 : vector<2x64xf32>
    %270 = arith.mulf %266, %265 : vector<2x64xf32>
    %271 = arith.addf %269, %270 : vector<2x64xf32>
    %272 = math.tanh %271 : vector<2x64xf32>
    %273 = arith.mulf %268, %272 : vector<2x64xf32>
    %c10_81 = arith.constant 10 : index
    %c0_82 = arith.constant 0 : index
    %274 = vector.load %arg16[%c10_81, %c0_82] : memref<16x256xf32, #tpu.memory_space<vmem>>, vector<2x256xf32>
    %cst_83 = arith.constant dense<0.000000e+00> : vector<2x256xf32>
    %275 = tpu.matmul %273, %178, %cst_83 {dimension_numbers = #tpu.dot_dimension_numbers<[1], [0], [0], [1], [0, 0, 1, 1], [], []>} : vector<2x64xf32>, vector<64x256xf32>, vector<2x256xf32> -> vector<2x256xf32>
    %276 = arith.addf %274, %275 : vector<2x256xf32>
    %277 = vector.extract_strided_slice %276 {offsets = [0, 0], sizes = [2, 192], strides = [1, 1]} : vector<2x256xf32> to vector<2x192xf32>
    %278 = arith.negf %277 : vector<2x192xf32>
    %279 = math.exp %278 : vector<2x192xf32>
    %cst_84 = arith.constant 1.000000e+00 : f32
    %280 = vector.broadcast %cst_84 : f32 to vector<2x192xf32>
    %281 = arith.addf %280, %279 : vector<2x192xf32>
    %282 = arith.divf %280, %281 : vector<2x192xf32>
    %283 = vector.extract_strided_slice %276 {offsets = [0, 192], sizes = [2, 64], strides = [1, 1]} : vector<2x256xf32> to vector<2x64xf32>
    %284 = math.tanh %283 : vector<2x64xf32>
    %285 = vector.extract_strided_slice %282 {offsets = [0, 0], sizes = [2, 64], strides = [1, 1]} : vector<2x192xf32> to vector<2x64xf32>
    %286 = vector.extract_strided_slice %282 {offsets = [0, 64], sizes = [2, 64], strides = [1, 1]} : vector<2x192xf32> to vector<2x64xf32>
    %287 = vector.extract_strided_slice %282 {offsets = [0, 128], sizes = [2, 64], strides = [1, 1]} : vector<2x192xf32> to vector<2x64xf32>
    %288 = arith.mulf %286, %271 : vector<2x64xf32>
    %289 = arith.mulf %285, %284 : vector<2x64xf32>
    %290 = arith.addf %288, %289 : vector<2x64xf32>
    %291 = math.tanh %290 : vector<2x64xf32>
    %292 = arith.mulf %287, %291 : vector<2x64xf32>
    %c12_85 = arith.constant 12 : index
    %c0_86 = arith.constant 0 : index
    %293 = vector.load %arg16[%c12_85, %c0_86] : memref<16x256xf32, #tpu.memory_space<vmem>>, vector<2x256xf32>
    %cst_87 = arith.constant dense<0.000000e+00> : vector<2x256xf32>
    %294 = tpu.matmul %292, %178, %cst_87 {dimension_numbers = #tpu.dot_dimension_numbers<[1], [0], [0], [1], [0, 0, 1, 1], [], []>} : vector<2x64xf32>, vector<64x256xf32>, vector<2x256xf32> -> vector<2x256xf32>
    %295 = arith.addf %293, %294 : vector<2x256xf32>
    %296 = vector.extract_strided_slice %295 {offsets = [0, 0], sizes = [2, 192], strides = [1, 1]} : vector<2x256xf32> to vector<2x192xf32>
    %297 = arith.negf %296 : vector<2x192xf32>
    %298 = math.exp %297 : vector<2x192xf32>
    %cst_88 = arith.constant 1.000000e+00 : f32
    %299 = vector.broadcast %cst_88 : f32 to vector<2x192xf32>
    %300 = arith.addf %299, %298 : vector<2x192xf32>
    %301 = arith.divf %299, %300 : vector<2x192xf32>
    %302 = vector.extract_strided_slice %295 {offsets = [0, 192], sizes = [2, 64], strides = [1, 1]} : vector<2x256xf32> to vector<2x64xf32>
    %303 = math.tanh %302 : vector<2x64xf32>
    %304 = vector.extract_strided_slice %301 {offsets = [0, 0], sizes = [2, 64], strides = [1, 1]} : vector<2x192xf32> to vector<2x64xf32>
    %305 = vector.extract_strided_slice %301 {offsets = [0, 64], sizes = [2, 64], strides = [1, 1]} : vector<2x192xf32> to vector<2x64xf32>
    %306 = vector.extract_strided_slice %301 {offsets = [0, 128], sizes = [2, 64], strides = [1, 1]} : vector<2x192xf32> to vector<2x64xf32>
    %307 = arith.mulf %305, %290 : vector<2x64xf32>
    %308 = arith.mulf %304, %303 : vector<2x64xf32>
    %309 = arith.addf %307, %308 : vector<2x64xf32>
    %310 = math.tanh %309 : vector<2x64xf32>
    %311 = arith.mulf %306, %310 : vector<2x64xf32>
    %c14_89 = arith.constant 14 : index
    %c0_90 = arith.constant 0 : index
    %312 = vector.load %arg16[%c14_89, %c0_90] : memref<16x256xf32, #tpu.memory_space<vmem>>, vector<2x256xf32>
    %cst_91 = arith.constant dense<0.000000e+00> : vector<2x256xf32>
    %313 = tpu.matmul %311, %178, %cst_91 {dimension_numbers = #tpu.dot_dimension_numbers<[1], [0], [0], [1], [0, 0, 1, 1], [], []>} : vector<2x64xf32>, vector<64x256xf32>, vector<2x256xf32> -> vector<2x256xf32>
    %314 = arith.addf %312, %313 : vector<2x256xf32>
    %315 = vector.extract_strided_slice %314 {offsets = [0, 0], sizes = [2, 192], strides = [1, 1]} : vector<2x256xf32> to vector<2x192xf32>
    %316 = arith.negf %315 : vector<2x192xf32>
    %317 = math.exp %316 : vector<2x192xf32>
    %cst_92 = arith.constant 1.000000e+00 : f32
    %318 = vector.broadcast %cst_92 : f32 to vector<2x192xf32>
    %319 = arith.addf %318, %317 : vector<2x192xf32>
    %320 = arith.divf %318, %319 : vector<2x192xf32>
    %321 = vector.extract_strided_slice %314 {offsets = [0, 192], sizes = [2, 64], strides = [1, 1]} : vector<2x256xf32> to vector<2x64xf32>
    %322 = math.tanh %321 : vector<2x64xf32>
    %323 = vector.extract_strided_slice %320 {offsets = [0, 0], sizes = [2, 64], strides = [1, 1]} : vector<2x192xf32> to vector<2x64xf32>
    %324 = vector.extract_strided_slice %320 {offsets = [0, 64], sizes = [2, 64], strides = [1, 1]} : vector<2x192xf32> to vector<2x64xf32>
    %325 = vector.extract_strided_slice %320 {offsets = [0, 128], sizes = [2, 64], strides = [1, 1]} : vector<2x192xf32> to vector<2x64xf32>
    %326 = arith.mulf %324, %309 : vector<2x64xf32>
    %327 = arith.mulf %323, %322 : vector<2x64xf32>
    %328 = arith.addf %326, %327 : vector<2x64xf32>
    %329 = math.tanh %328 : vector<2x64xf32>
    %330 = arith.mulf %325, %329 : vector<2x64xf32>
    %c0_93 = arith.constant 0 : index
    %c0_94 = arith.constant 0 : index
    %331 = vector.load %arg8[%c0_93, %c0_94] : memref<1x256xf32, #tpu.memory_space<vmem>>, vector<1x256xf32>
    %c0_95 = arith.constant 0 : index
    %c0_96 = arith.constant 0 : index
    %332 = vector.load %arg7[%c0_95, %c0_96] : memref<64x256xf32, #tpu.memory_space<vmem>>, vector<64x256xf32>
    %cst_97 = arith.constant dense<0.000000e+00> : vector<2x256xf32>
    %333 = tpu.matmul %169, %332, %cst_97 {dimension_numbers = #tpu.dot_dimension_numbers<[1], [0], [0], [1], [0, 0, 1, 1], [], []>} : vector<2x64xf32>, vector<64x256xf32>, vector<2x256xf32> -> vector<2x256xf32>
    %334 = vector.broadcast %331 : vector<1x256xf32> to vector<2x256xf32>
    %335 = arith.addf %334, %333 : vector<2x256xf32>
    %336 = vector.extract_strided_slice %335 {offsets = [0, 0], sizes = [2, 192], strides = [1, 1]} : vector<2x256xf32> to vector<2x192xf32>
    %337 = arith.negf %336 : vector<2x192xf32>
    %338 = math.exp %337 : vector<2x192xf32>
    %cst_98 = arith.constant 1.000000e+00 : f32
    %339 = vector.broadcast %cst_98 : f32 to vector<2x192xf32>
    %340 = arith.addf %339, %338 : vector<2x192xf32>
    %341 = arith.divf %339, %340 : vector<2x192xf32>
    %342 = vector.extract_strided_slice %335 {offsets = [0, 192], sizes = [2, 64], strides = [1, 1]} : vector<2x256xf32> to vector<2x64xf32>
    %343 = math.tanh %342 : vector<2x64xf32>
    %344 = vector.extract_strided_slice %341 {offsets = [0, 0], sizes = [2, 64], strides = [1, 1]} : vector<2x192xf32> to vector<2x64xf32>
    %345 = vector.extract_strided_slice %341 {offsets = [0, 64], sizes = [2, 64], strides = [1, 1]} : vector<2x192xf32> to vector<2x64xf32>
    %346 = vector.extract_strided_slice %341 {offsets = [0, 128], sizes = [2, 64], strides = [1, 1]} : vector<2x192xf32> to vector<2x64xf32>
    %347 = arith.mulf %345, %167 : vector<2x64xf32>
    %348 = arith.mulf %344, %343 : vector<2x64xf32>
    %349 = arith.addf %347, %348 : vector<2x64xf32>
    %350 = math.tanh %349 : vector<2x64xf32>
    %351 = arith.mulf %346, %350 : vector<2x64xf32>
    %c0_99 = arith.constant 0 : index
    %c0_100 = arith.constant 0 : index
    %352 = vector.load %arg15[%c0_99, %c0_100] : memref<16x64xf32, #tpu.memory_space<vmem>>, vector<2x64xf32>
    tpu.vector_store %arg15[%c0_99, %c0_100], %351 {strides = array<i32>} : memref<16x64xf32, #tpu.memory_space<vmem>>, vector<2x64xf32>,
    %cst_101 = arith.constant dense<0.000000e+00> : vector<2x256xf32>
    %353 = tpu.matmul %351, %332, %cst_101 {dimension_numbers = #tpu.dot_dimension_numbers<[1], [0], [0], [1], [0, 0, 1, 1], [], []>} : vector<2x64xf32>, vector<64x256xf32>, vector<2x256xf32> -> vector<2x256xf32>
    %354 = vector.broadcast %331 : vector<1x256xf32> to vector<2x256xf32>
    %355 = arith.addf %354, %353 : vector<2x256xf32>
    %356 = vector.extract_strided_slice %355 {offsets = [0, 0], sizes = [2, 192], strides = [1, 1]} : vector<2x256xf32> to vector<2x192xf32>
    %357 = arith.negf %356 : vector<2x192xf32>
    %358 = math.exp %357 : vector<2x192xf32>
    %cst_102 = arith.constant 1.000000e+00 : f32
    %359 = vector.broadcast %cst_102 : f32 to vector<2x192xf32>
    %360 = arith.addf %359, %358 : vector<2x192xf32>
    %361 = arith.divf %359, %360 : vector<2x192xf32>
    %362 = vector.extract_strided_slice %355 {offsets = [0, 192], sizes = [2, 64], strides = [1, 1]} : vector<2x256xf32> to vector<2x64xf32>
    %363 = math.tanh %362 : vector<2x64xf32>
    %364 = vector.extract_strided_slice %361 {offsets = [0, 0], sizes = [2, 64], strides = [1, 1]} : vector<2x192xf32> to vector<2x64xf32>
    %365 = vector.extract_strided_slice %361 {offsets = [0, 64], sizes = [2, 64], strides = [1, 1]} : vector<2x192xf32> to vector<2x64xf32>
    %366 = vector.extract_strided_slice %361 {offsets = [0, 128], sizes = [2, 64], strides = [1, 1]} : vector<2x192xf32> to vector<2x64xf32>
    %367 = arith.mulf %365, %349 : vector<2x64xf32>
    %368 = arith.mulf %364, %363 : vector<2x64xf32>
    %369 = arith.addf %367, %368 : vector<2x64xf32>
    %370 = math.tanh %369 : vector<2x64xf32>
    %371 = arith.mulf %366, %370 : vector<2x64xf32>
    %c2_103 = arith.constant 2 : index
    %c0_104 = arith.constant 0 : index
    %372 = vector.load %arg15[%c2_103, %c0_104] : memref<16x64xf32, #tpu.memory_space<vmem>>, vector<2x64xf32>
    tpu.vector_store %arg15[%c2_103, %c0_104], %371 {strides = array<i32>} : memref<16x64xf32, #tpu.memory_space<vmem>>, vector<2x64xf32>,
    %cst_105 = arith.constant dense<0.000000e+00> : vector<2x256xf32>
    %373 = tpu.matmul %371, %332, %cst_105 {dimension_numbers = #tpu.dot_dimension_numbers<[1], [0], [0], [1], [0, 0, 1, 1], [], []>} : vector<2x64xf32>, vector<64x256xf32>, vector<2x256xf32> -> vector<2x256xf32>
    %374 = vector.broadcast %331 : vector<1x256xf32> to vector<2x256xf32>
    %375 = arith.addf %374, %373 : vector<2x256xf32>
    %376 = vector.extract_strided_slice %375 {offsets = [0, 0], sizes = [2, 192], strides = [1, 1]} : vector<2x256xf32> to vector<2x192xf32>
    %377 = arith.negf %376 : vector<2x192xf32>
    %378 = math.exp %377 : vector<2x192xf32>
    %cst_106 = arith.constant 1.000000e+00 : f32
    %379 = vector.broadcast %cst_106 : f32 to vector<2x192xf32>
    %380 = arith.addf %379, %378 : vector<2x192xf32>
    %381 = arith.divf %379, %380 : vector<2x192xf32>
    %382 = vector.extract_strided_slice %375 {offsets = [0, 192], sizes = [2, 64], strides = [1, 1]} : vector<2x256xf32> to vector<2x64xf32>
    %383 = math.tanh %382 : vector<2x64xf32>
    %384 = vector.extract_strided_slice %381 {offsets = [0, 0], sizes = [2, 64], strides = [1, 1]} : vector<2x192xf32> to vector<2x64xf32>
    %385 = vector.extract_strided_slice %381 {offsets = [0, 64], sizes = [2, 64], strides = [1, 1]} : vector<2x192xf32> to vector<2x64xf32>
    %386 = vector.extract_strided_slice %381 {offsets = [0, 128], sizes = [2, 64], strides = [1, 1]} : vector<2x192xf32> to vector<2x64xf32>
    %387 = arith.mulf %385, %369 : vector<2x64xf32>
    %388 = arith.mulf %384, %383 : vector<2x64xf32>
    %389 = arith.addf %387, %388 : vector<2x64xf32>
    %390 = math.tanh %389 : vector<2x64xf32>
    %391 = arith.mulf %386, %390 : vector<2x64xf32>
    %c4_107 = arith.constant 4 : index
    %c0_108 = arith.constant 0 : index
    %392 = vector.load %arg15[%c4_107, %c0_108] : memref<16x64xf32, #tpu.memory_space<vmem>>, vector<2x64xf32>
    tpu.vector_store %arg15[%c4_107, %c0_108], %391 {strides = array<i32>} : memref<16x64xf32, #tpu.memory_space<vmem>>, vector<2x64xf32>,
    %cst_109 = arith.constant dense<0.000000e+00> : vector<2x256xf32>
    %393 = tpu.matmul %391, %332, %cst_109 {dimension_numbers = #tpu.dot_dimension_numbers<[1], [0], [0], [1], [0, 0, 1, 1], [], []>} : vector<2x64xf32>, vector<64x256xf32>, vector<2x256xf32> -> vector<2x256xf32>
    %394 = vector.broadcast %331 : vector<1x256xf32> to vector<2x256xf32>
    %395 = arith.addf %394, %393 : vector<2x256xf32>
    %396 = vector.extract_strided_slice %395 {offsets = [0, 0], sizes = [2, 192], strides = [1, 1]} : vector<2x256xf32> to vector<2x192xf32>
    %397 = arith.negf %396 : vector<2x192xf32>
    %398 = math.exp %397 : vector<2x192xf32>
    %cst_110 = arith.constant 1.000000e+00 : f32
    %399 = vector.broadcast %cst_110 : f32 to vector<2x192xf32>
    %400 = arith.addf %399, %398 : vector<2x192xf32>
    %401 = arith.divf %399, %400 : vector<2x192xf32>
    %402 = vector.extract_strided_slice %395 {offsets = [0, 192], sizes = [2, 64], strides = [1, 1]} : vector<2x256xf32> to vector<2x64xf32>
    %403 = math.tanh %402 : vector<2x64xf32>
    %404 = vector.extract_strided_slice %401 {offsets = [0, 0], sizes = [2, 64], strides = [1, 1]} : vector<2x192xf32> to vector<2x64xf32>
    %405 = vector.extract_strided_slice %401 {offsets = [0, 64], sizes = [2, 64], strides = [1, 1]} : vector<2x192xf32> to vector<2x64xf32>
    %406 = vector.extract_strided_slice %401 {offsets = [0, 128], sizes = [2, 64], strides = [1, 1]} : vector<2x192xf32> to vector<2x64xf32>
    %407 = arith.mulf %405, %389 : vector<2x64xf32>
    %408 = arith.mulf %404, %403 : vector<2x64xf32>
    %409 = arith.addf %407, %408 : vector<2x64xf32>
    %410 = math.tanh %409 : vector<2x64xf32>
    %411 = arith.mulf %406, %410 : vector<2x64xf32>
    %c6_111 = arith.constant 6 : index
    %c0_112 = arith.constant 0 : index
    %412 = vector.load %arg15[%c6_111, %c0_112] : memref<16x64xf32, #tpu.memory_space<vmem>>, vector<2x64xf32>
    tpu.vector_store %arg15[%c6_111, %c0_112], %411 {strides = array<i32>} : memref<16x64xf32, #tpu.memory_space<vmem>>, vector<2x64xf32>,
    %cst_113 = arith.constant dense<0.000000e+00> : vector<2x256xf32>
    %413 = tpu.matmul %411, %332, %cst_113 {dimension_numbers = #tpu.dot_dimension_numbers<[1], [0], [0], [1], [0, 0, 1, 1], [], []>} : vector<2x64xf32>, vector<64x256xf32>, vector<2x256xf32> -> vector<2x256xf32>
    %414 = vector.broadcast %331 : vector<1x256xf32> to vector<2x256xf32>
    %415 = arith.addf %414, %413 : vector<2x256xf32>
    %416 = vector.extract_strided_slice %415 {offsets = [0, 0], sizes = [2, 192], strides = [1, 1]} : vector<2x256xf32> to vector<2x192xf32>
    %417 = arith.negf %416 : vector<2x192xf32>
    %418 = math.exp %417 : vector<2x192xf32>
    %cst_114 = arith.constant 1.000000e+00 : f32
    %419 = vector.broadcast %cst_114 : f32 to vector<2x192xf32>
    %420 = arith.addf %419, %418 : vector<2x192xf32>
    %421 = arith.divf %419, %420 : vector<2x192xf32>
    %422 = vector.extract_strided_slice %415 {offsets = [0, 192], sizes = [2, 64], strides = [1, 1]} : vector<2x256xf32> to vector<2x64xf32>
    %423 = math.tanh %422 : vector<2x64xf32>
    %424 = vector.extract_strided_slice %421 {offsets = [0, 0], sizes = [2, 64], strides = [1, 1]} : vector<2x192xf32> to vector<2x64xf32>
    %425 = vector.extract_strided_slice %421 {offsets = [0, 64], sizes = [2, 64], strides = [1, 1]} : vector<2x192xf32> to vector<2x64xf32>
    %426 = vector.extract_strided_slice %421 {offsets = [0, 128], sizes = [2, 64], strides = [1, 1]} : vector<2x192xf32> to vector<2x64xf32>
    %427 = arith.mulf %425, %409 : vector<2x64xf32>
    %428 = arith.mulf %424, %423 : vector<2x64xf32>
    %429 = arith.addf %427, %428 : vector<2x64xf32>
    %430 = math.tanh %429 : vector<2x64xf32>
    %431 = arith.mulf %426, %430 : vector<2x64xf32>
    %c8_115 = arith.constant 8 : index
    %c0_116 = arith.constant 0 : index
    %432 = vector.load %arg15[%c8_115, %c0_116] : memref<16x64xf32, #tpu.memory_space<vmem>>, vector<2x64xf32>
    tpu.vector_store %arg15[%c8_115, %c0_116], %431 {strides = array<i32>} : memref<16x64xf32, #tpu.memory_space<vmem>>, vector<2x64xf32>,
    %cst_117 = arith.constant dense<0.000000e+00> : vector<2x256xf32>
    %433 = tpu.matmul %431, %332, %cst_117 {dimension_numbers = #tpu.dot_dimension_numbers<[1], [0], [0], [1], [0, 0, 1, 1], [], []>} : vector<2x64xf32>, vector<64x256xf32>, vector<2x256xf32> -> vector<2x256xf32>
    %434 = vector.broadcast %331 : vector<1x256xf32> to vector<2x256xf32>
    %435 = arith.addf %434, %433 : vector<2x256xf32>
    %436 = vector.extract_strided_slice %435 {offsets = [0, 0], sizes = [2, 192], strides = [1, 1]} : vector<2x256xf32> to vector<2x192xf32>
    %437 = arith.negf %436 : vector<2x192xf32>
    %438 = math.exp %437 : vector<2x192xf32>
    %cst_118 = arith.constant 1.000000e+00 : f32
    %439 = vector.broadcast %cst_118 : f32 to vector<2x192xf32>
    %440 = arith.addf %439, %438 : vector<2x192xf32>
    %441 = arith.divf %439, %440 : vector<2x192xf32>
    %442 = vector.extract_strided_slice %435 {offsets = [0, 192], sizes = [2, 64], strides = [1, 1]} : vector<2x256xf32> to vector<2x64xf32>
    %443 = math.tanh %442 : vector<2x64xf32>
    %444 = vector.extract_strided_slice %441 {offsets = [0, 0], sizes = [2, 64], strides = [1, 1]} : vector<2x192xf32> to vector<2x64xf32>
    %445 = vector.extract_strided_slice %441 {offsets = [0, 64], sizes = [2, 64], strides = [1, 1]} : vector<2x192xf32> to vector<2x64xf32>
    %446 = vector.extract_strided_slice %441 {offsets = [0, 128], sizes = [2, 64], strides = [1, 1]} : vector<2x192xf32> to vector<2x64xf32>
    %447 = arith.mulf %445, %429 : vector<2x64xf32>
    %448 = arith.mulf %444, %443 : vector<2x64xf32>
    %449 = arith.addf %447, %448 : vector<2x64xf32>
    %450 = math.tanh %449 : vector<2x64xf32>
    %451 = arith.mulf %446, %450 : vector<2x64xf32>
    %c10_119 = arith.constant 10 : index
    %c0_120 = arith.constant 0 : index
    %452 = vector.load %arg15[%c10_119, %c0_120] : memref<16x64xf32, #tpu.memory_space<vmem>>, vector<2x64xf32>
    tpu.vector_store %arg15[%c10_119, %c0_120], %451 {strides = array<i32>} : memref<16x64xf32, #tpu.memory_space<vmem>>, vector<2x64xf32>,
    %cst_121 = arith.constant dense<0.000000e+00> : vector<2x256xf32>
    %453 = tpu.matmul %451, %332, %cst_121 {dimension_numbers = #tpu.dot_dimension_numbers<[1], [0], [0], [1], [0, 0, 1, 1], [], []>} : vector<2x64xf32>, vector<64x256xf32>, vector<2x256xf32> -> vector<2x256xf32>
    %454 = vector.broadcast %331 : vector<1x256xf32> to vector<2x256xf32>
    %455 = arith.addf %454, %453 : vector<2x256xf32>
    %456 = vector.extract_strided_slice %455 {offsets = [0, 0], sizes = [2, 192], strides = [1, 1]} : vector<2x256xf32> to vector<2x192xf32>
    %457 = arith.negf %456 : vector<2x192xf32>
    %458 = math.exp %457 : vector<2x192xf32>
    %cst_122 = arith.constant 1.000000e+00 : f32
    %459 = vector.broadcast %cst_122 : f32 to vector<2x192xf32>
    %460 = arith.addf %459, %458 : vector<2x192xf32>
    %461 = arith.divf %459, %460 : vector<2x192xf32>
    %462 = vector.extract_strided_slice %455 {offsets = [0, 192], sizes = [2, 64], strides = [1, 1]} : vector<2x256xf32> to vector<2x64xf32>
    %463 = math.tanh %462 : vector<2x64xf32>
    %464 = vector.extract_strided_slice %461 {offsets = [0, 0], sizes = [2, 64], strides = [1, 1]} : vector<2x192xf32> to vector<2x64xf32>
    %465 = vector.extract_strided_slice %461 {offsets = [0, 64], sizes = [2, 64], strides = [1, 1]} : vector<2x192xf32> to vector<2x64xf32>
    %466 = vector.extract_strided_slice %461 {offsets = [0, 128], sizes = [2, 64], strides = [1, 1]} : vector<2x192xf32> to vector<2x64xf32>
    %467 = arith.mulf %465, %449 : vector<2x64xf32>
    %468 = arith.mulf %464, %463 : vector<2x64xf32>
    %469 = arith.addf %467, %468 : vector<2x64xf32>
    %470 = math.tanh %469 : vector<2x64xf32>
    %471 = arith.mulf %466, %470 : vector<2x64xf32>
    %c12_123 = arith.constant 12 : index
    %c0_124 = arith.constant 0 : index
    %472 = vector.load %arg15[%c12_123, %c0_124] : memref<16x64xf32, #tpu.memory_space<vmem>>, vector<2x64xf32>
    tpu.vector_store %arg15[%c12_123, %c0_124], %471 {strides = array<i32>} : memref<16x64xf32, #tpu.memory_space<vmem>>, vector<2x64xf32>,
    %cst_125 = arith.constant dense<0.000000e+00> : vector<2x256xf32>
    %473 = tpu.matmul %471, %332, %cst_125 {dimension_numbers = #tpu.dot_dimension_numbers<[1], [0], [0], [1], [0, 0, 1, 1], [], []>} : vector<2x64xf32>, vector<64x256xf32>, vector<2x256xf32> -> vector<2x256xf32>
    %474 = vector.broadcast %331 : vector<1x256xf32> to vector<2x256xf32>
    %475 = arith.addf %474, %473 : vector<2x256xf32>
    %476 = vector.extract_strided_slice %475 {offsets = [0, 0], sizes = [2, 192], strides = [1, 1]} : vector<2x256xf32> to vector<2x192xf32>
    %477 = arith.negf %476 : vector<2x192xf32>
    %478 = math.exp %477 : vector<2x192xf32>
    %cst_126 = arith.constant 1.000000e+00 : f32
    %479 = vector.broadcast %cst_126 : f32 to vector<2x192xf32>
    %480 = arith.addf %479, %478 : vector<2x192xf32>
    %481 = arith.divf %479, %480 : vector<2x192xf32>
    %482 = vector.extract_strided_slice %475 {offsets = [0, 192], sizes = [2, 64], strides = [1, 1]} : vector<2x256xf32> to vector<2x64xf32>
    %483 = math.tanh %482 : vector<2x64xf32>
    %484 = vector.extract_strided_slice %481 {offsets = [0, 0], sizes = [2, 64], strides = [1, 1]} : vector<2x192xf32> to vector<2x64xf32>
    %485 = vector.extract_strided_slice %481 {offsets = [0, 64], sizes = [2, 64], strides = [1, 1]} : vector<2x192xf32> to vector<2x64xf32>
    %486 = vector.extract_strided_slice %481 {offsets = [0, 128], sizes = [2, 64], strides = [1, 1]} : vector<2x192xf32> to vector<2x64xf32>
    %487 = arith.mulf %485, %469 : vector<2x64xf32>
    %488 = arith.mulf %484, %483 : vector<2x64xf32>
    %489 = arith.addf %487, %488 : vector<2x64xf32>
    %490 = math.tanh %489 : vector<2x64xf32>
    %491 = arith.mulf %486, %490 : vector<2x64xf32>
    %c14_127 = arith.constant 14 : index
    %c0_128 = arith.constant 0 : index
    %492 = vector.load %arg15[%c14_127, %c0_128] : memref<16x64xf32, #tpu.memory_space<vmem>>, vector<2x64xf32>
    tpu.vector_store %arg15[%c14_127, %c0_128], %491 {strides = array<i32>} : memref<16x64xf32, #tpu.memory_space<vmem>>, vector<2x64xf32>,
    %c0_129 = arith.constant 0 : index
    %c0_130 = arith.constant 0 : index
    %493 = vector.load %arg15[%c0_129, %c0_130] : memref<16x64xf32, #tpu.memory_space<vmem>>, vector<16x64xf32>
    %c0_131 = arith.constant 0 : index
    %c0_132 = arith.constant 0 : index
    %494 = vector.load %arg9[%c0_131, %c0_132] : memref<64x256xf32, #tpu.memory_space<vmem>>, vector<64x256xf32>
    %cst_133 = arith.constant dense<0.000000e+00> : vector<16x256xf32>
    %495 = tpu.matmul %493, %494, %cst_133 {dimension_numbers = #tpu.dot_dimension_numbers<[1], [0], [0], [1], [0, 0, 1, 1], [], []>} : vector<16x64xf32>, vector<64x256xf32>, vector<16x256xf32> -> vector<16x256xf32>
    %c0_134 = arith.constant 0 : index
    %c0_135 = arith.constant 0 : index
    %496 = vector.load %arg11[%c0_134, %c0_135] : memref<1x256xf32, #tpu.memory_space<vmem>>, vector<1x256xf32>
    %497 = vector.broadcast %496 : vector<1x256xf32> to vector<16x256xf32>
    %498 = arith.addf %495, %497 : vector<16x256xf32>
    %c0_136 = arith.constant 0 : index
    %c0_137 = arith.constant 0 : index
    %499 = vector.load %arg16[%c0_136, %c0_137] : memref<16x256xf32, #tpu.memory_space<vmem>>, vector<16x256xf32>
    tpu.vector_store %arg16[%c0_136, %c0_137], %498 {strides = array<i32>} : memref<16x256xf32, #tpu.memory_space<vmem>>, vector<16x256xf32>,
    %c0_138 = arith.constant 0 : index
    %c0_139 = arith.constant 0 : index
    %500 = vector.load %arg10[%c0_138, %c0_139] : memref<64x256xf32, #tpu.memory_space<vmem>>, vector<64x256xf32>
    %c0_140 = arith.constant 0 : index
    %c0_141 = arith.constant 0 : index
    %501 = vector.load %arg16[%c0_140, %c0_141] : memref<16x256xf32, #tpu.memory_space<vmem>>, vector<2x256xf32>
    %cst_142 = arith.constant dense<0.000000e+00> : vector<2x256xf32>
    %502 = tpu.matmul %330, %500, %cst_142 {dimension_numbers = #tpu.dot_dimension_numbers<[1], [0], [0], [1], [0, 0, 1, 1], [], []>} : vector<2x64xf32>, vector<64x256xf32>, vector<2x256xf32> -> vector<2x256xf32>
    %503 = arith.addf %501, %502 : vector<2x256xf32>
    %504 = vector.extract_strided_slice %503 {offsets = [0, 0], sizes = [2, 192], strides = [1, 1]} : vector<2x256xf32> to vector<2x192xf32>
    %505 = arith.negf %504 : vector<2x192xf32>
    %506 = math.exp %505 : vector<2x192xf32>
    %cst_143 = arith.constant 1.000000e+00 : f32
    %507 = vector.broadcast %cst_143 : f32 to vector<2x192xf32>
    %508 = arith.addf %507, %506 : vector<2x192xf32>
    %509 = arith.divf %507, %508 : vector<2x192xf32>
    %510 = vector.extract_strided_slice %503 {offsets = [0, 192], sizes = [2, 64], strides = [1, 1]} : vector<2x256xf32> to vector<2x64xf32>
    %511 = math.tanh %510 : vector<2x64xf32>
    %512 = vector.extract_strided_slice %509 {offsets = [0, 0], sizes = [2, 64], strides = [1, 1]} : vector<2x192xf32> to vector<2x64xf32>
    %513 = vector.extract_strided_slice %509 {offsets = [0, 64], sizes = [2, 64], strides = [1, 1]} : vector<2x192xf32> to vector<2x64xf32>
    %514 = vector.extract_strided_slice %509 {offsets = [0, 128], sizes = [2, 64], strides = [1, 1]} : vector<2x192xf32> to vector<2x64xf32>
    %515 = arith.mulf %513, %328 : vector<2x64xf32>
    %516 = arith.mulf %512, %511 : vector<2x64xf32>
    %517 = arith.addf %515, %516 : vector<2x64xf32>
    %518 = math.tanh %517 : vector<2x64xf32>
    %519 = arith.mulf %514, %518 : vector<2x64xf32>
    %c0_144 = arith.constant 0 : index
    %c0_145 = arith.constant 0 : index
    %520 = vector.load %arg15[%c0_144, %c0_145] : memref<16x64xf32, #tpu.memory_space<vmem>>, vector<2x64xf32>
    tpu.vector_store %arg15[%c0_144, %c0_145], %519 {strides = array<i32>} : memref<16x64xf32, #tpu.memory_space<vmem>>, vector<2x64xf32>,
    %c2_146 = arith.constant 2 : index
    %c0_147 = arith.constant 0 : index
    %521 = vector.load %arg16[%c2_146, %c0_147] : memref<16x256xf32, #tpu.memory_space<vmem>>, vector<2x256xf32>
    %cst_148 = arith.constant dense<0.000000e+00> : vector<2x256xf32>
    %522 = tpu.matmul %519, %500, %cst_148 {dimension_numbers = #tpu.dot_dimension_numbers<[1], [0], [0], [1], [0, 0, 1, 1], [], []>} : vector<2x64xf32>, vector<64x256xf32>, vector<2x256xf32> -> vector<2x256xf32>
    %523 = arith.addf %521, %522 : vector<2x256xf32>
    %524 = vector.extract_strided_slice %523 {offsets = [0, 0], sizes = [2, 192], strides = [1, 1]} : vector<2x256xf32> to vector<2x192xf32>
    %525 = arith.negf %524 : vector<2x192xf32>
    %526 = math.exp %525 : vector<2x192xf32>
    %cst_149 = arith.constant 1.000000e+00 : f32
    %527 = vector.broadcast %cst_149 : f32 to vector<2x192xf32>
    %528 = arith.addf %527, %526 : vector<2x192xf32>
    %529 = arith.divf %527, %528 : vector<2x192xf32>
    %530 = vector.extract_strided_slice %523 {offsets = [0, 192], sizes = [2, 64], strides = [1, 1]} : vector<2x256xf32> to vector<2x64xf32>
    %531 = math.tanh %530 : vector<2x64xf32>
    %532 = vector.extract_strided_slice %529 {offsets = [0, 0], sizes = [2, 64], strides = [1, 1]} : vector<2x192xf32> to vector<2x64xf32>
    %533 = vector.extract_strided_slice %529 {offsets = [0, 64], sizes = [2, 64], strides = [1, 1]} : vector<2x192xf32> to vector<2x64xf32>
    %534 = vector.extract_strided_slice %529 {offsets = [0, 128], sizes = [2, 64], strides = [1, 1]} : vector<2x192xf32> to vector<2x64xf32>
    %535 = arith.mulf %533, %517 : vector<2x64xf32>
    %536 = arith.mulf %532, %531 : vector<2x64xf32>
    %537 = arith.addf %535, %536 : vector<2x64xf32>
    %538 = math.tanh %537 : vector<2x64xf32>
    %539 = arith.mulf %534, %538 : vector<2x64xf32>
    %c2_150 = arith.constant 2 : index
    %c0_151 = arith.constant 0 : index
    %540 = vector.load %arg15[%c2_150, %c0_151] : memref<16x64xf32, #tpu.memory_space<vmem>>, vector<2x64xf32>
    tpu.vector_store %arg15[%c2_150, %c0_151], %539 {strides = array<i32>} : memref<16x64xf32, #tpu.memory_space<vmem>>, vector<2x64xf32>,
    %c4_152 = arith.constant 4 : index
    %c0_153 = arith.constant 0 : index
    %541 = vector.load %arg16[%c4_152, %c0_153] : memref<16x256xf32, #tpu.memory_space<vmem>>, vector<2x256xf32>
    %cst_154 = arith.constant dense<0.000000e+00> : vector<2x256xf32>
    %542 = tpu.matmul %539, %500, %cst_154 {dimension_numbers = #tpu.dot_dimension_numbers<[1], [0], [0], [1], [0, 0, 1, 1], [], []>} : vector<2x64xf32>, vector<64x256xf32>, vector<2x256xf32> -> vector<2x256xf32>
    %543 = arith.addf %541, %542 : vector<2x256xf32>
    %544 = vector.extract_strided_slice %543 {offsets = [0, 0], sizes = [2, 192], strides = [1, 1]} : vector<2x256xf32> to vector<2x192xf32>
    %545 = arith.negf %544 : vector<2x192xf32>
    %546 = math.exp %545 : vector<2x192xf32>
    %cst_155 = arith.constant 1.000000e+00 : f32
    %547 = vector.broadcast %cst_155 : f32 to vector<2x192xf32>
    %548 = arith.addf %547, %546 : vector<2x192xf32>
    %549 = arith.divf %547, %548 : vector<2x192xf32>
    %550 = vector.extract_strided_slice %543 {offsets = [0, 192], sizes = [2, 64], strides = [1, 1]} : vector<2x256xf32> to vector<2x64xf32>
    %551 = math.tanh %550 : vector<2x64xf32>
    %552 = vector.extract_strided_slice %549 {offsets = [0, 0], sizes = [2, 64], strides = [1, 1]} : vector<2x192xf32> to vector<2x64xf32>
    %553 = vector.extract_strided_slice %549 {offsets = [0, 64], sizes = [2, 64], strides = [1, 1]} : vector<2x192xf32> to vector<2x64xf32>
    %554 = vector.extract_strided_slice %549 {offsets = [0, 128], sizes = [2, 64], strides = [1, 1]} : vector<2x192xf32> to vector<2x64xf32>
    %555 = arith.mulf %553, %537 : vector<2x64xf32>
    %556 = arith.mulf %552, %551 : vector<2x64xf32>
    %557 = arith.addf %555, %556 : vector<2x64xf32>
    %558 = math.tanh %557 : vector<2x64xf32>
    %559 = arith.mulf %554, %558 : vector<2x64xf32>
    %c4_156 = arith.constant 4 : index
    %c0_157 = arith.constant 0 : index
    %560 = vector.load %arg15[%c4_156, %c0_157] : memref<16x64xf32, #tpu.memory_space<vmem>>, vector<2x64xf32>
    tpu.vector_store %arg15[%c4_156, %c0_157], %559 {strides = array<i32>} : memref<16x64xf32, #tpu.memory_space<vmem>>, vector<2x64xf32>,
    %c6_158 = arith.constant 6 : index
    %c0_159 = arith.constant 0 : index
    %561 = vector.load %arg16[%c6_158, %c0_159] : memref<16x256xf32, #tpu.memory_space<vmem>>, vector<2x256xf32>
    %cst_160 = arith.constant dense<0.000000e+00> : vector<2x256xf32>
    %562 = tpu.matmul %559, %500, %cst_160 {dimension_numbers = #tpu.dot_dimension_numbers<[1], [0], [0], [1], [0, 0, 1, 1], [], []>} : vector<2x64xf32>, vector<64x256xf32>, vector<2x256xf32> -> vector<2x256xf32>
    %563 = arith.addf %561, %562 : vector<2x256xf32>
    %564 = vector.extract_strided_slice %563 {offsets = [0, 0], sizes = [2, 192], strides = [1, 1]} : vector<2x256xf32> to vector<2x192xf32>
    %565 = arith.negf %564 : vector<2x192xf32>
    %566 = math.exp %565 : vector<2x192xf32>
    %cst_161 = arith.constant 1.000000e+00 : f32
    %567 = vector.broadcast %cst_161 : f32 to vector<2x192xf32>
    %568 = arith.addf %567, %566 : vector<2x192xf32>
    %569 = arith.divf %567, %568 : vector<2x192xf32>
    %570 = vector.extract_strided_slice %563 {offsets = [0, 192], sizes = [2, 64], strides = [1, 1]} : vector<2x256xf32> to vector<2x64xf32>
    %571 = math.tanh %570 : vector<2x64xf32>
    %572 = vector.extract_strided_slice %569 {offsets = [0, 0], sizes = [2, 64], strides = [1, 1]} : vector<2x192xf32> to vector<2x64xf32>
    %573 = vector.extract_strided_slice %569 {offsets = [0, 64], sizes = [2, 64], strides = [1, 1]} : vector<2x192xf32> to vector<2x64xf32>
    %574 = vector.extract_strided_slice %569 {offsets = [0, 128], sizes = [2, 64], strides = [1, 1]} : vector<2x192xf32> to vector<2x64xf32>
    %575 = arith.mulf %573, %557 : vector<2x64xf32>
    %576 = arith.mulf %572, %571 : vector<2x64xf32>
    %577 = arith.addf %575, %576 : vector<2x64xf32>
    %578 = math.tanh %577 : vector<2x64xf32>
    %579 = arith.mulf %574, %578 : vector<2x64xf32>
    %c6_162 = arith.constant 6 : index
    %c0_163 = arith.constant 0 : index
    %580 = vector.load %arg15[%c6_162, %c0_163] : memref<16x64xf32, #tpu.memory_space<vmem>>, vector<2x64xf32>
    tpu.vector_store %arg15[%c6_162, %c0_163], %579 {strides = array<i32>} : memref<16x64xf32, #tpu.memory_space<vmem>>, vector<2x64xf32>,
    %c8_164 = arith.constant 8 : index
    %c0_165 = arith.constant 0 : index
    %581 = vector.load %arg16[%c8_164, %c0_165] : memref<16x256xf32, #tpu.memory_space<vmem>>, vector<2x256xf32>
    %cst_166 = arith.constant dense<0.000000e+00> : vector<2x256xf32>
    %582 = tpu.matmul %579, %500, %cst_166 {dimension_numbers = #tpu.dot_dimension_numbers<[1], [0], [0], [1], [0, 0, 1, 1], [], []>} : vector<2x64xf32>, vector<64x256xf32>, vector<2x256xf32> -> vector<2x256xf32>
    %583 = arith.addf %581, %582 : vector<2x256xf32>
    %584 = vector.extract_strided_slice %583 {offsets = [0, 0], sizes = [2, 192], strides = [1, 1]} : vector<2x256xf32> to vector<2x192xf32>
    %585 = arith.negf %584 : vector<2x192xf32>
    %586 = math.exp %585 : vector<2x192xf32>
    %cst_167 = arith.constant 1.000000e+00 : f32
    %587 = vector.broadcast %cst_167 : f32 to vector<2x192xf32>
    %588 = arith.addf %587, %586 : vector<2x192xf32>
    %589 = arith.divf %587, %588 : vector<2x192xf32>
    %590 = vector.extract_strided_slice %583 {offsets = [0, 192], sizes = [2, 64], strides = [1, 1]} : vector<2x256xf32> to vector<2x64xf32>
    %591 = math.tanh %590 : vector<2x64xf32>
    %592 = vector.extract_strided_slice %589 {offsets = [0, 0], sizes = [2, 64], strides = [1, 1]} : vector<2x192xf32> to vector<2x64xf32>
    %593 = vector.extract_strided_slice %589 {offsets = [0, 64], sizes = [2, 64], strides = [1, 1]} : vector<2x192xf32> to vector<2x64xf32>
    %594 = vector.extract_strided_slice %589 {offsets = [0, 128], sizes = [2, 64], strides = [1, 1]} : vector<2x192xf32> to vector<2x64xf32>
    %595 = arith.mulf %593, %577 : vector<2x64xf32>
    %596 = arith.mulf %592, %591 : vector<2x64xf32>
    %597 = arith.addf %595, %596 : vector<2x64xf32>
    %598 = math.tanh %597 : vector<2x64xf32>
    %599 = arith.mulf %594, %598 : vector<2x64xf32>
    %c8_168 = arith.constant 8 : index
    %c0_169 = arith.constant 0 : index
    %600 = vector.load %arg15[%c8_168, %c0_169] : memref<16x64xf32, #tpu.memory_space<vmem>>, vector<2x64xf32>
    tpu.vector_store %arg15[%c8_168, %c0_169], %599 {strides = array<i32>} : memref<16x64xf32, #tpu.memory_space<vmem>>, vector<2x64xf32>,
    %c10_170 = arith.constant 10 : index
    %c0_171 = arith.constant 0 : index
    %601 = vector.load %arg16[%c10_170, %c0_171] : memref<16x256xf32, #tpu.memory_space<vmem>>, vector<2x256xf32>
    %cst_172 = arith.constant dense<0.000000e+00> : vector<2x256xf32>
    %602 = tpu.matmul %599, %500, %cst_172 {dimension_numbers = #tpu.dot_dimension_numbers<[1], [0], [0], [1], [0, 0, 1, 1], [], []>} : vector<2x64xf32>, vector<64x256xf32>, vector<2x256xf32> -> vector<2x256xf32>
    %603 = arith.addf %601, %602 : vector<2x256xf32>
    %604 = vector.extract_strided_slice %603 {offsets = [0, 0], sizes = [2, 192], strides = [1, 1]} : vector<2x256xf32> to vector<2x192xf32>
    %605 = arith.negf %604 : vector<2x192xf32>
    %606 = math.exp %605 : vector<2x192xf32>
    %cst_173 = arith.constant 1.000000e+00 : f32
    %607 = vector.broadcast %cst_173 : f32 to vector<2x192xf32>
    %608 = arith.addf %607, %606 : vector<2x192xf32>
    %609 = arith.divf %607, %608 : vector<2x192xf32>
    %610 = vector.extract_strided_slice %603 {offsets = [0, 192], sizes = [2, 64], strides = [1, 1]} : vector<2x256xf32> to vector<2x64xf32>
    %611 = math.tanh %610 : vector<2x64xf32>
    %612 = vector.extract_strided_slice %609 {offsets = [0, 0], sizes = [2, 64], strides = [1, 1]} : vector<2x192xf32> to vector<2x64xf32>
    %613 = vector.extract_strided_slice %609 {offsets = [0, 64], sizes = [2, 64], strides = [1, 1]} : vector<2x192xf32> to vector<2x64xf32>
    %614 = vector.extract_strided_slice %609 {offsets = [0, 128], sizes = [2, 64], strides = [1, 1]} : vector<2x192xf32> to vector<2x64xf32>
    %615 = arith.mulf %613, %597 : vector<2x64xf32>
    %616 = arith.mulf %612, %611 : vector<2x64xf32>
    %617 = arith.addf %615, %616 : vector<2x64xf32>
    %618 = math.tanh %617 : vector<2x64xf32>
    %619 = arith.mulf %614, %618 : vector<2x64xf32>
    %c10_174 = arith.constant 10 : index
    %c0_175 = arith.constant 0 : index
    %620 = vector.load %arg15[%c10_174, %c0_175] : memref<16x64xf32, #tpu.memory_space<vmem>>, vector<2x64xf32>
    tpu.vector_store %arg15[%c10_174, %c0_175], %619 {strides = array<i32>} : memref<16x64xf32, #tpu.memory_space<vmem>>, vector<2x64xf32>,
    %c12_176 = arith.constant 12 : index
    %c0_177 = arith.constant 0 : index
    %621 = vector.load %arg16[%c12_176, %c0_177] : memref<16x256xf32, #tpu.memory_space<vmem>>, vector<2x256xf32>
    %cst_178 = arith.constant dense<0.000000e+00> : vector<2x256xf32>
    %622 = tpu.matmul %619, %500, %cst_178 {dimension_numbers = #tpu.dot_dimension_numbers<[1], [0], [0], [1], [0, 0, 1, 1], [], []>} : vector<2x64xf32>, vector<64x256xf32>, vector<2x256xf32> -> vector<2x256xf32>
    %623 = arith.addf %621, %622 : vector<2x256xf32>
    %624 = vector.extract_strided_slice %623 {offsets = [0, 0], sizes = [2, 192], strides = [1, 1]} : vector<2x256xf32> to vector<2x192xf32>
    %625 = arith.negf %624 : vector<2x192xf32>
    %626 = math.exp %625 : vector<2x192xf32>
    %cst_179 = arith.constant 1.000000e+00 : f32
    %627 = vector.broadcast %cst_179 : f32 to vector<2x192xf32>
    %628 = arith.addf %627, %626 : vector<2x192xf32>
    %629 = arith.divf %627, %628 : vector<2x192xf32>
    %630 = vector.extract_strided_slice %623 {offsets = [0, 192], sizes = [2, 64], strides = [1, 1]} : vector<2x256xf32> to vector<2x64xf32>
    %631 = math.tanh %630 : vector<2x64xf32>
    %632 = vector.extract_strided_slice %629 {offsets = [0, 0], sizes = [2, 64], strides = [1, 1]} : vector<2x192xf32> to vector<2x64xf32>
    %633 = vector.extract_strided_slice %629 {offsets = [0, 64], sizes = [2, 64], strides = [1, 1]} : vector<2x192xf32> to vector<2x64xf32>
    %634 = vector.extract_strided_slice %629 {offsets = [0, 128], sizes = [2, 64], strides = [1, 1]} : vector<2x192xf32> to vector<2x64xf32>
    %635 = arith.mulf %633, %617 : vector<2x64xf32>
    %636 = arith.mulf %632, %631 : vector<2x64xf32>
    %637 = arith.addf %635, %636 : vector<2x64xf32>
    %638 = math.tanh %637 : vector<2x64xf32>
    %639 = arith.mulf %634, %638 : vector<2x64xf32>
    %c12_180 = arith.constant 12 : index
    %c0_181 = arith.constant 0 : index
    %640 = vector.load %arg15[%c12_180, %c0_181] : memref<16x64xf32, #tpu.memory_space<vmem>>, vector<2x64xf32>
    tpu.vector_store %arg15[%c12_180, %c0_181], %639 {strides = array<i32>} : memref<16x64xf32, #tpu.memory_space<vmem>>, vector<2x64xf32>,
    %c14_182 = arith.constant 14 : index
    %c0_183 = arith.constant 0 : index
    %641 = vector.load %arg16[%c14_182, %c0_183] : memref<16x256xf32, #tpu.memory_space<vmem>>, vector<2x256xf32>
    %cst_184 = arith.constant dense<0.000000e+00> : vector<2x256xf32>
    %642 = tpu.matmul %639, %500, %cst_184 {dimension_numbers = #tpu.dot_dimension_numbers<[1], [0], [0], [1], [0, 0, 1, 1], [], []>} : vector<2x64xf32>, vector<64x256xf32>, vector<2x256xf32> -> vector<2x256xf32>
    %643 = arith.addf %641, %642 : vector<2x256xf32>
    %644 = vector.extract_strided_slice %643 {offsets = [0, 0], sizes = [2, 192], strides = [1, 1]} : vector<2x256xf32> to vector<2x192xf32>
    %645 = arith.negf %644 : vector<2x192xf32>
    %646 = math.exp %645 : vector<2x192xf32>
    %cst_185 = arith.constant 1.000000e+00 : f32
    %647 = vector.broadcast %cst_185 : f32 to vector<2x192xf32>
    %648 = arith.addf %647, %646 : vector<2x192xf32>
    %649 = arith.divf %647, %648 : vector<2x192xf32>
    %650 = vector.extract_strided_slice %643 {offsets = [0, 192], sizes = [2, 64], strides = [1, 1]} : vector<2x256xf32> to vector<2x64xf32>
    %651 = math.tanh %650 : vector<2x64xf32>
    %652 = vector.extract_strided_slice %649 {offsets = [0, 0], sizes = [2, 64], strides = [1, 1]} : vector<2x192xf32> to vector<2x64xf32>
    %653 = vector.extract_strided_slice %649 {offsets = [0, 64], sizes = [2, 64], strides = [1, 1]} : vector<2x192xf32> to vector<2x64xf32>
    %654 = vector.extract_strided_slice %649 {offsets = [0, 128], sizes = [2, 64], strides = [1, 1]} : vector<2x192xf32> to vector<2x64xf32>
    %655 = arith.mulf %653, %637 : vector<2x64xf32>
    %656 = arith.mulf %652, %651 : vector<2x64xf32>
    %657 = arith.addf %655, %656 : vector<2x64xf32>
    %658 = math.tanh %657 : vector<2x64xf32>
    %659 = arith.mulf %654, %658 : vector<2x64xf32>
    %c14_186 = arith.constant 14 : index
    %c0_187 = arith.constant 0 : index
    %660 = vector.load %arg15[%c14_186, %c0_187] : memref<16x64xf32, #tpu.memory_space<vmem>>, vector<2x64xf32>
    tpu.vector_store %arg15[%c14_186, %c0_187], %659 {strides = array<i32>} : memref<16x64xf32, #tpu.memory_space<vmem>>, vector<2x64xf32>,
    %c0_188 = arith.constant 0 : index
    %c0_189 = arith.constant 0 : index
    %661 = vector.load %arg15[%c0_188, %c0_189] : memref<16x64xf32, #tpu.memory_space<vmem>>, vector<16x64xf32>
    %c0_190 = arith.constant 0 : index
    %c0_191 = arith.constant 0 : index
    %662 = vector.load %arg12[%c0_190, %c0_191] : memref<1x64xf32, #tpu.memory_space<vmem>>, vector<1x64xf32>
    %663 = vector.broadcast %662 : vector<1x64xf32> to vector<16x64xf32>
    %664 = arith.mulf %661, %663 : vector<16x64xf32>
    %cst_192 = arith.constant dense<0.000000e+00> : vector<16xf32>
    %665 = vector.multi_reduction <add>, %664, %cst_192 [1] : vector<16x64xf32> to vector<16xf32>
    %666 = vector.shape_cast %665 : vector<16xf32> to vector<16x1xf32>
    %c0_193 = arith.constant 0 : index
    %c0_194 = arith.constant 0 : index
    %667 = vector.load %arg13[%c0_193, %c0_194] : memref<1x1xf32, #tpu.memory_space<vmem>>, vector<1x1xf32>
    %668 = vector.broadcast %667 : vector<1x1xf32> to vector<16x1xf32>
    %669 = arith.addf %666, %668 : vector<16x1xf32>
    %c0_195 = arith.constant 0 : index
    %c0_196 = arith.constant 0 : index
    %670 = vector.load %arg14[%c0_195, %c0_196] : memref<16x1xf32, #tpu.memory_space<vmem>>, vector<16x1xf32>
    tpu.vector_store %arg14[%c0_195, %c0_196], %669 {strides = array<i32>} : memref<16x1xf32, #tpu.memory_space<vmem>>, vector<16x1xf32>,
    return
  }
}

</mosaic_0001>

<llo_original>
// kernel: tpu_custom_call.1
$region0: #{tpu_custom_call.1}
  #allocation0 [shape = 'u32[]', space=smem, size = 0x4, offset = 0x4, fixed_abs, tag = 'smem constant byte address 0x4 - core index']
  #allocation1 [shape = 'u32[72,128]{1,0:T(1,128)}', space=vmem, size = 0x9000, scoped, tag = 'internal scratch']
  #allocation2 [shape = 'f32[16,64]{1,0:T(8,128)}', space=vmem, size = 0x2000, scoped, tag = 'scratch operand']
  #allocation3 [shape = 'f32[16,256]{1,0:T(8,128)}', space=vmem, size = 0x4000, scoped, tag = 'scratch operand']
  #allocation4 [shape = 'f32[1,1]{1,0:T(1,128)S(1)}', space=vmem, size = 0x200, scoped, tag = 'scoped memory for tpu_custom_call.1']
  %s0 = inlined_call_operand.vmem [shape: f32[16,1], index: 0, kind: input, shape index: {}]
  %s1 = inlined_call_operand.vmem [shape: f32[1,256], index: 1, kind: input, shape index: {}]
  %s2 = inlined_call_operand.hbm [shape: f32[64,256], index: 2, kind: input, shape index: {}]
  %s3 = inlined_call_operand.vmem [shape: f32[1,256], index: 3, kind: input, shape index: {}]
  %s4 = inlined_call_operand.hbm [shape: f32[64,256], index: 4, kind: input, shape index: {}]
  %s5 = inlined_call_operand.hbm [shape: f32[64,256], index: 5, kind: input, shape index: {}]
  %s6 = inlined_call_operand.vmem [shape: f32[1,256], index: 6, kind: input, shape index: {}]
  %s7 = inlined_call_operand.hbm [shape: f32[64,256], index: 7, kind: input, shape index: {}]
  %s8 = inlined_call_operand.vmem [shape: f32[1,256], index: 8, kind: input, shape index: {}]
  %s9 = inlined_call_operand.hbm [shape: f32[64,256], index: 9, kind: input, shape index: {}]
  %s10 = inlined_call_operand.hbm [shape: f32[64,256], index: 10, kind: input, shape index: {}]
  %s11 = inlined_call_operand.vmem [shape: f32[1,256], index: 11, kind: input, shape index: {}]
  %s12 = inlined_call_operand.vmem [shape: f32[1,64], index: 12, kind: input, shape index: {}]
  %s13 = inlined_call_operand.<no memory space> [shape: f32[1,1], index: 13, kind: input, shape index: {}]
  %s14 = inlined_call_operand.vmem [shape: f32[16,1], index: 14, kind: output, shape index: {}]
  %s15 = sld [smem:[#allocation0]]
  $region90: #{tpu_custom_call.1} parent=0
    _
  %s17 = ssub.s32 1, %s15
  %s18 = scalar_select 0, %s17, %s15
  %v19 = vstv %s13
  %20 = vst [vmem:[#allocation4] sm:$0x1] %v19
  $region1: #{tpu_custom_call.1} parent=0
    #allocation5 [shape = 'u8[65536]{0}', space=vmem, size = 0x10000, scoped, tag = 'input window, operand 2, single buffered']
    #allocation6 [shape = 's32[1]{0}', space=sflag, size = 0x4, scoped, tag = 'scoped memory for tpu_custom_call.1']
    #allocation7 [shape = 'u8[65536]{0}', space=vmem, size = 0x10000, scoped, tag = 'input window, operand 4, single buffered']
    #allocation8 [shape = 's32[1]{0}', space=sflag, size = 0x4, scoped, tag = 'scoped memory for tpu_custom_call.1']
    #allocation9 [shape = 'u8[65536]{0}', space=vmem, size = 0x10000, scoped, tag = 'input window, operand 5, single buffered']
    #allocation10 [shape = 'u8[65536]{0}', space=vmem, size = 0x10000, scoped, tag = 'input window, operand 7, single buffered']
    #allocation11 [shape = 's32[1]{0}', space=sflag, size = 0x4, scoped, tag = 'scoped memory for tpu_custom_call.1']
    #allocation12 [shape = 'u8[65536]{0}', space=vmem, size = 0x10000, scoped, tag = 'input window, operand 9, single buffered']
    #allocation13 [shape = 'u8[65536]{0}', space=vmem, size = 0x10000, scoped, tag = 'input window, operand 10, single buffered']
    #allocation14 [shape = 's32[1]{0}', space=sflag, size = 0x4, scoped, tag = 'scoped memory for tpu_custom_call.1']
    %21 = vsyncpa [#allocation6], 0
    %22 = vsyncpa [#allocation8], 0
    %23 = vsyncpa [#allocation11], 0
    %24 = vsyncpa [#allocation14], 0
    // Predicated region
    $region2: #{tpu_custom_call.1} parent=1 // pred_check
      _
    $region3: #{tpu_custom_call.1} parent=1 // pred_check_branch
      %26 = sbr.rel (0) target = $region5
    $region4: #{tpu_custom_call.1} parent=1 // pred_region
      _
    $region5: #{tpu_custom_call.1} parent=1 // pred_fallthru
      _
    // Predicated region
    $region6: #{tpu_custom_call.1} parent=1 // pred_check
      _
    $region7: #{tpu_custom_call.1} parent=1 // pred_check_branch
      %28 = sbr.rel (0) target = $region9
    $region8: #{tpu_custom_call.1} parent=1 // pred_region
      _
    $region9: #{tpu_custom_call.1} parent=1 // pred_fallthru
      _
    // Predicated region
    $region10: #{tpu_custom_call.1} parent=1 // pred_check
      _
    $region11: #{tpu_custom_call.1} parent=1 // pred_check_branch
      %30 = sbr.rel (0) target = $region13
    $region12: #{tpu_custom_call.1} parent=1 // pred_region
      %32 = vsyncadd [#allocation6], 0
      %s33 = sshll.u32 %s2, 4
      %s34 = int_to_ptr.hbm [resolvable:$true] %s33
      %s35 = sshll.u32 [#allocation5], 4
      %s36 = int_to_ptr.vmem [resolvable:$true] %s35
      %41 = dma.hbm_to_vmem [thread:$0]  %s34, 2048, %s36, [#allocation6], 256, 256, 16
    $region13: #{tpu_custom_call.1} parent=1 // pred_fallthru
      _
    // Predicated region
    $region14: #{tpu_custom_call.1} parent=1 // pred_check
      _
    $region15: #{tpu_custom_call.1} parent=1 // pred_check_branch
      %43 = sbr.rel (0) target = $region17
    $region16: #{tpu_custom_call.1} parent=1 // pred_region
      _
    $region17: #{tpu_custom_call.1} parent=1 // pred_fallthru
      _
    // Predicated region
    $region18: #{tpu_custom_call.1} parent=1 // pred_check
      _
    $region19: #{tpu_custom_call.1} parent=1 // pred_check_branch
      %45 = sbr.rel (0) target = $region21
    $region20: #{tpu_custom_call.1} parent=1 // pred_region
      %47 = vsyncadd [#allocation8], 0
      %s48 = sshll.u32 %s4, 4
      %s49 = int_to_ptr.hbm [resolvable:$true] %s48
      %s50 = sshll.u32 [#allocation7], 4
      %s51 = int_to_ptr.vmem [resolvable:$true] %s50
      %56 = dma.hbm_to_vmem [thread:$0]  %s49, 2048, %s51, [#allocation8], 256, 256, 16
    $region21: #{tpu_custom_call.1} parent=1 // pred_fallthru
      _
    // Predicated region
    $region22: #{tpu_custom_call.1} parent=1 // pred_check
      _
    $region23: #{tpu_custom_call.1} parent=1 // pred_check_branch
      %58 = sbr.rel (0) target = $region25
    $region24: #{tpu_custom_call.1} parent=1 // pred_region
      %60 = vsyncadd [#allocation8], 0
      %s61 = sshll.u32 %s5, 4
      %s62 = int_to_ptr.hbm [resolvable:$true] %s61
      %s63 = sshll.u32 [#allocation9], 4
      %s64 = int_to_ptr.vmem [resolvable:$true] %s63
      %69 = dma.hbm_to_vmem [thread:$0]  %s62, 2048, %s64, [#allocation8], 256, 256, 16
    $region25: #{tpu_custom_call.1} parent=1 // pred_fallthru
      _
    // Predicated region
    $region26: #{tpu_custom_call.1} parent=1 // pred_check
      _
    $region27: #{tpu_custom_call.1} parent=1 // pred_check_branch
      %71 = sbr.rel (0) target = $region29
    $region28: #{tpu_custom_call.1} parent=1 // pred_region
      _
    $region29: #{tpu_custom_call.1} parent=1 // pred_fallthru
      _
    // Predicated region
    $region30: #{tpu_custom_call.1} parent=1 // pred_check
      _
    $region31: #{tpu_custom_call.1} parent=1 // pred_check_branch
      %73 = sbr.rel (0) target = $region33
    $region32: #{tpu_custom_call.1} parent=1 // pred_region
      %75 = vsyncadd [#allocation11], 0
      %s76 = sshll.u32 %s7, 4
      %s77 = int_to_ptr.hbm [resolvable:$true] %s76
      %s78 = sshll.u32 [#allocation10], 4
      %s79 = int_to_ptr.vmem [resolvable:$true] %s78
      %84 = dma.hbm_to_vmem [thread:$0]  %s77, 2048, %s79, [#allocation11], 256, 256, 16
    $region33: #{tpu_custom_call.1} parent=1 // pred_fallthru
      _
    // Predicated region
    $region34: #{tpu_custom_call.1} parent=1 // pred_check
      _
    $region35: #{tpu_custom_call.1} parent=1 // pred_check_branch
      %86 = sbr.rel (0) target = $region37
    $region36: #{tpu_custom_call.1} parent=1 // pred_region
      _
    $region37: #{tpu_custom_call.1} parent=1 // pred_fallthru
      _
    // Predicated region
    $region38: #{tpu_custom_call.1} parent=1 // pred_check
      _
    $region39: #{tpu_custom_call.1} parent=1 // pred_check_branch
      %88 = sbr.rel (0) target = $region41
    $region40: #{tpu_custom_call.1} parent=1 // pred_region
      %90 = vsyncadd [#allocation11], 0
      %s91 = sshll.u32 %s9, 4
      %s92 = int_to_ptr.hbm [resolvable:$true] %s91
      %s93 = sshll.u32 [#allocation12], 4
      %s94 = int_to_ptr.vmem [resolvable:$true] %s93
      %99 = dma.hbm_to_vmem [thread:$0]  %s92, 2048, %s94, [#allocation11], 256, 256, 16
    $region41: #{tpu_custom_call.1} parent=1 // pred_fallthru
      _
    // Predicated region
    $region42: #{tpu_custom_call.1} parent=1 // pred_check
      _
    $region43: #{tpu_custom_call.1} parent=1 // pred_check_branch
      %101 = sbr.rel (0) target = $region45
    $region44: #{tpu_custom_call.1} parent=1 // pred_region
      %103 = vsyncadd [#allocation14], 0
      %s104 = sshll.u32 %s10, 4
      %s105 = int_to_ptr.hbm [resolvable:$true] %s104
      %s106 = sshll.u32 [#allocation13], 4
      %s107 = int_to_ptr.vmem [resolvable:$true] %s106
      %112 = dma.hbm_to_vmem [thread:$0]  %s105, 2048, %s107, [#allocation14], 256, 256, 16
    $region45: #{tpu_custom_call.1} parent=1 // pred_fallthru
      _
    // Predicated region
    $region46: #{tpu_custom_call.1} parent=1 // pred_check
      _
    $region47: #{tpu_custom_call.1} parent=1 // pred_check_branch
      %114 = sbr.rel (0) target = $region49
    $region48: #{tpu_custom_call.1} parent=1 // pred_region
      _
    $region49: #{tpu_custom_call.1} parent=1 // pred_fallthru
      _
    // Predicated region
    $region50: #{tpu_custom_call.1} parent=1 // pred_check
      _
    $region51: #{tpu_custom_call.1} parent=1 // pred_check_branch
      %116 = sbr.rel (0) target = $region53
    $region52: #{tpu_custom_call.1} parent=1 // pred_region
      _
    $region53: #{tpu_custom_call.1} parent=1 // pred_fallthru
      _
    // Predicated region
    $region54: #{tpu_custom_call.1} parent=1 // pred_check
      _
    $region55: #{tpu_custom_call.1} parent=1 // pred_check_branch
      %118 = sbr.rel (0) target = $region57
    $region56: #{tpu_custom_call.1} parent=1 // pred_region
      _
    $region57: #{tpu_custom_call.1} parent=1 // pred_fallthru
      _
    // Predicated region
    $region58: #{tpu_custom_call.1} parent=1 // pred_check
      _
    $region59: #{tpu_custom_call.1} parent=1 // pred_check_branch
      %120 = sbr.rel (0) target = $region61
    $region60: #{tpu_custom_call.1} parent=1 // pred_region
      %122 = dma.done [#allocation6], 2048
    $region61: #{tpu_custom_call.1} parent=1 // pred_fallthru
      _
    // Predicated region
    $region62: #{tpu_custom_call.1} parent=1 // pred_check
      _
    $region63: #{tpu_custom_call.1} parent=1 // pred_check_branch
      %124 = sbr.rel (0) target = $region65
    $region64: #{tpu_custom_call.1} parent=1 // pred_region
      %126 = dma.done [#allocation8], 2048
    $region65: #{tpu_custom_call.1} parent=1 // pred_fallthru
      _
    // Predicated region
    $region66: #{tpu_custom_call.1} parent=1 // pred_check
      _
    $region67: #{tpu_custom_call.1} parent=1 // pred_check_branch
      %128 = sbr.rel (0) target = $region69
    $region68: #{tpu_custom_call.1} parent=1 // pred_region
      %130 = dma.done [#allocation8], 2048
    $region69: #{tpu_custom_call.1} parent=1 // pred_fallthru
      _
    // Predicated region
    $region70: #{tpu_custom_call.1} parent=1 // pred_check
      _
    $region71: #{tpu_custom_call.1} parent=1 // pred_check_branch
      %132 = sbr.rel (0) target = $region73
    $region72: #{tpu_custom_call.1} parent=1 // pred_region
      %134 = dma.done [#allocation11], 2048
    $region73: #{tpu_custom_call.1} parent=1 // pred_fallthru
      _
    // Predicated region
    $region74: #{tpu_custom_call.1} parent=1 // pred_check
      _
    $region75: #{tpu_custom_call.1} parent=1 // pred_check_branch
      %136 = sbr.rel (0) target = $region77
    $region76: #{tpu_custom_call.1} parent=1 // pred_region
      %138 = dma.done [#allocation11], 2048
    $region77: #{tpu_custom_call.1} parent=1 // pred_fallthru
      _
    // Predicated region
    $region78: #{tpu_custom_call.1} parent=1 // pred_check
      _
    $region79: #{tpu_custom_call.1} parent=1 // pred_check_branch
      %140 = sbr.rel (0) target = $region81
    $region80: #{tpu_custom_call.1} parent=1 // pred_region
      %142 = dma.done [#allocation14], 2048
    $region81: #{tpu_custom_call.1} parent=1 // pred_fallthru
      _
    %v143 = vld [vmem:[%s0] sm:$0xff]
    %v144 = vld [vmem:[%s0 + $0x8] sm:$0xff]
    %v145 = vld [vmem:[%s1] sm:$0x3]
    %147 = vset.pattern.permute.xlu0 0
    %148 = vperm.xlu0 %147, %v143
    %v149 = vpop.permute.xlu0 %148
    %152 = vset.pattern.permute.xlu0 0
    %153 = vperm.xlu0 %152, %v144
    %v154 = vpop.permute.xlu0 %153
    %v157 = vperm.slane %v145, 0
    %v158 = vperm.slane %v145, 1
    %v161 = vmul.f32 %v149, %v157
    %v162 = vmul.f32 %v149, %v158
    %v163 = vmul.f32 %v154, %v157
    %v164 = vmul.f32 %v154, %v158
    %v165 = vld [vmem:[%s3] sm:$0x3]
    %v167 = vperm.slane %v165, 0
    %v168 = vperm.slane %v165, 1
    %v171 = vadd.f32 %v161, %v167
    %v172 = vadd.f32 %v162, %v168
    %v173 = vadd.f32 %v163, %v167
    %v174 = vadd.f32 %v164, %v168
    %175 = vst [vmem:[#allocation3] sm:$0xff] %v171
    %176 = vst [vmem:[#allocation3 + $0x8] sm:$0xff] %v172
    %177 = vst [vmem:[#allocation3 + $0x10] sm:$0xff] %v173
    %178 = vst [vmem:[#allocation3 + $0x18] sm:$0xff] %v174
    %v179 = vld [vmem:[#allocation5] sm:$0xff]
    %v180 = vld [vmem:[#allocation5 + $0x8] sm:$0xff]
    %v181 = vld [vmem:[#allocation5 + $0x10] sm:$0xff]
    %v182 = vld [vmem:[#allocation5 + $0x18] sm:$0xff]
    %v183 = vld [vmem:[#allocation5 + $0x20] sm:$0xff]
    %v184 = vld [vmem:[#allocation5 + $0x28] sm:$0xff]
    %v185 = vld [vmem:[#allocation5 + $0x30] sm:$0xff]
    %v186 = vld [vmem:[#allocation5 + $0x38] sm:$0xff]
    %v187 = vld [vmem:[#allocation5 + $0x40] sm:$0xff]
    %v188 = vld [vmem:[#allocation5 + $0x48] sm:$0xff]
    %v189 = vld [vmem:[#allocation5 + $0x50] sm:$0xff]
    %v190 = vld [vmem:[#allocation5 + $0x58] sm:$0xff]
    %v191 = vld [vmem:[#allocation5 + $0x60] sm:$0xff]
    %v192 = vld [vmem:[#allocation5 + $0x68] sm:$0xff]
    %v193 = vld [vmem:[#allocation5 + $0x70] sm:$0xff]
    %v194 = vld [vmem:[#allocation5 + $0x78] sm:$0xff]
    %v195 = vld [vmem:[#allocation3] sm:$0x3]
    %v196 = vld [vmem:[#allocation3 + $0x8] sm:$0x3]
    %vm197 = vcmask 523264
    %v199 = vsel %vm197, 0.0, 0
    %201 = vmatpush.msra.mxu0 0.0
    %202 = vmatpush.msra.mxu0 0.0
    %203 = vmatpush.msra.mxu0 0.0
    %204 = vmatpush.msra.mxu0 0.0
    %205 = vmatpush.msra.mxu0 0.0
    %206 = vmatpush.msra.mxu0 0.0
    %207 = vmatpush.msra.mxu0 0.0
    %208 = vmatpush.msra.mxu0 0.0
    %209 = vmatpush.msra.mxu0 %v193
    %210 = vmatpush.msra.mxu0 %v191
    %211 = vmatpush.msra.mxu0 %v189
    %212 = vmatpush.msra.mxu0 %v187
    %213 = vmatpush.msra.mxu0 %v185
    %214 = vmatpush.msra.mxu0 %v183
    %215 = vmatpush.msra.mxu0 %v181
    %216 = vmatpush.msra.mxu0 %v179
    %217 = vmatmul.f32.gmra.mxu0 %v199
    %v218 = vpop.f32.mrf.mxu0
    %v219 = vadd.f32 0.0, %v218
    %220 = vdwg.mxu0
    %221 = vmatpush.msra.mxu0 0.0
    %222 = vmatpush.msra.mxu0 0.0
    %223 = vmatpush.msra.mxu0 0.0
    %224 = vmatpush.msra.mxu0 0.0
    %225 = vmatpush.msra.mxu0 0.0
    %226 = vmatpush.msra.mxu0 0.0
    %227 = vmatpush.msra.mxu0 0.0
    %228 = vmatpush.msra.mxu0 0.0
    %229 = vmatpush.msra.mxu0 %v194
    %230 = vmatpush.msra.mxu0 %v192
    %231 = vmatpush.msra.mxu0 %v190
    %232 = vmatpush.msra.mxu0 %v188
    %233 = vmatpush.msra.mxu0 %v186
    %234 = vmatpush.msra.mxu0 %v184
    %235 = vmatpush.msra.mxu0 %v182
    %236 = vmatpush.msra.mxu0 %v180
    %237 = vmatmul.f32.gmra.mxu0 %v199
    %v238 = vpop.f32.mrf.mxu0
    %v239 = vadd.f32 0.0, %v238
    %240 = vdwg.mxu0
    %v241 = vadd.f32 %v195, %v219
    %v242 = vadd.f32 %v196, %v239
    %v243 = vxor.u32 %v241, 2147483648
    %v244 = vxor.u32 %v242, 2147483648
    %v245 = vmul.f32 %v243, 1.442695
    %v246 = vpow.pop %v245
    %v247 = vmul.f32 %v244, 1.442695
    %v248 = vpow.pop %v247
    %v249 = vadd.f32 %v246, 1.0
    %v250 = vadd.f32 %v248, 1.0
    %v251 = vrcp.pop %v249
    %v252 = vmul.f32 %v249, %v251
    %v253 = vsub.f32 1.0, %v252
    %v254 = vmul.f32 %v251, %v253
    %v255 = vadd.f32 %v251, %v254
    %vm256 = vweird.f32 %v249
    %vm257 = vweird.f32 %v251
    %vm258 = vmor %vm256, %vm257
    %v259 = vsel %vm258, %v251, %v255
    %v260 = vand.u32 2147483647, %v249
    %vm261 = vcmp.eq.f32.partialorder %v260, 8.507059e+37
    %v262 = vand.u32 %v249, 2147483648
    %v263 = vor.u32 1.1754944e-38, %v262
    %v264 = vsel %vm261, %v263, %v259
    %v265 = vmul.f32 1.0, %v264
    %v266 = vrcp.pop %v250
    %v267 = vmul.f32 %v250, %v266
    %v268 = vsub.f32 1.0, %v267
    %v269 = vmul.f32 %v266, %v268
    %v270 = vadd.f32 %v266, %v269
    %vm271 = vweird.f32 %v250
    %vm272 = vweird.f32 %v266
    %vm273 = vmor %vm271, %vm272
    %v274 = vsel %vm273, %v266, %v270
    %v275 = vand.u32 2147483647, %v250
    %vm276 = vcmp.eq.f32.partialorder %v275, 8.507059e+37
    %v277 = vand.u32 %v250, 2147483648
    %v278 = vor.u32 1.1754944e-38, %v277
    %v279 = vsel %vm276, %v278, %v274
    %v280 = vmul.f32 1.0, %v279
    %v281 = vtanh.pop %v242
    %v282 = vmul.f32 %v265, 0.0
    %284 = vrot.lane.b32.xlu0 %v281, 64
    %v285 = vpop.permute.xlu0 %284
    %v287 = vmul.f32 %v265, %v285
    %289 = vrot.lane.b32.xlu0 %v287, 64
    %v290 = vpop.permute.xlu0 %289
    %v292 = vadd.f32 %v282, %v290
    %v293 = vtanh.pop %v292
    %295 = vrot.lane.b32.xlu0 %v293, 64
    %v296 = vpop.permute.xlu0 %295
    %v298 = vmul.f32 %v280, %v296
    %vm299 = vcmask 517120
    %300 = vst.msk [vmem:[#allocation2] sm:$0x3] %vm299, %v298
    %v301 = vld [vmem:[#allocation3] sm:$0xc]
    %v302 = vld [vmem:[#allocation3 + $0x8] sm:$0xc]
    %v304 = vsel %vm197, %v298, 0
    %306 = vmatpush.msra.mxu0 0.0
    %307 = vmatpush.msra.mxu0 0.0
    %308 = vmatpush.msra.mxu0 0.0
    %309 = vmatpush.msra.mxu0 0.0
    %310 = vmatpush.msra.mxu0 0.0
    %311 = vmatpush.msra.mxu0 0.0
    %312 = vmatpush.msra.mxu0 0.0
    %313 = vmatpush.msra.mxu0 0.0
    %314 = vmatpush.msra.mxu0 %v193
    %315 = vmatpush.msra.mxu0 %v191
    %316 = vmatpush.msra.mxu0 %v189
    %317 = vmatpush.msra.mxu0 %v187
    %318 = vmatpush.msra.mxu0 %v185
    %319 = vmatpush.msra.mxu0 %v183
    %320 = vmatpush.msra.mxu0 %v181
    %321 = vmatpush.msra.mxu0 %v179
    %322 = vmatmul.f32.gmra.mxu0 %v304
    %v323 = vpop.f32.mrf.mxu0
    %v324 = vadd.f32 0.0, %v323
    %325 = vdwg.mxu0
    %326 = vmatpush.msra.mxu0 0.0
    %327 = vmatpush.msra.mxu0 0.0
    %328 = vmatpush.msra.mxu0 0.0
    %329 = vmatpush.msra.mxu0 0.0
    %330 = vmatpush.msra.mxu0 0.0
    %331 = vmatpush.msra.mxu0 0.0
    %332 = vmatpush.msra.mxu0 0.0
    %333 = vmatpush.msra.mxu0 0.0
    %334 = vmatpush.msra.mxu0 %v194
    %335 = vmatpush.msra.mxu0 %v192
    %336 = vmatpush.msra.mxu0 %v190
    %337 = vmatpush.msra.mxu0 %v188
    %338 = vmatpush.msra.mxu0 %v186
    %339 = vmatpush.msra.mxu0 %v184
    %340 = vmatpush.msra.mxu0 %v182
    %341 = vmatpush.msra.mxu0 %v180
    %342 = vmatmul.f32.gmra.mxu0 %v304
    %v343 = vpop.f32.mrf.mxu0
    %v344 = vadd.f32 0.0, %v343
    %345 = vdwg.mxu0
    %v348 = vrot.slane %v324, 6
    %v349 = vrot.slane %v344, 6
    %v352 = vadd.f32 %v301, %v348
    %v353 = vadd.f32 %v302, %v349
    %v354 = vxor.u32 %v352, 2147483648
    %v355 = vxor.u32 %v353, 2147483648
    %v356 = vmul.f32 %v354, 1.442695
    %v357 = vpow.pop %v356
    %v358 = vmul.f32 %v355, 1.442695
    %v359 = vpow.pop %v358
    %v360 = vadd.f32 %v357, 1.0
    %v361 = vadd.f32 %v359, 1.0
    %v362 = vrcp.pop %v360
    %v363 = vmul.f32 %v360, %v362
    %v364 = vsub.f32 1.0, %v363
    %v365 = vmul.f32 %v362, %v364
    %v366 = vadd.f32 %v362, %v365
    %vm367 = vweird.f32 %v360
    %vm368 = vweird.f32 %v362
    %vm369 = vmor %vm367, %vm368
    %v370 = vsel %vm369, %v362, %v366
    %v371 = vand.u32 2147483647, %v360
    %vm372 = vcmp.eq.f32.partialorder %v371, 8.507059e+37
    %v373 = vand.u32 %v360, 2147483648
    %v374 = vor.u32 1.1754944e-38, %v373
    %v375 = vsel %vm372, %v374, %v370
    %v376 = vmul.f32 1.0, %v375
    %v377 = vrcp.pop %v361
    %v378 = vmul.f32 %v361, %v377
    %v379 = vsub.f32 1.0, %v378
    %v380 = vmul.f32 %v377, %v379
    %v381 = vadd.f32 %v377, %v380
    %vm382 = vweird.f32 %v361
    %vm383 = vweird.f32 %v377
    %vm384 = vmor %vm382, %vm383
    %v385 = vsel %vm384, %v377, %v381
    %v386 = vand.u32 2147483647, %v361
    %vm387 = vcmp.eq.f32.partialorder %v386, 8.507059e+37
    %v388 = vand.u32 %v361, 2147483648
    %v389 = vor.u32 1.1754944e-38, %v388
    %v390 = vsel %vm387, %v389, %v385
    %v391 = vmul.f32 1.0, %v390
    %v392 = vtanh.pop %v353
    %v394 = vrot.slane %v292, 6
    %v396 = vmul.f32 %v376, %v394
    %398 = vrot.lane.b32.xlu0 %v392, 64
    %v399 = vpop.permute.xlu0 %398
    %v401 = vmul.f32 %v376, %v399
    %403 = vrot.lane.b32.xlu0 %v401, 64
    %v404 = vpop.permute.xlu0 %403
    %v406 = vadd.f32 %v396, %v404
    %v407 = vtanh.pop %v406
    %409 = vrot.lane.b32.xlu0 %v407, 64
    %v410 = vpop.permute.xlu0 %409
    %v412 = vmul.f32 %v391, %v410
    %vm413 = vcmask 519170
    %414 = vst.msk [vmem:[#allocation2] sm:$0xc] %vm413, %v412
    %v415 = vld [vmem:[#allocation3] sm:$0x30]
    %v416 = vld [vmem:[#allocation3 + $0x8] sm:$0x30]
    %v418 = vrot.slane %v412, 2
    %v419 = vsel %vm197, %v418, 0
    %421 = vmatpush.msra.mxu0 0.0
    %422 = vmatpush.msra.mxu0 0.0
    %423 = vmatpush.msra.mxu0 0.0
    %424 = vmatpush.msra.mxu0 0.0
    %425 = vmatpush.msra.mxu0 0.0
    %426 = vmatpush.msra.mxu0 0.0
    %427 = vmatpush.msra.mxu0 0.0
    %428 = vmatpush.msra.mxu0 0.0
    %429 = vmatpush.msra.mxu0 %v193
    %430 = vmatpush.msra.mxu0 %v191
    %431 = vmatpush.msra.mxu0 %v189
    %432 = vmatpush.msra.mxu0 %v187
    %433 = vmatpush.msra.mxu0 %v185
    %434 = vmatpush.msra.mxu0 %v183
    %435 = vmatpush.msra.mxu0 %v181
    %436 = vmatpush.msra.mxu0 %v179
    %437 = vmatmul.f32.gmra.mxu0 %v419
    %v438 = vpop.f32.mrf.mxu0
    %v439 = vadd.f32 0.0, %v438
    %440 = vdwg.mxu0
    %441 = vmatpush.msra.mxu0 0.0
    %442 = vmatpush.msra.mxu0 0.0
    %443 = vmatpush.msra.mxu0 0.0
    %444 = vmatpush.msra.mxu0 0.0
    %445 = vmatpush.msra.mxu0 0.0
    %446 = vmatpush.msra.mxu0 0.0
    %447 = vmatpush.msra.mxu0 0.0
    %448 = vmatpush.msra.mxu0 0.0
    %449 = vmatpush.msra.mxu0 %v194
    %450 = vmatpush.msra.mxu0 %v192
    %451 = vmatpush.msra.mxu0 %v190
    %452 = vmatpush.msra.mxu0 %v188
    %453 = vmatpush.msra.mxu0 %v186
    %454 = vmatpush.msra.mxu0 %v184
    %455 = vmatpush.msra.mxu0 %v182
    %456 = vmatpush.msra.mxu0 %v180
    %457 = vmatmul.f32.gmra.mxu0 %v419
    %v458 = vpop.f32.mrf.mxu0
    %v459 = vadd.f32 0.0, %v458
    %460 = vdwg.mxu0
    %v463 = vrot.slane %v439, 4
    %v464 = vrot.slane %v459, 4
    %v467 = vadd.f32 %v415, %v463
    %v468 = vadd.f32 %v416, %v464
    %v469 = vxor.u32 %v467, 2147483648
    %v470 = vxor.u32 %v468, 2147483648
    %v471 = vmul.f32 %v469, 1.442695
    %v472 = vpow.pop %v471
    %v473 = vmul.f32 %v470, 1.442695
    %v474 = vpow.pop %v473
    %v475 = vadd.f32 %v472, 1.0
    %v476 = vadd.f32 %v474, 1.0
    %v477 = vrcp.pop %v475
    %v478 = vmul.f32 %v475, %v477
    %v479 = vsub.f32 1.0, %v478
    %v480 = vmul.f32 %v477, %v479
    %v481 = vadd.f32 %v477, %v480
    %vm482 = vweird.f32 %v475
    %vm483 = vweird.f32 %v477
    %vm484 = vmor %vm482, %vm483
    %v485 = vsel %vm484, %v477, %v481
    %v486 = vand.u32 2147483647, %v475
    %vm487 = vcmp.eq.f32.partialorder %v486, 8.507059e+37
    %v488 = vand.u32 %v475, 2147483648
    %v489 = vor.u32 1.1754944e-38, %v488
    %v490 = vsel %vm487, %v489, %v485
    %v491 = vmul.f32 1.0, %v490
    %v492 = vrcp.pop %v476
    %v493 = vmul.f32 %v476, %v492
    %v494 = vsub.f32 1.0, %v493
    %v495 = vmul.f32 %v492, %v494
    %v496 = vadd.f32 %v492, %v495
    %vm497 = vweird.f32 %v476
    %vm498 = vweird.f32 %v492
    %vm499 = vmor %vm497, %vm498
    %v500 = vsel %vm499, %v492, %v496
    %v501 = vand.u32 2147483647, %v476
    %vm502 = vcmp.eq.f32.partialorder %v501, 8.507059e+37
    %v503 = vand.u32 %v476, 2147483648
    %v504 = vor.u32 1.1754944e-38, %v503
    %v505 = vsel %vm502, %v504, %v500
    %v506 = vmul.f32 1.0, %v505
    %v507 = vtanh.pop %v468
    %v509 = vrot.slane %v406, 6
    %v511 = vmul.f32 %v491, %v509
    %513 = vrot.lane.b32.xlu0 %v507, 64
    %v514 = vpop.permute.xlu0 %513
    %v516 = vmul.f32 %v491, %v514
    %518 = vrot.lane.b32.xlu0 %v516, 64
    %v519 = vpop.permute.xlu0 %518
    %v521 = vadd.f32 %v511, %v519
    %v522 = vtanh.pop %v521
    %524 = vrot.lane.b32.xlu0 %v522, 64
    %v525 = vpop.permute.xlu0 %524
    %v527 = vmul.f32 %v506, %v525
    %vm528 = vcmask 521220
    %529 = vst.msk [vmem:[#allocation2] sm:$0x30] %vm528, %v527
    %v530 = vld [vmem:[#allocation3] sm:$0xc0]
    %v531 = vld [vmem:[#allocation3 + $0x8] sm:$0xc0]
    %v533 = vrot.slane %v527, 4
    %v534 = vsel %vm197, %v533, 0
    %536 = vmatpush.msra.mxu0 0.0
    %537 = vmatpush.msra.mxu0 0.0
    %538 = vmatpush.msra.mxu0 0.0
    %539 = vmatpush.msra.mxu0 0.0
    %540 = vmatpush.msra.mxu0 0.0
    %541 = vmatpush.msra.mxu0 0.0
    %542 = vmatpush.msra.mxu0 0.0
    %543 = vmatpush.msra.mxu0 0.0
    %544 = vmatpush.msra.mxu0 %v193
    %545 = vmatpush.msra.mxu0 %v191
    %546 = vmatpush.msra.mxu0 %v189
    %547 = vmatpush.msra.mxu0 %v187
    %548 = vmatpush.msra.mxu0 %v185
    %549 = vmatpush.msra.mxu0 %v183
    %550 = vmatpush.msra.mxu0 %v181
    %551 = vmatpush.msra.mxu0 %v179
    %552 = vmatmul.f32.gmra.mxu0 %v534
    %v553 = vpop.f32.mrf.mxu0
    %v554 = vadd.f32 0.0, %v553
    %555 = vdwg.mxu0
    %556 = vmatpush.msra.mxu0 0.0
    %557 = vmatpush.msra.mxu0 0.0
    %558 = vmatpush.msra.mxu0 0.0
    %559 = vmatpush.msra.mxu0 0.0
    %560 = vmatpush.msra.mxu0 0.0
    %561 = vmatpush.msra.mxu0 0.0
    %562 = vmatpush.msra.mxu0 0.0
    %563 = vmatpush.msra.mxu0 0.0
    %564 = vmatpush.msra.mxu0 %v194
    %565 = vmatpush.msra.mxu0 %v192
    %566 = vmatpush.msra.mxu0 %v190
    %567 = vmatpush.msra.mxu0 %v188
    %568 = vmatpush.msra.mxu0 %v186
    %569 = vmatpush.msra.mxu0 %v184
    %570 = vmatpush.msra.mxu0 %v182
    %571 = vmatpush.msra.mxu0 %v180
    %572 = vmatmul.f32.gmra.mxu0 %v534
    %v573 = vpop.f32.mrf.mxu0
    %v574 = vadd.f32 0.0, %v573
    %575 = vdwg.mxu0
    %v578 = vrot.slane %v554, 2
    %v579 = vrot.slane %v574, 2
    %v582 = vadd.f32 %v530, %v578
    %v583 = vadd.f32 %v531, %v579
    %v584 = vxor.u32 %v582, 2147483648
    %v585 = vxor.u32 %v583, 2147483648
    %v586 = vmul.f32 %v584, 1.442695
    %v587 = vpow.pop %v586
    %v588 = vmul.f32 %v585, 1.442695
    %v589 = vpow.pop %v588
    %v590 = vadd.f32 %v587, 1.0
    %v591 = vadd.f32 %v589, 1.0
    %v592 = vrcp.pop %v590
    %v593 = vmul.f32 %v590, %v592
    %v594 = vsub.f32 1.0, %v593
    %v595 = vmul.f32 %v592, %v594
    %v596 = vadd.f32 %v592, %v595
    %vm597 = vweird.f32 %v590
    %vm598 = vweird.f32 %v592
    %vm599 = vmor %vm597, %vm598
    %v600 = vsel %vm599, %v592, %v596
    %v601 = vand.u32 2147483647, %v590
    %vm602 = vcmp.eq.f32.partialorder %v601, 8.507059e+37
    %v603 = vand.u32 %v590, 2147483648
    %v604 = vor.u32 1.1754944e-38, %v603
    %v605 = vsel %vm602, %v604, %v600
    %v606 = vmul.f32 1.0, %v605
    %v607 = vrcp.pop %v591
    %v608 = vmul.f32 %v591, %v607
    %v609 = vsub.f32 1.0, %v608
    %v610 = vmul.f32 %v607, %v609
    %v611 = vadd.f32 %v607, %v610
    %vm612 = vweird.f32 %v591
    %vm613 = vweird.f32 %v607
    %vm614 = vmor %vm612, %vm613
    %v615 = vsel %vm614, %v607, %v611
    %v616 = vand.u32 2147483647, %v591
    %vm617 = vcmp.eq.f32.partialorder %v616, 8.507059e+37
    %v618 = vand.u32 %v591, 2147483648
    %v619 = vor.u32 1.1754944e-38, %v618
    %v620 = vsel %vm617, %v619, %v615
    %v621 = vmul.f32 1.0, %v620
    %v622 = vtanh.pop %v583
    %v624 = vrot.slane %v521, 6
    %v626 = vmul.f32 %v606, %v624
    %628 = vrot.lane.b32.xlu0 %v622, 64
    %v629 = vpop.permute.xlu0 %628
    %v631 = vmul.f32 %v606, %v629
    %633 = vrot.lane.b32.xlu0 %v631, 64
    %v634 = vpop.permute.xlu0 %633
    %v636 = vadd.f32 %v626, %v634
    %v637 = vtanh.pop %v636
    %639 = vrot.lane.b32.xlu0 %v637, 64
    %v640 = vpop.permute.xlu0 %639
    %v642 = vmul.f32 %v621, %v640
    %vm643 = vcmask 523270
    %644 = vst.msk [vmem:[#allocation2] sm:$0xc0] %vm643, %v642
    %v645 = vld [vmem:[#allocation3 + $0x10] sm:$0x3]
    %v646 = vld [vmem:[#allocation3 + $0x18] sm:$0x3]
    %v648 = vrot.slane %v642, 6
    %v649 = vsel %vm197, %v648, 0
    %651 = vmatpush.msra.mxu0 0.0
    %652 = vmatpush.msra.mxu0 0.0
    %653 = vmatpush.msra.mxu0 0.0
    %654 = vmatpush.msra.mxu0 0.0
    %655 = vmatpush.msra.mxu0 0.0
    %656 = vmatpush.msra.mxu0 0.0
    %657 = vmatpush.msra.mxu0 0.0
    %658 = vmatpush.msra.mxu0 0.0
    %659 = vmatpush.msra.mxu0 %v193
    %660 = vmatpush.msra.mxu0 %v191
    %661 = vmatpush.msra.mxu0 %v189
    %662 = vmatpush.msra.mxu0 %v187
    %663 = vmatpush.msra.mxu0 %v185
    %664 = vmatpush.msra.mxu0 %v183
    %665 = vmatpush.msra.mxu0 %v181
    %666 = vmatpush.msra.mxu0 %v179
    %667 = vmatmul.f32.gmra.mxu0 %v649
    %v668 = vpop.f32.mrf.mxu0
    %v669 = vadd.f32 0.0, %v668
    %670 = vdwg.mxu0
    %671 = vmatpush.msra.mxu0 0.0
    %672 = vmatpush.msra.mxu0 0.0
    %673 = vmatpush.msra.mxu0 0.0
    %674 = vmatpush.msra.mxu0 0.0
    %675 = vmatpush.msra.mxu0 0.0
    %676 = vmatpush.msra.mxu0 0.0
    %677 = vmatpush.msra.mxu0 0.0
    %678 = vmatpush.msra.mxu0 0.0
    %679 = vmatpush.msra.mxu0 %v194
    %680 = vmatpush.msra.mxu0 %v192
    %681 = vmatpush.msra.mxu0 %v190
    %682 = vmatpush.msra.mxu0 %v188
    %683 = vmatpush.msra.mxu0 %v186
    %684 = vmatpush.msra.mxu0 %v184
    %685 = vmatpush.msra.mxu0 %v182
    %686 = vmatpush.msra.mxu0 %v180
    %687 = vmatmul.f32.gmra.mxu0 %v649
    %v688 = vpop.f32.mrf.mxu0
    %v689 = vadd.f32 0.0, %v688
    %690 = vdwg.mxu0
    %v691 = vadd.f32 %v645, %v669
    %v692 = vadd.f32 %v646, %v689
    %v693 = vxor.u32 %v691, 2147483648
    %v694 = vxor.u32 %v692, 2147483648
    %v695 = vmul.f32 %v693, 1.442695
    %v696 = vpow.pop %v695
    %v697 = vmul.f32 %v694, 1.442695
    %v698 = vpow.pop %v697
    %v699 = vadd.f32 %v696, 1.0
    %v700 = vadd.f32 %v698, 1.0
    %v701 = vrcp.pop %v699
    %v702 = vmul.f32 %v699, %v701
    %v703 = vsub.f32 1.0, %v702
    %v704 = vmul.f32 %v701, %v703
    %v705 = vadd.f32 %v701, %v704
    %vm706 = vweird.f32 %v699
    %vm707 = vweird.f32 %v701
    %vm708 = vmor %vm706, %vm707
    %v709 = vsel %vm708, %v701, %v705
    %v710 = vand.u32 2147483647, %v699
    %vm711 = vcmp.eq.f32.partialorder %v710, 8.507059e+37
    %v712 = vand.u32 %v699, 2147483648
    %v713 = vor.u32 1.1754944e-38, %v712
    %v714 = vsel %vm711, %v713, %v709
    %v715 = vmul.f32 1.0, %v714
    %v716 = vrcp.pop %v700
    %v717 = vmul.f32 %v700, %v716
    %v718 = vsub.f32 1.0, %v717
    %v719 = vmul.f32 %v716, %v718
    %v720 = vadd.f32 %v716, %v719
    %vm721 = vweird.f32 %v700
    %vm722 = vweird.f32 %v716
    %vm723 = vmor %vm721, %vm722
    %v724 = vsel %vm723, %v716, %v720
    %v725 = vand.u32 2147483647, %v700
    %vm726 = vcmp.eq.f32.partialorder %v725, 8.507059e+37
    %v727 = vand.u32 %v700, 2147483648
    %v728 = vor.u32 1.1754944e-38, %v727
    %v729 = vsel %vm726, %v728, %v724
    %v730 = vmul.f32 1.0, %v729
    %v731 = vtanh.pop %v692
    %v733 = vrot.slane %v636, 6
    %v735 = vmul.f32 %v715, %v733
    %737 = vrot.lane.b32.xlu0 %v731, 64
    %v738 = vpop.permute.xlu0 %737
    %v740 = vmul.f32 %v715, %v738
    %742 = vrot.lane.b32.xlu0 %v740, 64
    %v743 = vpop.permute.xlu0 %742
    %v745 = vadd.f32 %v735, %v743
    %v746 = vtanh.pop %v745
    %748 = vrot.lane.b32.xlu0 %v746, 64
    %v749 = vpop.permute.xlu0 %748
    %v751 = vmul.f32 %v730, %v749
    %752 = vst.msk [vmem:[#allocation2 + $0x8] sm:$0x3] %vm299, %v751
    %v753 = vld [vmem:[#allocation3 + $0x10] sm:$0xc]
    %v754 = vld [vmem:[#allocation3 + $0x18] sm:$0xc]
    %v756 = vsel %vm197, %v751, 0
    %758 = vmatpush.msra.mxu0 0.0
    %759 = vmatpush.msra.mxu0 0.0
    %760 = vmatpush.msra.mxu0 0.0
    %761 = vmatpush.msra.mxu0 0.0
    %762 = vmatpush.msra.mxu0 0.0
    %763 = vmatpush.msra.mxu0 0.0
    %764 = vmatpush.msra.mxu0 0.0
    %765 = vmatpush.msra.mxu0 0.0
    %766 = vmatpush.msra.mxu0 %v193
    %767 = vmatpush.msra.mxu0 %v191
    %768 = vmatpush.msra.mxu0 %v189
    %769 = vmatpush.msra.mxu0 %v187
    %770 = vmatpush.msra.mxu0 %v185
    %771 = vmatpush.msra.mxu0 %v183
    %772 = vmatpush.msra.mxu0 %v181
    %773 = vmatpush.msra.mxu0 %v179
    %774 = vmatmul.f32.gmra.mxu0 %v756
    %v775 = vpop.f32.mrf.mxu0
    %v776 = vadd.f32 0.0, %v775
    %777 = vdwg.mxu0
    %778 = vmatpush.msra.mxu0 0.0
    %779 = vmatpush.msra.mxu0 0.0
    %780 = vmatpush.msra.mxu0 0.0
    %781 = vmatpush.msra.mxu0 0.0
    %782 = vmatpush.msra.mxu0 0.0
    %783 = vmatpush.msra.mxu0 0.0
    %784 = vmatpush.msra.mxu0 0.0
    %785 = vmatpush.msra.mxu0 0.0
    %786 = vmatpush.msra.mxu0 %v194
    %787 = vmatpush.msra.mxu0 %v192
    %788 = vmatpush.msra.mxu0 %v190
    %789 = vmatpush.msra.mxu0 %v188
    %790 = vmatpush.msra.mxu0 %v186
    %791 = vmatpush.msra.mxu0 %v184
    %792 = vmatpush.msra.mxu0 %v182
    %793 = vmatpush.msra.mxu0 %v180
    %794 = vmatmul.f32.gmra.mxu0 %v756
    %v795 = vpop.f32.mrf.mxu0
    %v796 = vadd.f32 0.0, %v795
    %797 = vdwg.mxu0
    %v800 = vrot.slane %v776, 6
    %v801 = vrot.slane %v796, 6
    %v804 = vadd.f32 %v753, %v800
    %v805 = vadd.f32 %v754, %v801
    %v806 = vxor.u32 %v804, 2147483648
    %v807 = vxor.u32 %v805, 2147483648
    %v808 = vmul.f32 %v806, 1.442695
    %v809 = vpow.pop %v808
    %v810 = vmul.f32 %v807, 1.442695
    %v811 = vpow.pop %v810
    %v812 = vadd.f32 %v809, 1.0
    %v813 = vadd.f32 %v811, 1.0
    %v814 = vrcp.pop %v812
    %v815 = vmul.f32 %v812, %v814
    %v816 = vsub.f32 1.0, %v815
    %v817 = vmul.f32 %v814, %v816
    %v818 = vadd.f32 %v814, %v817
    %vm819 = vweird.f32 %v812
    %vm820 = vweird.f32 %v814
    %vm821 = vmor %vm819, %vm820
    %v822 = vsel %vm821, %v814, %v818
    %v823 = vand.u32 2147483647, %v812
    %vm824 = vcmp.eq.f32.partialorder %v823, 8.507059e+37
    %v825 = vand.u32 %v812, 2147483648
    %v826 = vor.u32 1.1754944e-38, %v825
    %v827 = vsel %vm824, %v826, %v822
    %v828 = vmul.f32 1.0, %v827
    %v829 = vrcp.pop %v813
    %v830 = vmul.f32 %v813, %v829
    %v831 = vsub.f32 1.0, %v830
    %v832 = vmul.f32 %v829, %v831
    %v833 = vadd.f32 %v829, %v832
    %vm834 = vweird.f32 %v813
    %vm835 = vweird.f32 %v829
    %vm836 = vmor %vm834, %vm835
    %v837 = vsel %vm836, %v829, %v833
    %v838 = vand.u32 2147483647, %v813
    %vm839 = vcmp.eq.f32.partialorder %v838, 8.507059e+37
    %v840 = vand.u32 %v813, 2147483648
    %v841 = vor.u32 1.1754944e-38, %v840
    %v842 = vsel %vm839, %v841, %v837
    %v843 = vmul.f32 1.0, %v842
    %v844 = vtanh.pop %v805
    %v846 = vrot.slane %v745, 6
    %v848 = vmul.f32 %v828, %v846
    %850 = vrot.lane.b32.xlu0 %v844, 64
    %v851 = vpop.permute.xlu0 %850
    %v853 = vmul.f32 %v828, %v851
    %855 = vrot.lane.b32.xlu0 %v853, 64
    %v856 = vpop.permute.xlu0 %855
    %v858 = vadd.f32 %v848, %v856
    %v859 = vtanh.pop %v858
    %861 = vrot.lane.b32.xlu0 %v859, 64
    %v862 = vpop.permute.xlu0 %861
    %v864 = vmul.f32 %v843, %v862
    %865 = vst.msk [vmem:[#allocation2 + $0x8] sm:$0xc] %vm413, %v864
    %v866 = vld [vmem:[#allocation3 + $0x10] sm:$0x30]
    %v867 = vld [vmem:[#allocation3 + $0x18] sm:$0x30]
    %v869 = vrot.slane %v864, 2
    %v870 = vsel %vm197, %v869, 0
    %872 = vmatpush.msra.mxu0 0.0
    %873 = vmatpush.msra.mxu0 0.0
    %874 = vmatpush.msra.mxu0 0.0
    %875 = vmatpush.msra.mxu0 0.0
    %876 = vmatpush.msra.mxu0 0.0
    %877 = vmatpush.msra.mxu0 0.0
    %878 = vmatpush.msra.mxu0 0.0
    %879 = vmatpush.msra.mxu0 0.0
    %880 = vmatpush.msra.mxu0 %v193
    %881 = vmatpush.msra.mxu0 %v191
    %882 = vmatpush.msra.mxu0 %v189
    %883 = vmatpush.msra.mxu0 %v187
    %884 = vmatpush.msra.mxu0 %v185
    %885 = vmatpush.msra.mxu0 %v183
    %886 = vmatpush.msra.mxu0 %v181
    %887 = vmatpush.msra.mxu0 %v179
    %888 = vmatmul.f32.gmra.mxu0 %v870
    %v889 = vpop.f32.mrf.mxu0
    %v890 = vadd.f32 0.0, %v889
    %891 = vdwg.mxu0
    %892 = vmatpush.msra.mxu0 0.0
    %893 = vmatpush.msra.mxu0 0.0
    %894 = vmatpush.msra.mxu0 0.0
    %895 = vmatpush.msra.mxu0 0.0
    %896 = vmatpush.msra.mxu0 0.0
    %897 = vmatpush.msra.mxu0 0.0
    %898 = vmatpush.msra.mxu0 0.0
    %899 = vmatpush.msra.mxu0 0.0
    %900 = vmatpush.msra.mxu0 %v194
    %901 = vmatpush.msra.mxu0 %v192
    %902 = vmatpush.msra.mxu0 %v190
    %903 = vmatpush.msra.mxu0 %v188
    %904 = vmatpush.msra.mxu0 %v186
    %905 = vmatpush.msra.mxu0 %v184
    %906 = vmatpush.msra.mxu0 %v182
    %907 = vmatpush.msra.mxu0 %v180
    %908 = vmatmul.f32.gmra.mxu0 %v870
    %v909 = vpop.f32.mrf.mxu0
    %v910 = vadd.f32 0.0, %v909
    %911 = vdwg.mxu0
    %v914 = vrot.slane %v890, 4
    %v915 = vrot.slane %v910, 4
    %v918 = vadd.f32 %v866, %v914
    %v919 = vadd.f32 %v867, %v915
    %v920 = vxor.u32 %v918, 2147483648
    %v921 = vxor.u32 %v919, 2147483648
    %v922 = vmul.f32 %v920, 1.442695
    %v923 = vpow.pop %v922
    %v924 = vmul.f32 %v921, 1.442695
    %v925 = vpow.pop %v924
    %v926 = vadd.f32 %v923, 1.0
    %v927 = vadd.f32 %v925, 1.0
    %v928 = vrcp.pop %v926
    %v929 = vmul.f32 %v926, %v928
    %v930 = vsub.f32 1.0, %v929
    %v931 = vmul.f32 %v928, %v930
    %v932 = vadd.f32 %v928, %v931
    %vm933 = vweird.f32 %v926
    %vm934 = vweird.f32 %v928
    %vm935 = vmor %vm933, %vm934
    %v936 = vsel %vm935, %v928, %v932
    %v937 = vand.u32 2147483647, %v926
    %vm938 = vcmp.eq.f32.partialorder %v937, 8.507059e+37
    %v939 = vand.u32 %v926, 2147483648
    %v940 = vor.u32 1.1754944e-38, %v939
    %v941 = vsel %vm938, %v940, %v936
    %v942 = vmul.f32 1.0, %v941
    %v943 = vrcp.pop %v927
    %v944 = vmul.f32 %v927, %v943
    %v945 = vsub.f32 1.0, %v944
    %v946 = vmul.f32 %v943, %v945
    %v947 = vadd.f32 %v943, %v946
    %vm948 = vweird.f32 %v927
    %vm949 = vweird.f32 %v943
    %vm950 = vmor %vm948, %vm949
    %v951 = vsel %vm950, %v943, %v947
    %v952 = vand.u32 2147483647, %v927
    %vm953 = vcmp.eq.f32.partialorder %v952, 8.507059e+37
    %v954 = vand.u32 %v927, 2147483648
    %v955 = vor.u32 1.1754944e-38, %v954
    %v956 = vsel %vm953, %v955, %v951
    %v957 = vmul.f32 1.0, %v956
    %v958 = vtanh.pop %v919
    %v960 = vrot.slane %v858, 6
    %v962 = vmul.f32 %v942, %v960
    %964 = vrot.lane.b32.xlu0 %v958, 64
    %v965 = vpop.permute.xlu0 %964
    %v967 = vmul.f32 %v942, %v965
    %969 = vrot.lane.b32.xlu0 %v967, 64
    %v970 = vpop.permute.xlu0 %969
    %v972 = vadd.f32 %v962, %v970
    %v973 = vtanh.pop %v972
    %975 = vrot.lane.b32.xlu0 %v973, 64
    %v976 = vpop.permute.xlu0 %975
    %v978 = vmul.f32 %v957, %v976
    %979 = vst.msk [vmem:[#allocation2 + $0x8] sm:$0x30] %vm528, %v978
    %v980 = vld [vmem:[#allocation3 + $0x10] sm:$0xc0]
    %v981 = vld [vmem:[#allocation3 + $0x18] sm:$0xc0]
    %v983 = vrot.slane %v978, 4
    %v984 = vsel %vm197, %v983, 0
    %986 = vmatpush.msra.mxu0 0.0
    %987 = vmatpush.msra.mxu0 0.0
    %988 = vmatpush.msra.mxu0 0.0
    %989 = vmatpush.msra.mxu0 0.0
    %990 = vmatpush.msra.mxu0 0.0
    %991 = vmatpush.msra.mxu0 0.0
    %992 = vmatpush.msra.mxu0 0.0
    %993 = vmatpush.msra.mxu0 0.0
    %994 = vmatpush.msra.mxu0 %v193
    %995 = vmatpush.msra.mxu0 %v191
    %996 = vmatpush.msra.mxu0 %v189
    %997 = vmatpush.msra.mxu0 %v187
    %998 = vmatpush.msra.mxu0 %v185
    %999 = vmatpush.msra.mxu0 %v183
    %1000 = vmatpush.msra.mxu0 %v181
    %1001 = vmatpush.msra.mxu0 %v179
    %1002 = vmatmul.f32.gmra.mxu0 %v984
    %v1003 = vpop.f32.mrf.mxu0
    %v1004 = vadd.f32 0.0, %v1003
    %1005 = vdwg.mxu0
    %1006 = vmatpush.msra.mxu0 0.0
    %1007 = vmatpush.msra.mxu0 0.0
    %1008 = vmatpush.msra.mxu0 0.0
    %1009 = vmatpush.msra.mxu0 0.0
    %1010 = vmatpush.msra.mxu0 0.0
    %1011 = vmatpush.msra.mxu0 0.0
    %1012 = vmatpush.msra.mxu0 0.0
    %1013 = vmatpush.msra.mxu0 0.0
    %1014 = vmatpush.msra.mxu0 %v194
    %1015 = vmatpush.msra.mxu0 %v192
    %1016 = vmatpush.msra.mxu0 %v190
    %1017 = vmatpush.msra.mxu0 %v188
    %1018 = vmatpush.msra.mxu0 %v186
    %1019 = vmatpush.msra.mxu0 %v184
    %1020 = vmatpush.msra.mxu0 %v182
    %1021 = vmatpush.msra.mxu0 %v180
    %1022 = vmatmul.f32.gmra.mxu0 %v984
    %v1023 = vpop.f32.mrf.mxu0
    %v1024 = vadd.f32 0.0, %v1023
    %1025 = vdwg.mxu0
    %v1028 = vrot.slane %v1004, 2
    %v1029 = vrot.slane %v1024, 2
    %v1032 = vadd.f32 %v980, %v1028
    %v1033 = vadd.f32 %v981, %v1029
    %v1034 = vxor.u32 %v1032, 2147483648
    %v1035 = vxor.u32 %v1033, 2147483648
    %v1036 = vmul.f32 %v1034, 1.442695
    %v1037 = vpow.pop %v1036
    %v1038 = vmul.f32 %v1035, 1.442695
    %v1039 = vpow.pop %v1038
    %v1040 = vadd.f32 %v1037, 1.0
    %v1041 = vadd.f32 %v1039, 1.0
    %v1042 = vrcp.pop %v1040
    %v1043 = vmul.f32 %v1040, %v1042
    %v1044 = vsub.f32 1.0, %v1043
    %v1045 = vmul.f32 %v1042, %v1044
    %v1046 = vadd.f32 %v1042, %v1045
    %vm1047 = vweird.f32 %v1040
    %vm1048 = vweird.f32 %v1042
    %vm1049 = vmor %vm1047, %vm1048
    %v1050 = vsel %vm1049, %v1042, %v1046
    %v1051 = vand.u32 2147483647, %v1040
    %vm1052 = vcmp.eq.f32.partialorder %v1051, 8.507059e+37
    %v1053 = vand.u32 %v1040, 2147483648
    %v1054 = vor.u32 1.1754944e-38, %v1053
    %v1055 = vsel %vm1052, %v1054, %v1050
    %v1056 = vmul.f32 1.0, %v1055
    %v1057 = vrcp.pop %v1041
    %v1058 = vmul.f32 %v1041, %v1057
    %v1059 = vsub.f32 1.0, %v1058
    %v1060 = vmul.f32 %v1057, %v1059
    %v1061 = vadd.f32 %v1057, %v1060
    %vm1062 = vweird.f32 %v1041
    %vm1063 = vweird.f32 %v1057
    %vm1064 = vmor %vm1062, %vm1063
    %v1065 = vsel %vm1064, %v1057, %v1061
    %v1066 = vand.u32 2147483647, %v1041
    %vm1067 = vcmp.eq.f32.partialorder %v1066, 8.507059e+37
    %v1068 = vand.u32 %v1041, 2147483648
    %v1069 = vor.u32 1.1754944e-38, %v1068
    %v1070 = vsel %vm1067, %v1069, %v1065
    %v1071 = vmul.f32 1.0, %v1070
    %v1072 = vtanh.pop %v1033
    %v1074 = vrot.slane %v972, 6
    %v1076 = vmul.f32 %v1056, %v1074
    %1078 = vrot.lane.b32.xlu0 %v1072, 64
    %v1079 = vpop.permute.xlu0 %1078
    %v1081 = vmul.f32 %v1056, %v1079
    %1083 = vrot.lane.b32.xlu0 %v1081, 64
    %v1084 = vpop.permute.xlu0 %1083
    %v1086 = vadd.f32 %v1076, %v1084
    %v1087 = vtanh.pop %v1086
    %1089 = vrot.lane.b32.xlu0 %v1087, 64
    %v1090 = vpop.permute.xlu0 %1089
    %v1092 = vmul.f32 %v1071, %v1090
    %1093 = vst.msk [vmem:[#allocation2 + $0x8] sm:$0xc0] %vm643, %v1092
    %v1094 = vld [vmem:[#allocation2] sm:$0xff]
    %v1095 = vld [vmem:[#allocation2 + $0x8] sm:$0xff]
    %v1096 = vld [vmem:[#allocation7] sm:$0xff]
    %v1097 = vld [vmem:[#allocation7 + $0x8] sm:$0xff]
    %v1098 = vld [vmem:[#allocation7 + $0x10] sm:$0xff]
    %v1099 = vld [vmem:[#allocation7 + $0x18] sm:$0xff]
    %v1100 = vld [vmem:[#allocation7 + $0x20] sm:$0xff]
    %v1101 = vld [vmem:[#allocation7 + $0x28] sm:$0xff]
    %v1102 = vld [vmem:[#allocation7 + $0x30] sm:$0xff]
    %v1103 = vld [vmem:[#allocation7 + $0x38] sm:$0xff]
    %v1104 = vld [vmem:[#allocation7 + $0x40] sm:$0xff]
    %v1105 = vld [vmem:[#allocation7 + $0x48] sm:$0xff]
    %v1106 = vld [vmem:[#allocation7 + $0x50] sm:$0xff]
    %v1107 = vld [vmem:[#allocation7 + $0x58] sm:$0xff]
    %v1108 = vld [vmem:[#allocation7 + $0x60] sm:$0xff]
    %v1109 = vld [vmem:[#allocation7 + $0x68] sm:$0xff]
    %v1110 = vld [vmem:[#allocation7 + $0x70] sm:$0xff]
    %v1111 = vld [vmem:[#allocation7 + $0x78] sm:$0xff]
    %v1112 = vld [vmem:[%s6] sm:$0x3]
    %v1114 = vperm.slane %v1112, 0
    %v1115 = vperm.slane %v1112, 1
    %v1119 = vsel %vm197, %v1094, 0
    %v1122 = vsel %vm197, %v1095, 0
    %1124 = vmatpush.msra.mxu0 0.0
    %1125 = vmatpush.msra.mxu0 0.0
    %1126 = vmatpush.msra.mxu0 0.0
    %1127 = vmatpush.msra.mxu0 0.0
    %1128 = vmatpush.msra.mxu0 0.0
    %1129 = vmatpush.msra.mxu0 0.0
    %1130 = vmatpush.msra.mxu0 0.0
    %1131 = vmatpush.msra.mxu0 0.0
    %1132 = vmatpush.msra.mxu0 %v1110
    %1133 = vmatpush.msra.mxu0 %v1108
    %1134 = vmatpush.msra.mxu0 %v1106
    %1135 = vmatpush.msra.mxu0 %v1104
    %1136 = vmatpush.msra.mxu0 %v1102
    %1137 = vmatpush.msra.mxu0 %v1100
    %1138 = vmatpush.msra.mxu0 %v1098
    %1139 = vmatpush.msra.mxu0 %v1096
    %1140 = vmatmul.f32.gmra.mxu0 %v1119
    %v1141 = vpop.f32.mrf.mxu0
    %v1142 = vadd.f32 %v1114, %v1141
    %1143 = vmatmul.f32.gmra.mxu0 %v1122
    %v1144 = vpop.f32.mrf.mxu0
    %v1145 = vadd.f32 %v1114, %v1144
    %1146 = vdwg.mxu0
    %1147 = vmatpush.msra.mxu0 0.0
    %1148 = vmatpush.msra.mxu0 0.0
    %1149 = vmatpush.msra.mxu0 0.0
    %1150 = vmatpush.msra.mxu0 0.0
    %1151 = vmatpush.msra.mxu0 0.0
    %1152 = vmatpush.msra.mxu0 0.0
    %1153 = vmatpush.msra.mxu0 0.0
    %1154 = vmatpush.msra.mxu0 0.0
    %1155 = vmatpush.msra.mxu0 %v1111
    %1156 = vmatpush.msra.mxu0 %v1109
    %1157 = vmatpush.msra.mxu0 %v1107
    %1158 = vmatpush.msra.mxu0 %v1105
    %1159 = vmatpush.msra.mxu0 %v1103
    %1160 = vmatpush.msra.mxu0 %v1101
    %1161 = vmatpush.msra.mxu0 %v1099
    %1162 = vmatpush.msra.mxu0 %v1097
    %1163 = vmatmul.f32.gmra.mxu0 %v1119
    %v1164 = vpop.f32.mrf.mxu0
    %v1165 = vadd.f32 %v1115, %v1164
    %1166 = vmatmul.f32.gmra.mxu0 %v1122
    %v1167 = vpop.f32.mrf.mxu0
    %v1168 = vadd.f32 %v1115, %v1167
    %1169 = vdwg.mxu0
    %1170 = vst [vmem:[#allocation3] sm:$0xff] %v1142
    %1171 = vst [vmem:[#allocation3 + $0x8] sm:$0xff] %v1165
    %1172 = vst [vmem:[#allocation3 + $0x10] sm:$0xff] %v1145
    %1173 = vst [vmem:[#allocation3 + $0x18] sm:$0xff] %v1168
    %v1174 = vld [vmem:[#allocation9] sm:$0xff]
    %v1175 = vld [vmem:[#allocation9 + $0x8] sm:$0xff]
    %v1176 = vld [vmem:[#allocation9 + $0x10] sm:$0xff]
    %v1177 = vld [vmem:[#allocation9 + $0x18] sm:$0xff]
    %v1178 = vld [vmem:[#allocation9 + $0x20] sm:$0xff]
    %v1179 = vld [vmem:[#allocation9 + $0x28] sm:$0xff]
    %v1180 = vld [vmem:[#allocation9 + $0x30] sm:$0xff]
    %v1181 = vld [vmem:[#allocation9 + $0x38] sm:$0xff]
    %v1182 = vld [vmem:[#allocation9 + $0x40] sm:$0xff]
    %v1183 = vld [vmem:[#allocation9 + $0x48] sm:$0xff]
    %v1184 = vld [vmem:[#allocation9 + $0x50] sm:$0xff]
    %v1185 = vld [vmem:[#allocation9 + $0x58] sm:$0xff]
    %v1186 = vld [vmem:[#allocation9 + $0x60] sm:$0xff]
    %v1187 = vld [vmem:[#allocation9 + $0x68] sm:$0xff]
    %v1188 = vld [vmem:[#allocation9 + $0x70] sm:$0xff]
    %v1189 = vld [vmem:[#allocation9 + $0x78] sm:$0xff]
    %v1190 = vld [vmem:[#allocation3] sm:$0x3]
    %v1191 = vld [vmem:[#allocation3 + $0x8] sm:$0x3]
    %1192 = vmatpush.msra.mxu0 0.0
    %1193 = vmatpush.msra.mxu0 0.0
    %1194 = vmatpush.msra.mxu0 0.0
    %1195 = vmatpush.msra.mxu0 0.0
    %1196 = vmatpush.msra.mxu0 0.0
    %1197 = vmatpush.msra.mxu0 0.0
    %1198 = vmatpush.msra.mxu0 0.0
    %1199 = vmatpush.msra.mxu0 0.0
    %1200 = vmatpush.msra.mxu0 %v1188
    %1201 = vmatpush.msra.mxu0 %v1186
    %1202 = vmatpush.msra.mxu0 %v1184
    %1203 = vmatpush.msra.mxu0 %v1182
    %1204 = vmatpush.msra.mxu0 %v1180
    %1205 = vmatpush.msra.mxu0 %v1178
    %1206 = vmatpush.msra.mxu0 %v1176
    %1207 = vmatpush.msra.mxu0 %v1174
    %1208 = vmatmul.f32.gmra.mxu0 %v199
    %v1209 = vpop.f32.mrf.mxu0
    %v1210 = vadd.f32 0.0, %v1209
    %1211 = vdwg.mxu0
    %1212 = vmatpush.msra.mxu0 0.0
    %1213 = vmatpush.msra.mxu0 0.0
    %1214 = vmatpush.msra.mxu0 0.0
    %1215 = vmatpush.msra.mxu0 0.0
    %1216 = vmatpush.msra.mxu0 0.0
    %1217 = vmatpush.msra.mxu0 0.0
    %1218 = vmatpush.msra.mxu0 0.0
    %1219 = vmatpush.msra.mxu0 0.0
    %1220 = vmatpush.msra.mxu0 %v1189
    %1221 = vmatpush.msra.mxu0 %v1187
    %1222 = vmatpush.msra.mxu0 %v1185
    %1223 = vmatpush.msra.mxu0 %v1183
    %1224 = vmatpush.msra.mxu0 %v1181
    %1225 = vmatpush.msra.mxu0 %v1179
    %1226 = vmatpush.msra.mxu0 %v1177
    %1227 = vmatpush.msra.mxu0 %v1175
    %1228 = vmatmul.f32.gmra.mxu0 %v199
    %v1229 = vpop.f32.mrf.mxu0
    %v1230 = vadd.f32 0.0, %v1229
    %1231 = vdwg.mxu0
    %v1232 = vadd.f32 %v1190, %v1210
    %v1233 = vadd.f32 %v1191, %v1230
    %v1234 = vxor.u32 %v1232, 2147483648
    %v1235 = vxor.u32 %v1233, 2147483648
    %v1236 = vmul.f32 %v1234, 1.442695
    %v1237 = vpow.pop %v1236
    %v1238 = vmul.f32 %v1235, 1.442695
    %v1239 = vpow.pop %v1238
    %v1240 = vadd.f32 %v1237, 1.0
    %v1241 = vadd.f32 %v1239, 1.0
    %v1242 = vrcp.pop %v1240
    %v1243 = vmul.f32 %v1240, %v1242
    %v1244 = vsub.f32 1.0, %v1243
    %v1245 = vmul.f32 %v1242, %v1244
    %v1246 = vadd.f32 %v1242, %v1245
    %vm1247 = vweird.f32 %v1240
    %vm1248 = vweird.f32 %v1242
    %vm1249 = vmor %vm1247, %vm1248
    %v1250 = vsel %vm1249, %v1242, %v1246
    %v1251 = vand.u32 2147483647, %v1240
    %vm1252 = vcmp.eq.f32.partialorder %v1251, 8.507059e+37
    %v1253 = vand.u32 %v1240, 2147483648
    %v1254 = vor.u32 1.1754944e-38, %v1253
    %v1255 = vsel %vm1252, %v1254, %v1250
    %v1256 = vmul.f32 1.0, %v1255
    %v1257 = vrcp.pop %v1241
    %v1258 = vmul.f32 %v1241, %v1257
    %v1259 = vsub.f32 1.0, %v1258
    %v1260 = vmul.f32 %v1257, %v1259
    %v1261 = vadd.f32 %v1257, %v1260
    %vm1262 = vweird.f32 %v1241
    %vm1263 = vweird.f32 %v1257
    %vm1264 = vmor %vm1262, %vm1263
    %v1265 = vsel %vm1264, %v1257, %v1261
    %v1266 = vand.u32 2147483647, %v1241
    %vm1267 = vcmp.eq.f32.partialorder %v1266, 8.507059e+37
    %v1268 = vand.u32 %v1241, 2147483648
    %v1269 = vor.u32 1.1754944e-38, %v1268
    %v1270 = vsel %vm1267, %v1269, %v1265
    %v1271 = vmul.f32 1.0, %v1270
    %v1272 = vtanh.pop %v1233
    %v1273 = vmul.f32 %v1256, 0.0
    %1275 = vrot.lane.b32.xlu0 %v1272, 64
    %v1276 = vpop.permute.xlu0 %1275
    %v1278 = vmul.f32 %v1256, %v1276
    %1280 = vrot.lane.b32.xlu0 %v1278, 64
    %v1281 = vpop.permute.xlu0 %1280
    %v1283 = vadd.f32 %v1273, %v1281
    %v1284 = vtanh.pop %v1283
    %1286 = vrot.lane.b32.xlu0 %v1284, 64
    %v1287 = vpop.permute.xlu0 %1286
    %v1289 = vmul.f32 %v1271, %v1287
    %v1290 = vld [vmem:[#allocation3] sm:$0xc]
    %v1291 = vld [vmem:[#allocation3 + $0x8] sm:$0xc]
    %v1293 = vsel %vm197, %v1289, 0
    %1295 = vmatpush.msra.mxu0 0.0
    %1296 = vmatpush.msra.mxu0 0.0
    %1297 = vmatpush.msra.mxu0 0.0
    %1298 = vmatpush.msra.mxu0 0.0
    %1299 = vmatpush.msra.mxu0 0.0
    %1300 = vmatpush.msra.mxu0 0.0
    %1301 = vmatpush.msra.mxu0 0.0
    %1302 = vmatpush.msra.mxu0 0.0
    %1303 = vmatpush.msra.mxu0 %v1188
    %1304 = vmatpush.msra.mxu0 %v1186
    %1305 = vmatpush.msra.mxu0 %v1184
    %1306 = vmatpush.msra.mxu0 %v1182
    %1307 = vmatpush.msra.mxu0 %v1180
    %1308 = vmatpush.msra.mxu0 %v1178
    %1309 = vmatpush.msra.mxu0 %v1176
    %1310 = vmatpush.msra.mxu0 %v1174
    %1311 = vmatmul.f32.gmra.mxu0 %v1293
    %v1312 = vpop.f32.mrf.mxu0
    %v1313 = vadd.f32 0.0, %v1312
    %1314 = vdwg.mxu0
    %1315 = vmatpush.msra.mxu0 0.0
    %1316 = vmatpush.msra.mxu0 0.0
    %1317 = vmatpush.msra.mxu0 0.0
    %1318 = vmatpush.msra.mxu0 0.0
    %1319 = vmatpush.msra.mxu0 0.0
    %1320 = vmatpush.msra.mxu0 0.0
    %1321 = vmatpush.msra.mxu0 0.0
    %1322 = vmatpush.msra.mxu0 0.0
    %1323 = vmatpush.msra.mxu0 %v1189
    %1324 = vmatpush.msra.mxu0 %v1187
    %1325 = vmatpush.msra.mxu0 %v1185
    %1326 = vmatpush.msra.mxu0 %v1183
    %1327 = vmatpush.msra.mxu0 %v1181
    %1328 = vmatpush.msra.mxu0 %v1179
    %1329 = vmatpush.msra.mxu0 %v1177
    %1330 = vmatpush.msra.mxu0 %v1175
    %1331 = vmatmul.f32.gmra.mxu0 %v1293
    %v1332 = vpop.f32.mrf.mxu0
    %v1333 = vadd.f32 0.0, %v1332
    %1334 = vdwg.mxu0
    %v1337 = vrot.slane %v1313, 6
    %v1338 = vrot.slane %v1333, 6
    %v1341 = vadd.f32 %v1290, %v1337
    %v1342 = vadd.f32 %v1291, %v1338
    %v1343 = vxor.u32 %v1341, 2147483648
    %v1344 = vxor.u32 %v1342, 2147483648
    %v1345 = vmul.f32 %v1343, 1.442695
    %v1346 = vpow.pop %v1345
    %v1347 = vmul.f32 %v1344, 1.442695
    %v1348 = vpow.pop %v1347
    %v1349 = vadd.f32 %v1346, 1.0
    %v1350 = vadd.f32 %v1348, 1.0
    %v1351 = vrcp.pop %v1349
    %v1352 = vmul.f32 %v1349, %v1351
    %v1353 = vsub.f32 1.0, %v1352
    %v1354 = vmul.f32 %v1351, %v1353
    %v1355 = vadd.f32 %v1351, %v1354
    %vm1356 = vweird.f32 %v1349
    %vm1357 = vweird.f32 %v1351
    %vm1358 = vmor %vm1356, %vm1357
    %v1359 = vsel %vm1358, %v1351, %v1355
    %v1360 = vand.u32 2147483647, %v1349
    %vm1361 = vcmp.eq.f32.partialorder %v1360, 8.507059e+37
    %v1362 = vand.u32 %v1349, 2147483648
    %v1363 = vor.u32 1.1754944e-38, %v1362
    %v1364 = vsel %vm1361, %v1363, %v1359
    %v1365 = vmul.f32 1.0, %v1364
    %v1366 = vrcp.pop %v1350
    %v1367 = vmul.f32 %v1350, %v1366
    %v1368 = vsub.f32 1.0, %v1367
    %v1369 = vmul.f32 %v1366, %v1368
    %v1370 = vadd.f32 %v1366, %v1369
    %vm1371 = vweird.f32 %v1350
    %vm1372 = vweird.f32 %v1366
    %vm1373 = vmor %vm1371, %vm1372
    %v1374 = vsel %vm1373, %v1366, %v1370
    %v1375 = vand.u32 2147483647, %v1350
    %vm1376 = vcmp.eq.f32.partialorder %v1375, 8.507059e+37
    %v1377 = vand.u32 %v1350, 2147483648
    %v1378 = vor.u32 1.1754944e-38, %v1377
    %v1379 = vsel %vm1376, %v1378, %v1374
    %v1380 = vmul.f32 1.0, %v1379
    %v1381 = vtanh.pop %v1342
    %v1383 = vrot.slane %v1283, 6
    %v1385 = vmul.f32 %v1365, %v1383
    %1387 = vrot.lane.b32.xlu0 %v1381, 64
    %v1388 = vpop.permute.xlu0 %1387
    %v1390 = vmul.f32 %v1365, %v1388
    %1392 = vrot.lane.b32.xlu0 %v1390, 64
    %v1393 = vpop.permute.xlu0 %1392
    %v1395 = vadd.f32 %v1385, %v1393
    %v1396 = vtanh.pop %v1395
    %1398 = vrot.lane.b32.xlu0 %v1396, 64
    %v1399 = vpop.permute.xlu0 %1398
    %v1401 = vmul.f32 %v1380, %v1399
    %v1402 = vld [vmem:[#allocation3] sm:$0x30]
    %v1403 = vld [vmem:[#allocation3 + $0x8] sm:$0x30]
    %v1405 = vrot.slane %v1401, 2
    %v1406 = vsel %vm197, %v1405, 0
    %1408 = vmatpush.msra.mxu0 0.0
    %1409 = vmatpush.msra.mxu0 0.0
    %1410 = vmatpush.msra.mxu0 0.0
    %1411 = vmatpush.msra.mxu0 0.0
    %1412 = vmatpush.msra.mxu0 0.0
    %1413 = vmatpush.msra.mxu0 0.0
    %1414 = vmatpush.msra.mxu0 0.0
    %1415 = vmatpush.msra.mxu0 0.0
    %1416 = vmatpush.msra.mxu0 %v1188
    %1417 = vmatpush.msra.mxu0 %v1186
    %1418 = vmatpush.msra.mxu0 %v1184
    %1419 = vmatpush.msra.mxu0 %v1182
    %1420 = vmatpush.msra.mxu0 %v1180
    %1421 = vmatpush.msra.mxu0 %v1178
    %1422 = vmatpush.msra.mxu0 %v1176
    %1423 = vmatpush.msra.mxu0 %v1174
    %1424 = vmatmul.f32.gmra.mxu0 %v1406
    %v1425 = vpop.f32.mrf.mxu0
    %v1426 = vadd.f32 0.0, %v1425
    %1427 = vdwg.mxu0
    %1428 = vmatpush.msra.mxu0 0.0
    %1429 = vmatpush.msra.mxu0 0.0
    %1430 = vmatpush.msra.mxu0 0.0
    %1431 = vmatpush.msra.mxu0 0.0
    %1432 = vmatpush.msra.mxu0 0.0
    %1433 = vmatpush.msra.mxu0 0.0
    %1434 = vmatpush.msra.mxu0 0.0
    %1435 = vmatpush.msra.mxu0 0.0
    %1436 = vmatpush.msra.mxu0 %v1189
    %1437 = vmatpush.msra.mxu0 %v1187
    %1438 = vmatpush.msra.mxu0 %v1185
    %1439 = vmatpush.msra.mxu0 %v1183
    %1440 = vmatpush.msra.mxu0 %v1181
    %1441 = vmatpush.msra.mxu0 %v1179
    %1442 = vmatpush.msra.mxu0 %v1177
    %1443 = vmatpush.msra.mxu0 %v1175
    %1444 = vmatmul.f32.gmra.mxu0 %v1406
    %v1445 = vpop.f32.mrf.mxu0
    %v1446 = vadd.f32 0.0, %v1445
    %1447 = vdwg.mxu0
    %v1450 = vrot.slane %v1426, 4
    %v1451 = vrot.slane %v1446, 4
    %v1454 = vadd.f32 %v1402, %v1450
    %v1455 = vadd.f32 %v1403, %v1451
    %v1456 = vxor.u32 %v1454, 2147483648
    %v1457 = vxor.u32 %v1455, 2147483648
    %v1458 = vmul.f32 %v1456, 1.442695
    %v1459 = vpow.pop %v1458
    %v1460 = vmul.f32 %v1457, 1.442695
    %v1461 = vpow.pop %v1460
    %v1462 = vadd.f32 %v1459, 1.0
    %v1463 = vadd.f32 %v1461, 1.0
    %v1464 = vrcp.pop %v1462
    %v1465 = vmul.f32 %v1462, %v1464
    %v1466 = vsub.f32 1.0, %v1465
    %v1467 = vmul.f32 %v1464, %v1466
    %v1468 = vadd.f32 %v1464, %v1467
    %vm1469 = vweird.f32 %v1462
    %vm1470 = vweird.f32 %v1464
    %vm1471 = vmor %vm1469, %vm1470
    %v1472 = vsel %vm1471, %v1464, %v1468
    %v1473 = vand.u32 2147483647, %v1462
    %vm1474 = vcmp.eq.f32.partialorder %v1473, 8.507059e+37
    %v1475 = vand.u32 %v1462, 2147483648
    %v1476 = vor.u32 1.1754944e-38, %v1475
    %v1477 = vsel %vm1474, %v1476, %v1472
    %v1478 = vmul.f32 1.0, %v1477
    %v1479 = vrcp.pop %v1463
    %v1480 = vmul.f32 %v1463, %v1479
    %v1481 = vsub.f32 1.0, %v1480
    %v1482 = vmul.f32 %v1479, %v1481
    %v1483 = vadd.f32 %v1479, %v1482
    %vm1484 = vweird.f32 %v1463
    %vm1485 = vweird.f32 %v1479
    %vm1486 = vmor %vm1484, %vm1485
    %v1487 = vsel %vm1486, %v1479, %v1483
    %v1488 = vand.u32 2147483647, %v1463
    %vm1489 = vcmp.eq.f32.partialorder %v1488, 8.507059e+37
    %v1490 = vand.u32 %v1463, 2147483648
    %v1491 = vor.u32 1.1754944e-38, %v1490
    %v1492 = vsel %vm1489, %v1491, %v1487
    %v1493 = vmul.f32 1.0, %v1492
    %v1494 = vtanh.pop %v1455
    %v1496 = vrot.slane %v1395, 6
    %v1498 = vmul.f32 %v1478, %v1496
    %1500 = vrot.lane.b32.xlu0 %v1494, 64
    %v1501 = vpop.permute.xlu0 %1500
    %v1503 = vmul.f32 %v1478, %v1501
    %1505 = vrot.lane.b32.xlu0 %v1503, 64
    %v1506 = vpop.permute.xlu0 %1505
    %v1508 = vadd.f32 %v1498, %v1506
    %v1509 = vtanh.pop %v1508
    %1511 = vrot.lane.b32.xlu0 %v1509, 64
    %v1512 = vpop.permute.xlu0 %1511
    %v1514 = vmul.f32 %v1493, %v1512
    %v1515 = vld [vmem:[#allocation3] sm:$0xc0]
    %v1516 = vld [vmem:[#allocation3 + $0x8] sm:$0xc0]
    %v1518 = vrot.slane %v1514, 4
    %v1519 = vsel %vm197, %v1518, 0
    %1521 = vmatpush.msra.mxu0 0.0
    %1522 = vmatpush.msra.mxu0 0.0
    %1523 = vmatpush.msra.mxu0 0.0
    %1524 = vmatpush.msra.mxu0 0.0
    %1525 = vmatpush.msra.mxu0 0.0
    %1526 = vmatpush.msra.mxu0 0.0
    %1527 = vmatpush.msra.mxu0 0.0
    %1528 = vmatpush.msra.mxu0 0.0
    %1529 = vmatpush.msra.mxu0 %v1188
    %1530 = vmatpush.msra.mxu0 %v1186
    %1531 = vmatpush.msra.mxu0 %v1184
    %1532 = vmatpush.msra.mxu0 %v1182
    %1533 = vmatpush.msra.mxu0 %v1180
    %1534 = vmatpush.msra.mxu0 %v1178
    %1535 = vmatpush.msra.mxu0 %v1176
    %1536 = vmatpush.msra.mxu0 %v1174
    %1537 = vmatmul.f32.gmra.mxu0 %v1519
    %v1538 = vpop.f32.mrf.mxu0
    %v1539 = vadd.f32 0.0, %v1538
    %1540 = vdwg.mxu0
    %1541 = vmatpush.msra.mxu0 0.0
    %1542 = vmatpush.msra.mxu0 0.0
    %1543 = vmatpush.msra.mxu0 0.0
    %1544 = vmatpush.msra.mxu0 0.0
    %1545 = vmatpush.msra.mxu0 0.0
    %1546 = vmatpush.msra.mxu0 0.0
    %1547 = vmatpush.msra.mxu0 0.0
    %1548 = vmatpush.msra.mxu0 0.0
    %1549 = vmatpush.msra.mxu0 %v1189
    %1550 = vmatpush.msra.mxu0 %v1187
    %1551 = vmatpush.msra.mxu0 %v1185
    %1552 = vmatpush.msra.mxu0 %v1183
    %1553 = vmatpush.msra.mxu0 %v1181
    %1554 = vmatpush.msra.mxu0 %v1179
    %1555 = vmatpush.msra.mxu0 %v1177
    %1556 = vmatpush.msra.mxu0 %v1175
    %1557 = vmatmul.f32.gmra.mxu0 %v1519
    %v1558 = vpop.f32.mrf.mxu0
    %v1559 = vadd.f32 0.0, %v1558
    %1560 = vdwg.mxu0
    %v1563 = vrot.slane %v1539, 2
    %v1564 = vrot.slane %v1559, 2
    %v1567 = vadd.f32 %v1515, %v1563
    %v1568 = vadd.f32 %v1516, %v1564
    %v1569 = vxor.u32 %v1567, 2147483648
    %v1570 = vxor.u32 %v1568, 2147483648
    %v1571 = vmul.f32 %v1569, 1.442695
    %v1572 = vpow.pop %v1571
    %v1573 = vmul.f32 %v1570, 1.442695
    %v1574 = vpow.pop %v1573
    %v1575 = vadd.f32 %v1572, 1.0
    %v1576 = vadd.f32 %v1574, 1.0
    %v1577 = vrcp.pop %v1575
    %v1578 = vmul.f32 %v1575, %v1577
    %v1579 = vsub.f32 1.0, %v1578
    %v1580 = vmul.f32 %v1577, %v1579
    %v1581 = vadd.f32 %v1577, %v1580
    %vm1582 = vweird.f32 %v1575
    %vm1583 = vweird.f32 %v1577
    %vm1584 = vmor %vm1582, %vm1583
    %v1585 = vsel %vm1584, %v1577, %v1581
    %v1586 = vand.u32 2147483647, %v1575
    %vm1587 = vcmp.eq.f32.partialorder %v1586, 8.507059e+37
    %v1588 = vand.u32 %v1575, 2147483648
    %v1589 = vor.u32 1.1754944e-38, %v1588
    %v1590 = vsel %vm1587, %v1589, %v1585
    %v1591 = vmul.f32 1.0, %v1590
    %v1592 = vrcp.pop %v1576
    %v1593 = vmul.f32 %v1576, %v1592
    %v1594 = vsub.f32 1.0, %v1593
    %v1595 = vmul.f32 %v1592, %v1594
    %v1596 = vadd.f32 %v1592, %v1595
    %vm1597 = vweird.f32 %v1576
    %vm1598 = vweird.f32 %v1592
    %vm1599 = vmor %vm1597, %vm1598
    %v1600 = vsel %vm1599, %v1592, %v1596
    %v1601 = vand.u32 2147483647, %v1576
    %vm1602 = vcmp.eq.f32.partialorder %v1601, 8.507059e+37
    %v1603 = vand.u32 %v1576, 2147483648
    %v1604 = vor.u32 1.1754944e-38, %v1603
    %v1605 = vsel %vm1602, %v1604, %v1600
    %v1606 = vmul.f32 1.0, %v1605
    %v1607 = vtanh.pop %v1568
    %v1609 = vrot.slane %v1508, 6
    %v1611 = vmul.f32 %v1591, %v1609
    %1613 = vrot.lane.b32.xlu0 %v1607, 64
    %v1614 = vpop.permute.xlu0 %1613
    %v1616 = vmul.f32 %v1591, %v1614
    %1618 = vrot.lane.b32.xlu0 %v1616, 64
    %v1619 = vpop.permute.xlu0 %1618
    %v1621 = vadd.f32 %v1611, %v1619
    %v1622 = vtanh.pop %v1621
    %1624 = vrot.lane.b32.xlu0 %v1622, 64
    %v1625 = vpop.permute.xlu0 %1624
    %v1627 = vmul.f32 %v1606, %v1625
    %v1628 = vld [vmem:[#allocation3 + $0x10] sm:$0x3]
    %v1629 = vld [vmem:[#allocation3 + $0x18] sm:$0x3]
    %v1631 = vrot.slane %v1627, 6
    %v1632 = vsel %vm197, %v1631, 0
    %1634 = vmatpush.msra.mxu0 0.0
    %1635 = vmatpush.msra.mxu0 0.0
    %1636 = vmatpush.msra.mxu0 0.0
    %1637 = vmatpush.msra.mxu0 0.0
    %1638 = vmatpush.msra.mxu0 0.0
    %1639 = vmatpush.msra.mxu0 0.0
    %1640 = vmatpush.msra.mxu0 0.0
    %1641 = vmatpush.msra.mxu0 0.0
    %1642 = vmatpush.msra.mxu0 %v1188
    %1643 = vmatpush.msra.mxu0 %v1186
    %1644 = vmatpush.msra.mxu0 %v1184
    %1645 = vmatpush.msra.mxu0 %v1182
    %1646 = vmatpush.msra.mxu0 %v1180
    %1647 = vmatpush.msra.mxu0 %v1178
    %1648 = vmatpush.msra.mxu0 %v1176
    %1649 = vmatpush.msra.mxu0 %v1174
    %1650 = vmatmul.f32.gmra.mxu0 %v1632
    %v1651 = vpop.f32.mrf.mxu0
    %v1652 = vadd.f32 0.0, %v1651
    %1653 = vdwg.mxu0
    %1654 = vmatpush.msra.mxu0 0.0
    %1655 = vmatpush.msra.mxu0 0.0
    %1656 = vmatpush.msra.mxu0 0.0
    %1657 = vmatpush.msra.mxu0 0.0
    %1658 = vmatpush.msra.mxu0 0.0
    %1659 = vmatpush.msra.mxu0 0.0
    %1660 = vmatpush.msra.mxu0 0.0
    %1661 = vmatpush.msra.mxu0 0.0
    %1662 = vmatpush.msra.mxu0 %v1189
    %1663 = vmatpush.msra.mxu0 %v1187
    %1664 = vmatpush.msra.mxu0 %v1185
    %1665 = vmatpush.msra.mxu0 %v1183
    %1666 = vmatpush.msra.mxu0 %v1181
    %1667 = vmatpush.msra.mxu0 %v1179
    %1668 = vmatpush.msra.mxu0 %v1177
    %1669 = vmatpush.msra.mxu0 %v1175
    %1670 = vmatmul.f32.gmra.mxu0 %v1632
    %v1671 = vpop.f32.mrf.mxu0
    %v1672 = vadd.f32 0.0, %v1671
    %1673 = vdwg.mxu0
    %v1674 = vadd.f32 %v1628, %v1652
    %v1675 = vadd.f32 %v1629, %v1672
    %v1676 = vxor.u32 %v1674, 2147483648
    %v1677 = vxor.u32 %v1675, 2147483648
    %v1678 = vmul.f32 %v1676, 1.442695
    %v1679 = vpow.pop %v1678
    %v1680 = vmul.f32 %v1677, 1.442695
    %v1681 = vpow.pop %v1680
    %v1682 = vadd.f32 %v1679, 1.0
    %v1683 = vadd.f32 %v1681, 1.0
    %v1684 = vrcp.pop %v1682
    %v1685 = vmul.f32 %v1682, %v1684
    %v1686 = vsub.f32 1.0, %v1685
    %v1687 = vmul.f32 %v1684, %v1686
    %v1688 = vadd.f32 %v1684, %v1687
    %vm1689 = vweird.f32 %v1682
    %vm1690 = vweird.f32 %v1684
    %vm1691 = vmor %vm1689, %vm1690
    %v1692 = vsel %vm1691, %v1684, %v1688
    %v1693 = vand.u32 2147483647, %v1682
    %vm1694 = vcmp.eq.f32.partialorder %v1693, 8.507059e+37
    %v1695 = vand.u32 %v1682, 2147483648
    %v1696 = vor.u32 1.1754944e-38, %v1695
    %v1697 = vsel %vm1694, %v1696, %v1692
    %v1698 = vmul.f32 1.0, %v1697
    %v1699 = vrcp.pop %v1683
    %v1700 = vmul.f32 %v1683, %v1699
    %v1701 = vsub.f32 1.0, %v1700
    %v1702 = vmul.f32 %v1699, %v1701
    %v1703 = vadd.f32 %v1699, %v1702
    %vm1704 = vweird.f32 %v1683
    %vm1705 = vweird.f32 %v1699
    %vm1706 = vmor %vm1704, %vm1705
    %v1707 = vsel %vm1706, %v1699, %v1703
    %v1708 = vand.u32 2147483647, %v1683
    %vm1709 = vcmp.eq.f32.partialorder %v1708, 8.507059e+37
    %v1710 = vand.u32 %v1683, 2147483648
    %v1711 = vor.u32 1.1754944e-38, %v1710
    %v1712 = vsel %vm1709, %v1711, %v1707
    %v1713 = vmul.f32 1.0, %v1712
    %v1714 = vtanh.pop %v1675
    %v1716 = vrot.slane %v1621, 6
    %v1718 = vmul.f32 %v1698, %v1716
    %1720 = vrot.lane.b32.xlu0 %v1714, 64
    %v1721 = vpop.permute.xlu0 %1720
    %v1723 = vmul.f32 %v1698, %v1721
    %1725 = vrot.lane.b32.xlu0 %v1723, 64
    %v1726 = vpop.permute.xlu0 %1725
    %v1728 = vadd.f32 %v1718, %v1726
    %v1729 = vtanh.pop %v1728
    %1731 = vrot.lane.b32.xlu0 %v1729, 64
    %v1732 = vpop.permute.xlu0 %1731
    %v1734 = vmul.f32 %v1713, %v1732
    %v1735 = vld [vmem:[#allocation3 + $0x10] sm:$0xc]
    %v1736 = vld [vmem:[#allocation3 + $0x18] sm:$0xc]
    %v1738 = vsel %vm197, %v1734, 0
    %1740 = vmatpush.msra.mxu0 0.0
    %1741 = vmatpush.msra.mxu0 0.0
    %1742 = vmatpush.msra.mxu0 0.0
    %1743 = vmatpush.msra.mxu0 0.0
    %1744 = vmatpush.msra.mxu0 0.0
    %1745 = vmatpush.msra.mxu0 0.0
    %1746 = vmatpush.msra.mxu0 0.0
    %1747 = vmatpush.msra.mxu0 0.0
    %1748 = vmatpush.msra.mxu0 %v1188
    %1749 = vmatpush.msra.mxu0 %v1186
    %1750 = vmatpush.msra.mxu0 %v1184
    %1751 = vmatpush.msra.mxu0 %v1182
    %1752 = vmatpush.msra.mxu0 %v1180
    %1753 = vmatpush.msra.mxu0 %v1178
    %1754 = vmatpush.msra.mxu0 %v1176
    %1755 = vmatpush.msra.mxu0 %v1174
    %1756 = vmatmul.f32.gmra.mxu0 %v1738
    %v1757 = vpop.f32.mrf.mxu0
    %v1758 = vadd.f32 0.0, %v1757
    %1759 = vdwg.mxu0
    %1760 = vmatpush.msra.mxu0 0.0
    %1761 = vmatpush.msra.mxu0 0.0
    %1762 = vmatpush.msra.mxu0 0.0
    %1763 = vmatpush.msra.mxu0 0.0
    %1764 = vmatpush.msra.mxu0 0.0
    %1765 = vmatpush.msra.mxu0 0.0
    %1766 = vmatpush.msra.mxu0 0.0
    %1767 = vmatpush.msra.mxu0 0.0
    %1768 = vmatpush.msra.mxu0 %v1189
    %1769 = vmatpush.msra.mxu0 %v1187
    %1770 = vmatpush.msra.mxu0 %v1185
    %1771 = vmatpush.msra.mxu0 %v1183
    %1772 = vmatpush.msra.mxu0 %v1181
    %1773 = vmatpush.msra.mxu0 %v1179
    %1774 = vmatpush.msra.mxu0 %v1177
    %1775 = vmatpush.msra.mxu0 %v1175
    %1776 = vmatmul.f32.gmra.mxu0 %v1738
    %v1777 = vpop.f32.mrf.mxu0
    %v1778 = vadd.f32 0.0, %v1777
    %1779 = vdwg.mxu0
    %v1782 = vrot.slane %v1758, 6
    %v1783 = vrot.slane %v1778, 6
    %v1786 = vadd.f32 %v1735, %v1782
    %v1787 = vadd.f32 %v1736, %v1783
    %v1788 = vxor.u32 %v1786, 2147483648
    %v1789 = vxor.u32 %v1787, 2147483648
    %v1790 = vmul.f32 %v1788, 1.442695
    %v1791 = vpow.pop %v1790
    %v1792 = vmul.f32 %v1789, 1.442695
    %v1793 = vpow.pop %v1792
    %v1794 = vadd.f32 %v1791, 1.0
    %v1795 = vadd.f32 %v1793, 1.0
    %v1796 = vrcp.pop %v1794
    %v1797 = vmul.f32 %v1794, %v1796
    %v1798 = vsub.f32 1.0, %v1797
    %v1799 = vmul.f32 %v1796, %v1798
    %v1800 = vadd.f32 %v1796, %v1799
    %vm1801 = vweird.f32 %v1794
    %vm1802 = vweird.f32 %v1796
    %vm1803 = vmor %vm1801, %vm1802
    %v1804 = vsel %vm1803, %v1796, %v1800
    %v1805 = vand.u32 2147483647, %v1794
    %vm1806 = vcmp.eq.f32.partialorder %v1805, 8.507059e+37
    %v1807 = vand.u32 %v1794, 2147483648
    %v1808 = vor.u32 1.1754944e-38, %v1807
    %v1809 = vsel %vm1806, %v1808, %v1804
    %v1810 = vmul.f32 1.0, %v1809
    %v1811 = vrcp.pop %v1795
    %v1812 = vmul.f32 %v1795, %v1811
    %v1813 = vsub.f32 1.0, %v1812
    %v1814 = vmul.f32 %v1811, %v1813
    %v1815 = vadd.f32 %v1811, %v1814
    %vm1816 = vweird.f32 %v1795
    %vm1817 = vweird.f32 %v1811
    %vm1818 = vmor %vm1816, %vm1817
    %v1819 = vsel %vm1818, %v1811, %v1815
    %v1820 = vand.u32 2147483647, %v1795
    %vm1821 = vcmp.eq.f32.partialorder %v1820, 8.507059e+37
    %v1822 = vand.u32 %v1795, 2147483648
    %v1823 = vor.u32 1.1754944e-38, %v1822
    %v1824 = vsel %vm1821, %v1823, %v1819
    %v1825 = vmul.f32 1.0, %v1824
    %v1826 = vtanh.pop %v1787
    %v1828 = vrot.slane %v1728, 6
    %v1830 = vmul.f32 %v1810, %v1828
    %1832 = vrot.lane.b32.xlu0 %v1826, 64
    %v1833 = vpop.permute.xlu0 %1832
    %v1835 = vmul.f32 %v1810, %v1833
    %1837 = vrot.lane.b32.xlu0 %v1835, 64
    %v1838 = vpop.permute.xlu0 %1837
    %v1840 = vadd.f32 %v1830, %v1838
    %v1841 = vtanh.pop %v1840
    %1843 = vrot.lane.b32.xlu0 %v1841, 64
    %v1844 = vpop.permute.xlu0 %1843
    %v1846 = vmul.f32 %v1825, %v1844
    %v1847 = vld [vmem:[#allocation3 + $0x10] sm:$0x30]
    %v1848 = vld [vmem:[#allocation3 + $0x18] sm:$0x30]
    %v1850 = vrot.slane %v1846, 2
    %v1851 = vsel %vm197, %v1850, 0
    %1853 = vmatpush.msra.mxu0 0.0
    %1854 = vmatpush.msra.mxu0 0.0
    %1855 = vmatpush.msra.mxu0 0.0
    %1856 = vmatpush.msra.mxu0 0.0
    %1857 = vmatpush.msra.mxu0 0.0
    %1858 = vmatpush.msra.mxu0 0.0
    %1859 = vmatpush.msra.mxu0 0.0
    %1860 = vmatpush.msra.mxu0 0.0
    %1861 = vmatpush.msra.mxu0 %v1188
    %1862 = vmatpush.msra.mxu0 %v1186
    %1863 = vmatpush.msra.mxu0 %v1184
    %1864 = vmatpush.msra.mxu0 %v1182
    %1865 = vmatpush.msra.mxu0 %v1180
    %1866 = vmatpush.msra.mxu0 %v1178
    %1867 = vmatpush.msra.mxu0 %v1176
    %1868 = vmatpush.msra.mxu0 %v1174
    %1869 = vmatmul.f32.gmra.mxu0 %v1851
    %v1870 = vpop.f32.mrf.mxu0
    %v1871 = vadd.f32 0.0, %v1870
    %1872 = vdwg.mxu0
    %1873 = vmatpush.msra.mxu0 0.0
    %1874 = vmatpush.msra.mxu0 0.0
    %1875 = vmatpush.msra.mxu0 0.0
    %1876 = vmatpush.msra.mxu0 0.0
    %1877 = vmatpush.msra.mxu0 0.0
    %1878 = vmatpush.msra.mxu0 0.0
    %1879 = vmatpush.msra.mxu0 0.0
    %1880 = vmatpush.msra.mxu0 0.0
    %1881 = vmatpush.msra.mxu0 %v1189
    %1882 = vmatpush.msra.mxu0 %v1187
    %1883 = vmatpush.msra.mxu0 %v1185
    %1884 = vmatpush.msra.mxu0 %v1183
    %1885 = vmatpush.msra.mxu0 %v1181
    %1886 = vmatpush.msra.mxu0 %v1179
    %1887 = vmatpush.msra.mxu0 %v1177
    %1888 = vmatpush.msra.mxu0 %v1175
    %1889 = vmatmul.f32.gmra.mxu0 %v1851
    %v1890 = vpop.f32.mrf.mxu0
    %v1891 = vadd.f32 0.0, %v1890
    %1892 = vdwg.mxu0
    %v1895 = vrot.slane %v1871, 4
    %v1896 = vrot.slane %v1891, 4
    %v1899 = vadd.f32 %v1847, %v1895
    %v1900 = vadd.f32 %v1848, %v1896
    %v1901 = vxor.u32 %v1899, 2147483648
    %v1902 = vxor.u32 %v1900, 2147483648
    %v1903 = vmul.f32 %v1901, 1.442695
    %v1904 = vpow.pop %v1903
    %v1905 = vmul.f32 %v1902, 1.442695
    %v1906 = vpow.pop %v1905
    %v1907 = vadd.f32 %v1904, 1.0
    %v1908 = vadd.f32 %v1906, 1.0
    %v1909 = vrcp.pop %v1907
    %v1910 = vmul.f32 %v1907, %v1909
    %v1911 = vsub.f32 1.0, %v1910
    %v1912 = vmul.f32 %v1909, %v1911
    %v1913 = vadd.f32 %v1909, %v1912
    %vm1914 = vweird.f32 %v1907
    %vm1915 = vweird.f32 %v1909
    %vm1916 = vmor %vm1914, %vm1915
    %v1917 = vsel %vm1916, %v1909, %v1913
    %v1918 = vand.u32 2147483647, %v1907
    %vm1919 = vcmp.eq.f32.partialorder %v1918, 8.507059e+37
    %v1920 = vand.u32 %v1907, 2147483648
    %v1921 = vor.u32 1.1754944e-38, %v1920
    %v1922 = vsel %vm1919, %v1921, %v1917
    %v1923 = vmul.f32 1.0, %v1922
    %v1924 = vrcp.pop %v1908
    %v1925 = vmul.f32 %v1908, %v1924
    %v1926 = vsub.f32 1.0, %v1925
    %v1927 = vmul.f32 %v1924, %v1926
    %v1928 = vadd.f32 %v1924, %v1927
    %vm1929 = vweird.f32 %v1908
    %vm1930 = vweird.f32 %v1924
    %vm1931 = vmor %vm1929, %vm1930
    %v1932 = vsel %vm1931, %v1924, %v1928
    %v1933 = vand.u32 2147483647, %v1908
    %vm1934 = vcmp.eq.f32.partialorder %v1933, 8.507059e+37
    %v1935 = vand.u32 %v1908, 2147483648
    %v1936 = vor.u32 1.1754944e-38, %v1935
    %v1937 = vsel %vm1934, %v1936, %v1932
    %v1938 = vmul.f32 1.0, %v1937
    %v1939 = vtanh.pop %v1900
    %v1941 = vrot.slane %v1840, 6
    %v1943 = vmul.f32 %v1923, %v1941
    %1945 = vrot.lane.b32.xlu0 %v1939, 64
    %v1946 = vpop.permute.xlu0 %1945
    %v1948 = vmul.f32 %v1923, %v1946
    %1950 = vrot.lane.b32.xlu0 %v1948, 64
    %v1951 = vpop.permute.xlu0 %1950
    %v1953 = vadd.f32 %v1943, %v1951
    %v1954 = vtanh.pop %v1953
    %1956 = vrot.lane.b32.xlu0 %v1954, 64
    %v1957 = vpop.permute.xlu0 %1956
    %v1959 = vmul.f32 %v1938, %v1957
    %v1960 = vld [vmem:[#allocation3 + $0x10] sm:$0xc0]
    %v1961 = vld [vmem:[#allocation3 + $0x18] sm:$0xc0]
    %v1963 = vrot.slane %v1959, 4
    %v1964 = vsel %vm197, %v1963, 0
    %1966 = vmatpush.msra.mxu0 0.0
    %1967 = vmatpush.msra.mxu0 0.0
    %1968 = vmatpush.msra.mxu0 0.0
    %1969 = vmatpush.msra.mxu0 0.0
    %1970 = vmatpush.msra.mxu0 0.0
    %1971 = vmatpush.msra.mxu0 0.0
    %1972 = vmatpush.msra.mxu0 0.0
    %1973 = vmatpush.msra.mxu0 0.0
    %1974 = vmatpush.msra.mxu0 %v1188
    %1975 = vmatpush.msra.mxu0 %v1186
    %1976 = vmatpush.msra.mxu0 %v1184
    %1977 = vmatpush.msra.mxu0 %v1182
    %1978 = vmatpush.msra.mxu0 %v1180
    %1979 = vmatpush.msra.mxu0 %v1178
    %1980 = vmatpush.msra.mxu0 %v1176
    %1981 = vmatpush.msra.mxu0 %v1174
    %1982 = vmatmul.f32.gmra.mxu0 %v1964
    %v1983 = vpop.f32.mrf.mxu0
    %v1984 = vadd.f32 0.0, %v1983
    %1985 = vdwg.mxu0
    %1986 = vmatpush.msra.mxu0 0.0
    %1987 = vmatpush.msra.mxu0 0.0
    %1988 = vmatpush.msra.mxu0 0.0
    %1989 = vmatpush.msra.mxu0 0.0
    %1990 = vmatpush.msra.mxu0 0.0
    %1991 = vmatpush.msra.mxu0 0.0
    %1992 = vmatpush.msra.mxu0 0.0
    %1993 = vmatpush.msra.mxu0 0.0
    %1994 = vmatpush.msra.mxu0 %v1189
    %1995 = vmatpush.msra.mxu0 %v1187
    %1996 = vmatpush.msra.mxu0 %v1185
    %1997 = vmatpush.msra.mxu0 %v1183
    %1998 = vmatpush.msra.mxu0 %v1181
    %1999 = vmatpush.msra.mxu0 %v1179
    %2000 = vmatpush.msra.mxu0 %v1177
    %2001 = vmatpush.msra.mxu0 %v1175
    %2002 = vmatmul.f32.gmra.mxu0 %v1964
    %v2003 = vpop.f32.mrf.mxu0
    %v2004 = vadd.f32 0.0, %v2003
    %2005 = vdwg.mxu0
    %v2008 = vrot.slane %v1984, 2
    %v2009 = vrot.slane %v2004, 2
    %v2012 = vadd.f32 %v1960, %v2008
    %v2013 = vadd.f32 %v1961, %v2009
    %v2014 = vxor.u32 %v2012, 2147483648
    %v2015 = vxor.u32 %v2013, 2147483648
    %v2016 = vmul.f32 %v2014, 1.442695
    %v2017 = vpow.pop %v2016
    %v2018 = vmul.f32 %v2015, 1.442695
    %v2019 = vpow.pop %v2018
    %v2020 = vadd.f32 %v2017, 1.0
    %v2021 = vadd.f32 %v2019, 1.0
    %v2022 = vrcp.pop %v2020
    %v2023 = vmul.f32 %v2020, %v2022
    %v2024 = vsub.f32 1.0, %v2023
    %v2025 = vmul.f32 %v2022, %v2024
    %v2026 = vadd.f32 %v2022, %v2025
    %vm2027 = vweird.f32 %v2020
    %vm2028 = vweird.f32 %v2022
    %vm2029 = vmor %vm2027, %vm2028
    %v2030 = vsel %vm2029, %v2022, %v2026
    %v2031 = vand.u32 2147483647, %v2020
    %vm2032 = vcmp.eq.f32.partialorder %v2031, 8.507059e+37
    %v2033 = vand.u32 %v2020, 2147483648
    %v2034 = vor.u32 1.1754944e-38, %v2033
    %v2035 = vsel %vm2032, %v2034, %v2030
    %v2036 = vmul.f32 1.0, %v2035
    %v2037 = vrcp.pop %v2021
    %v2038 = vmul.f32 %v2021, %v2037
    %v2039 = vsub.f32 1.0, %v2038
    %v2040 = vmul.f32 %v2037, %v2039
    %v2041 = vadd.f32 %v2037, %v2040
    %vm2042 = vweird.f32 %v2021
    %vm2043 = vweird.f32 %v2037
    %vm2044 = vmor %vm2042, %vm2043
    %v2045 = vsel %vm2044, %v2037, %v2041
    %v2046 = vand.u32 2147483647, %v2021
    %vm2047 = vcmp.eq.f32.partialorder %v2046, 8.507059e+37
    %v2048 = vand.u32 %v2021, 2147483648
    %v2049 = vor.u32 1.1754944e-38, %v2048
    %v2050 = vsel %vm2047, %v2049, %v2045
    %v2051 = vmul.f32 1.0, %v2050
    %v2052 = vtanh.pop %v2013
    %v2054 = vrot.slane %v1953, 6
    %v2056 = vmul.f32 %v2036, %v2054
    %2058 = vrot.lane.b32.xlu0 %v2052, 64
    %v2059 = vpop.permute.xlu0 %2058
    %v2061 = vmul.f32 %v2036, %v2059
    %2063 = vrot.lane.b32.xlu0 %v2061, 64
    %v2064 = vpop.permute.xlu0 %2063
    %v2066 = vadd.f32 %v2056, %v2064
    %v2067 = vtanh.pop %v2066
    %2069 = vrot.lane.b32.xlu0 %v2067, 64
    %v2070 = vpop.permute.xlu0 %2069
    %v2072 = vmul.f32 %v2051, %v2070
    %v2073 = vld [vmem:[%s8] sm:$0x3]
    %v2074 = vld [vmem:[#allocation10] sm:$0xff]
    %v2075 = vld [vmem:[#allocation10 + $0x8] sm:$0xff]
    %v2076 = vld [vmem:[#allocation10 + $0x10] sm:$0xff]
    %v2077 = vld [vmem:[#allocation10 + $0x18] sm:$0xff]
    %v2078 = vld [vmem:[#allocation10 + $0x20] sm:$0xff]
    %v2079 = vld [vmem:[#allocation10 + $0x28] sm:$0xff]
    %v2080 = vld [vmem:[#allocation10 + $0x30] sm:$0xff]
    %v2081 = vld [vmem:[#allocation10 + $0x38] sm:$0xff]
    %v2082 = vld [vmem:[#allocation10 + $0x40] sm:$0xff]
    %v2083 = vld [vmem:[#allocation10 + $0x48] sm:$0xff]
    %v2084 = vld [vmem:[#allocation10 + $0x50] sm:$0xff]
    %v2085 = vld [vmem:[#allocation10 + $0x58] sm:$0xff]
    %v2086 = vld [vmem:[#allocation10 + $0x60] sm:$0xff]
    %v2087 = vld [vmem:[#allocation10 + $0x68] sm:$0xff]
    %v2088 = vld [vmem:[#allocation10 + $0x70] sm:$0xff]
    %v2089 = vld [vmem:[#allocation10 + $0x78] sm:$0xff]
    %v2091 = vrot.slane %v1092, 6
    %v2092 = vsel %vm197, %v2091, 0
    %2094 = vmatpush.msra.mxu0 0.0
    %2095 = vmatpush.msra.mxu0 0.0
    %2096 = vmatpush.msra.mxu0 0.0
    %2097 = vmatpush.msra.mxu0 0.0
    %2098 = vmatpush.msra.mxu0 0.0
    %2099 = vmatpush.msra.mxu0 0.0
    %2100 = vmatpush.msra.mxu0 0.0
    %2101 = vmatpush.msra.mxu0 0.0
    %2102 = vmatpush.msra.mxu0 %v2088
    %2103 = vmatpush.msra.mxu0 %v2086
    %2104 = vmatpush.msra.mxu0 %v2084
    %2105 = vmatpush.msra.mxu0 %v2082
    %2106 = vmatpush.msra.mxu0 %v2080
    %2107 = vmatpush.msra.mxu0 %v2078
    %2108 = vmatpush.msra.mxu0 %v2076
    %2109 = vmatpush.msra.mxu0 %v2074
    %2110 = vmatmul.f32.gmra.mxu0 %v2092
    %v2111 = vpop.f32.mrf.mxu0
    %v2112 = vadd.f32 0.0, %v2111
    %2113 = vdwg.mxu0
    %2114 = vmatpush.msra.mxu0 0.0
    %2115 = vmatpush.msra.mxu0 0.0
    %2116 = vmatpush.msra.mxu0 0.0
    %2117 = vmatpush.msra.mxu0 0.0
    %2118 = vmatpush.msra.mxu0 0.0
    %2119 = vmatpush.msra.mxu0 0.0
    %2120 = vmatpush.msra.mxu0 0.0
    %2121 = vmatpush.msra.mxu0 0.0
    %2122 = vmatpush.msra.mxu0 %v2089
    %2123 = vmatpush.msra.mxu0 %v2087
    %2124 = vmatpush.msra.mxu0 %v2085
    %2125 = vmatpush.msra.mxu0 %v2083
    %2126 = vmatpush.msra.mxu0 %v2081
    %2127 = vmatpush.msra.mxu0 %v2079
    %2128 = vmatpush.msra.mxu0 %v2077
    %2129 = vmatpush.msra.mxu0 %v2075
    %2130 = vmatmul.f32.gmra.mxu0 %v2092
    %v2131 = vpop.f32.mrf.mxu0
    %v2132 = vadd.f32 0.0, %v2131
    %2133 = vdwg.mxu0
    %v2135 = vperm.slane %v2073, 0
    %v2136 = vperm.slane %v2073, 1
    %v2139 = vadd.f32 %v2135, %v2112
    %v2140 = vadd.f32 %v2136, %v2132
    %v2141 = vxor.u32 %v2139, 2147483648
    %v2142 = vxor.u32 %v2140, 2147483648
    %v2143 = vmul.f32 %v2141, 1.442695
    %v2144 = vpow.pop %v2143
    %v2145 = vmul.f32 %v2142, 1.442695
    %v2146 = vpow.pop %v2145
    %v2147 = vadd.f32 %v2144, 1.0
    %v2148 = vadd.f32 %v2146, 1.0
    %v2149 = vrcp.pop %v2147
    %v2150 = vmul.f32 %v2147, %v2149
    %v2151 = vsub.f32 1.0, %v2150
    %v2152 = vmul.f32 %v2149, %v2151
    %v2153 = vadd.f32 %v2149, %v2152
    %vm2154 = vweird.f32 %v2147
    %vm2155 = vweird.f32 %v2149
    %vm2156 = vmor %vm2154, %vm2155
    %v2157 = vsel %vm2156, %v2149, %v2153
    %v2158 = vand.u32 2147483647, %v2147
    %vm2159 = vcmp.eq.f32.partialorder %v2158, 8.507059e+37
    %v2160 = vand.u32 %v2147, 2147483648
    %v2161 = vor.u32 1.1754944e-38, %v2160
    %v2162 = vsel %vm2159, %v2161, %v2157
    %v2163 = vmul.f32 1.0, %v2162
    %v2164 = vrcp.pop %v2148
    %v2165 = vmul.f32 %v2148, %v2164
    %v2166 = vsub.f32 1.0, %v2165
    %v2167 = vmul.f32 %v2164, %v2166
    %v2168 = vadd.f32 %v2164, %v2167
    %vm2169 = vweird.f32 %v2148
    %vm2170 = vweird.f32 %v2164
    %vm2171 = vmor %vm2169, %vm2170
    %v2172 = vsel %vm2171, %v2164, %v2168
    %v2173 = vand.u32 2147483647, %v2148
    %vm2174 = vcmp.eq.f32.partialorder %v2173, 8.507059e+37
    %v2175 = vand.u32 %v2148, 2147483648
    %v2176 = vor.u32 1.1754944e-38, %v2175
    %v2177 = vsel %vm2174, %v2176, %v2172
    %v2178 = vmul.f32 1.0, %v2177
    %v2179 = vtanh.pop %v2140
    %v2181 = vrot.slane %v1086, 6
    %v2183 = vmul.f32 %v2163, %v2181
    %2185 = vrot.lane.b32.xlu0 %v2179, 64
    %v2186 = vpop.permute.xlu0 %2185
    %v2188 = vmul.f32 %v2163, %v2186
    %2190 = vrot.lane.b32.xlu0 %v2188, 64
    %v2191 = vpop.permute.xlu0 %2190
    %v2193 = vadd.f32 %v2183, %v2191
    %v2194 = vtanh.pop %v2193
    %2196 = vrot.lane.b32.xlu0 %v2194, 64
    %v2197 = vpop.permute.xlu0 %2196
    %v2199 = vmul.f32 %v2178, %v2197
    %2200 = vst.msk [vmem:[#allocation2] sm:$0x3] %vm299, %v2199
    %v2202 = vsel %vm197, %v2199, 0
    %2204 = vmatpush.msra.mxu0 0.0
    %2205 = vmatpush.msra.mxu0 0.0
    %2206 = vmatpush.msra.mxu0 0.0
    %2207 = vmatpush.msra.mxu0 0.0
    %2208 = vmatpush.msra.mxu0 0.0
    %2209 = vmatpush.msra.mxu0 0.0
    %2210 = vmatpush.msra.mxu0 0.0
    %2211 = vmatpush.msra.mxu0 0.0
    %2212 = vmatpush.msra.mxu0 %v2088
    %2213 = vmatpush.msra.mxu0 %v2086
    %2214 = vmatpush.msra.mxu0 %v2084
    %2215 = vmatpush.msra.mxu0 %v2082
    %2216 = vmatpush.msra.mxu0 %v2080
    %2217 = vmatpush.msra.mxu0 %v2078
    %2218 = vmatpush.msra.mxu0 %v2076
    %2219 = vmatpush.msra.mxu0 %v2074
    %2220 = vmatmul.f32.gmra.mxu0 %v2202
    %v2221 = vpop.f32.mrf.mxu0
    %v2222 = vadd.f32 0.0, %v2221
    %2223 = vdwg.mxu0
    %2224 = vmatpush.msra.mxu0 0.0
    %2225 = vmatpush.msra.mxu0 0.0
    %2226 = vmatpush.msra.mxu0 0.0
    %2227 = vmatpush.msra.mxu0 0.0
    %2228 = vmatpush.msra.mxu0 0.0
    %2229 = vmatpush.msra.mxu0 0.0
    %2230 = vmatpush.msra.mxu0 0.0
    %2231 = vmatpush.msra.mxu0 0.0
    %2232 = vmatpush.msra.mxu0 %v2089
    %2233 = vmatpush.msra.mxu0 %v2087
    %2234 = vmatpush.msra.mxu0 %v2085
    %2235 = vmatpush.msra.mxu0 %v2083
    %2236 = vmatpush.msra.mxu0 %v2081
    %2237 = vmatpush.msra.mxu0 %v2079
    %2238 = vmatpush.msra.mxu0 %v2077
    %2239 = vmatpush.msra.mxu0 %v2075
    %2240 = vmatmul.f32.gmra.mxu0 %v2202
    %v2241 = vpop.f32.mrf.mxu0
    %v2242 = vadd.f32 0.0, %v2241
    %2243 = vdwg.mxu0
    %v2244 = vadd.f32 %v2135, %v2222
    %v2245 = vadd.f32 %v2136, %v2242
    %v2246 = vxor.u32 %v2244, 2147483648
    %v2247 = vxor.u32 %v2245, 2147483648
    %v2248 = vmul.f32 %v2246, 1.442695
    %v2249 = vpow.pop %v2248
    %v2250 = vmul.f32 %v2247, 1.442695
    %v2251 = vpow.pop %v2250
    %v2252 = vadd.f32 %v2249, 1.0
    %v2253 = vadd.f32 %v2251, 1.0
    %v2254 = vrcp.pop %v2252
    %v2255 = vmul.f32 %v2252, %v2254
    %v2256 = vsub.f32 1.0, %v2255
    %v2257 = vmul.f32 %v2254, %v2256
    %v2258 = vadd.f32 %v2254, %v2257
    %vm2259 = vweird.f32 %v2252
    %vm2260 = vweird.f32 %v2254
    %vm2261 = vmor %vm2259, %vm2260
    %v2262 = vsel %vm2261, %v2254, %v2258
    %v2263 = vand.u32 2147483647, %v2252
    %vm2264 = vcmp.eq.f32.partialorder %v2263, 8.507059e+37
    %v2265 = vand.u32 %v2252, 2147483648
    %v2266 = vor.u32 1.1754944e-38, %v2265
    %v2267 = vsel %vm2264, %v2266, %v2262
    %v2268 = vmul.f32 1.0, %v2267
    %v2269 = vrcp.pop %v2253
    %v2270 = vmul.f32 %v2253, %v2269
    %v2271 = vsub.f32 1.0, %v2270
    %v2272 = vmul.f32 %v2269, %v2271
    %v2273 = vadd.f32 %v2269, %v2272
    %vm2274 = vweird.f32 %v2253
    %vm2275 = vweird.f32 %v2269
    %vm2276 = vmor %vm2274, %vm2275
    %v2277 = vsel %vm2276, %v2269, %v2273
    %v2278 = vand.u32 2147483647, %v2253
    %vm2279 = vcmp.eq.f32.partialorder %v2278, 8.507059e+37
    %v2280 = vand.u32 %v2253, 2147483648
    %v2281 = vor.u32 1.1754944e-38, %v2280
    %v2282 = vsel %vm2279, %v2281, %v2277
    %v2283 = vmul.f32 1.0, %v2282
    %v2284 = vtanh.pop %v2245
    %v2285 = vmul.f32 %v2268, %v2193
    %2287 = vrot.lane.b32.xlu0 %v2284, 64
    %v2288 = vpop.permute.xlu0 %2287
    %v2290 = vmul.f32 %v2268, %v2288
    %2292 = vrot.lane.b32.xlu0 %v2290, 64
    %v2293 = vpop.permute.xlu0 %2292
    %v2295 = vadd.f32 %v2285, %v2293
    %v2296 = vtanh.pop %v2295
    %2298 = vrot.lane.b32.xlu0 %v2296, 64
    %v2299 = vpop.permute.xlu0 %2298
    %v2301 = vmul.f32 %v2283, %v2299
    %2302 = vst.msk [vmem:[#allocation2 + $0x2] sm:$0x3] %vm299, %v2301
    %v2304 = vsel %vm197, %v2301, 0
    %2306 = vmatpush.msra.mxu0 0.0
    %2307 = vmatpush.msra.mxu0 0.0
    %2308 = vmatpush.msra.mxu0 0.0
    %2309 = vmatpush.msra.mxu0 0.0
    %2310 = vmatpush.msra.mxu0 0.0
    %2311 = vmatpush.msra.mxu0 0.0
    %2312 = vmatpush.msra.mxu0 0.0
    %2313 = vmatpush.msra.mxu0 0.0
    %2314 = vmatpush.msra.mxu0 %v2088
    %2315 = vmatpush.msra.mxu0 %v2086
    %2316 = vmatpush.msra.mxu0 %v2084
    %2317 = vmatpush.msra.mxu0 %v2082
    %2318 = vmatpush.msra.mxu0 %v2080
    %2319 = vmatpush.msra.mxu0 %v2078
    %2320 = vmatpush.msra.mxu0 %v2076
    %2321 = vmatpush.msra.mxu0 %v2074
    %2322 = vmatmul.f32.gmra.mxu0 %v2304
    %v2323 = vpop.f32.mrf.mxu0
    %v2324 = vadd.f32 0.0, %v2323
    %2325 = vdwg.mxu0
    %2326 = vmatpush.msra.mxu0 0.0
    %2327 = vmatpush.msra.mxu0 0.0
    %2328 = vmatpush.msra.mxu0 0.0
    %2329 = vmatpush.msra.mxu0 0.0
    %2330 = vmatpush.msra.mxu0 0.0
    %2331 = vmatpush.msra.mxu0 0.0
    %2332 = vmatpush.msra.mxu0 0.0
    %2333 = vmatpush.msra.mxu0 0.0
    %2334 = vmatpush.msra.mxu0 %v2089
    %2335 = vmatpush.msra.mxu0 %v2087
    %2336 = vmatpush.msra.mxu0 %v2085
    %2337 = vmatpush.msra.mxu0 %v2083
    %2338 = vmatpush.msra.mxu0 %v2081
    %2339 = vmatpush.msra.mxu0 %v2079
    %2340 = vmatpush.msra.mxu0 %v2077
    %2341 = vmatpush.msra.mxu0 %v2075
    %2342 = vmatmul.f32.gmra.mxu0 %v2304
    %v2343 = vpop.f32.mrf.mxu0
    %v2344 = vadd.f32 0.0, %v2343
    %2345 = vdwg.mxu0
    %v2346 = vadd.f32 %v2135, %v2324
    %v2347 = vadd.f32 %v2136, %v2344
    %v2348 = vxor.u32 %v2346, 2147483648
    %v2349 = vxor.u32 %v2347, 2147483648
    %v2350 = vmul.f32 %v2348, 1.442695
    %v2351 = vpow.pop %v2350
    %v2352 = vmul.f32 %v2349, 1.442695
    %v2353 = vpow.pop %v2352
    %v2354 = vadd.f32 %v2351, 1.0
    %v2355 = vadd.f32 %v2353, 1.0
    %v2356 = vrcp.pop %v2354
    %v2357 = vmul.f32 %v2354, %v2356
    %v2358 = vsub.f32 1.0, %v2357
    %v2359 = vmul.f32 %v2356, %v2358
    %v2360 = vadd.f32 %v2356, %v2359
    %vm2361 = vweird.f32 %v2354
    %vm2362 = vweird.f32 %v2356
    %vm2363 = vmor %vm2361, %vm2362
    %v2364 = vsel %vm2363, %v2356, %v2360
    %v2365 = vand.u32 2147483647, %v2354
    %vm2366 = vcmp.eq.f32.partialorder %v2365, 8.507059e+37
    %v2367 = vand.u32 %v2354, 2147483648
    %v2368 = vor.u32 1.1754944e-38, %v2367
    %v2369 = vsel %vm2366, %v2368, %v2364
    %v2370 = vmul.f32 1.0, %v2369
    %v2371 = vrcp.pop %v2355
    %v2372 = vmul.f32 %v2355, %v2371
    %v2373 = vsub.f32 1.0, %v2372
    %v2374 = vmul.f32 %v2371, %v2373
    %v2375 = vadd.f32 %v2371, %v2374
    %vm2376 = vweird.f32 %v2355
    %vm2377 = vweird.f32 %v2371
    %vm2378 = vmor %vm2376, %vm2377
    %v2379 = vsel %vm2378, %v2371, %v2375
    %v2380 = vand.u32 2147483647, %v2355
    %vm2381 = vcmp.eq.f32.partialorder %v2380, 8.507059e+37
    %v2382 = vand.u32 %v2355, 2147483648
    %v2383 = vor.u32 1.1754944e-38, %v2382
    %v2384 = vsel %vm2381, %v2383, %v2379
    %v2385 = vmul.f32 1.0, %v2384
    %v2386 = vtanh.pop %v2347
    %v2387 = vmul.f32 %v2370, %v2295
    %2389 = vrot.lane.b32.xlu0 %v2386, 64
    %v2390 = vpop.permute.xlu0 %2389
    %v2392 = vmul.f32 %v2370, %v2390
    %2394 = vrot.lane.b32.xlu0 %v2392, 64
    %v2395 = vpop.permute.xlu0 %2394
    %v2397 = vadd.f32 %v2387, %v2395
    %v2398 = vtanh.pop %v2397
    %2400 = vrot.lane.b32.xlu0 %v2398, 64
    %v2401 = vpop.permute.xlu0 %2400
    %v2403 = vmul.f32 %v2385, %v2401
    %2404 = vst.msk [vmem:[#allocation2 + $0x4] sm:$0x3] %vm299, %v2403
    %v2406 = vsel %vm197, %v2403, 0
    %2408 = vmatpush.msra.mxu0 0.0
    %2409 = vmatpush.msra.mxu0 0.0
    %2410 = vmatpush.msra.mxu0 0.0
    %2411 = vmatpush.msra.mxu0 0.0
    %2412 = vmatpush.msra.mxu0 0.0
    %2413 = vmatpush.msra.mxu0 0.0
    %2414 = vmatpush.msra.mxu0 0.0
    %2415 = vmatpush.msra.mxu0 0.0
    %2416 = vmatpush.msra.mxu0 %v2088
    %2417 = vmatpush.msra.mxu0 %v2086
    %2418 = vmatpush.msra.mxu0 %v2084
    %2419 = vmatpush.msra.mxu0 %v2082
    %2420 = vmatpush.msra.mxu0 %v2080
    %2421 = vmatpush.msra.mxu0 %v2078
    %2422 = vmatpush.msra.mxu0 %v2076
    %2423 = vmatpush.msra.mxu0 %v2074
    %2424 = vmatmul.f32.gmra.mxu0 %v2406
    %v2425 = vpop.f32.mrf.mxu0
    %v2426 = vadd.f32 0.0, %v2425
    %2427 = vdwg.mxu0
    %2428 = vmatpush.msra.mxu0 0.0
    %2429 = vmatpush.msra.mxu0 0.0
    %2430 = vmatpush.msra.mxu0 0.0
    %2431 = vmatpush.msra.mxu0 0.0
    %2432 = vmatpush.msra.mxu0 0.0
    %2433 = vmatpush.msra.mxu0 0.0
    %2434 = vmatpush.msra.mxu0 0.0
    %2435 = vmatpush.msra.mxu0 0.0
    %2436 = vmatpush.msra.mxu0 %v2089
    %2437 = vmatpush.msra.mxu0 %v2087
    %2438 = vmatpush.msra.mxu0 %v2085
    %2439 = vmatpush.msra.mxu0 %v2083
    %2440 = vmatpush.msra.mxu0 %v2081
    %2441 = vmatpush.msra.mxu0 %v2079
    %2442 = vmatpush.msra.mxu0 %v2077
    %2443 = vmatpush.msra.mxu0 %v2075
    %2444 = vmatmul.f32.gmra.mxu0 %v2406
    %v2445 = vpop.f32.mrf.mxu0
    %v2446 = vadd.f32 0.0, %v2445
    %2447 = vdwg.mxu0
    %v2448 = vadd.f32 %v2135, %v2426
    %v2449 = vadd.f32 %v2136, %v2446
    %v2450 = vxor.u32 %v2448, 2147483648
    %v2451 = vxor.u32 %v2449, 2147483648
    %v2452 = vmul.f32 %v2450, 1.442695
    %v2453 = vpow.pop %v2452
    %v2454 = vmul.f32 %v2451, 1.442695
    %v2455 = vpow.pop %v2454
    %v2456 = vadd.f32 %v2453, 1.0
    %v2457 = vadd.f32 %v2455, 1.0
    %v2458 = vrcp.pop %v2456
    %v2459 = vmul.f32 %v2456, %v2458
    %v2460 = vsub.f32 1.0, %v2459
    %v2461 = vmul.f32 %v2458, %v2460
    %v2462 = vadd.f32 %v2458, %v2461
    %vm2463 = vweird.f32 %v2456
    %vm2464 = vweird.f32 %v2458
    %vm2465 = vmor %vm2463, %vm2464
    %v2466 = vsel %vm2465, %v2458, %v2462
    %v2467 = vand.u32 2147483647, %v2456
    %vm2468 = vcmp.eq.f32.partialorder %v2467, 8.507059e+37
    %v2469 = vand.u32 %v2456, 2147483648
    %v2470 = vor.u32 1.1754944e-38, %v2469
    %v2471 = vsel %vm2468, %v2470, %v2466
    %v2472 = vmul.f32 1.0, %v2471
    %v2473 = vrcp.pop %v2457
    %v2474 = vmul.f32 %v2457, %v2473
    %v2475 = vsub.f32 1.0, %v2474
    %v2476 = vmul.f32 %v2473, %v2475
    %v2477 = vadd.f32 %v2473, %v2476
    %vm2478 = vweird.f32 %v2457
    %vm2479 = vweird.f32 %v2473
    %vm2480 = vmor %vm2478, %vm2479
    %v2481 = vsel %vm2480, %v2473, %v2477
    %v2482 = vand.u32 2147483647, %v2457
    %vm2483 = vcmp.eq.f32.partialorder %v2482, 8.507059e+37
    %v2484 = vand.u32 %v2457, 2147483648
    %v2485 = vor.u32 1.1754944e-38, %v2484
    %v2486 = vsel %vm2483, %v2485, %v2481
    %v2487 = vmul.f32 1.0, %v2486
    %v2488 = vtanh.pop %v2449
    %v2489 = vmul.f32 %v2472, %v2397
    %2491 = vrot.lane.b32.xlu0 %v2488, 64
    %v2492 = vpop.permute.xlu0 %2491
    %v2494 = vmul.f32 %v2472, %v2492
    %2496 = vrot.lane.b32.xlu0 %v2494, 64
    %v2497 = vpop.permute.xlu0 %2496
    %v2499 = vadd.f32 %v2489, %v2497
    %v2500 = vtanh.pop %v2499
    %2502 = vrot.lane.b32.xlu0 %v2500, 64
    %v2503 = vpop.permute.xlu0 %2502
    %v2505 = vmul.f32 %v2487, %v2503
    %2506 = vst.msk [vmem:[#allocation2 + $0x6] sm:$0x3] %vm299, %v2505
    %v2508 = vsel %vm197, %v2505, 0
    %2510 = vmatpush.msra.mxu0 0.0
    %2511 = vmatpush.msra.mxu0 0.0
    %2512 = vmatpush.msra.mxu0 0.0
    %2513 = vmatpush.msra.mxu0 0.0
    %2514 = vmatpush.msra.mxu0 0.0
    %2515 = vmatpush.msra.mxu0 0.0
    %2516 = vmatpush.msra.mxu0 0.0
    %2517 = vmatpush.msra.mxu0 0.0
    %2518 = vmatpush.msra.mxu0 %v2088
    %2519 = vmatpush.msra.mxu0 %v2086
    %2520 = vmatpush.msra.mxu0 %v2084
    %2521 = vmatpush.msra.mxu0 %v2082
    %2522 = vmatpush.msra.mxu0 %v2080
    %2523 = vmatpush.msra.mxu0 %v2078
    %2524 = vmatpush.msra.mxu0 %v2076
    %2525 = vmatpush.msra.mxu0 %v2074
    %2526 = vmatmul.f32.gmra.mxu0 %v2508
    %v2527 = vpop.f32.mrf.mxu0
    %v2528 = vadd.f32 0.0, %v2527
    %2529 = vdwg.mxu0
    %2530 = vmatpush.msra.mxu0 0.0
    %2531 = vmatpush.msra.mxu0 0.0
    %2532 = vmatpush.msra.mxu0 0.0
    %2533 = vmatpush.msra.mxu0 0.0
    %2534 = vmatpush.msra.mxu0 0.0
    %2535 = vmatpush.msra.mxu0 0.0
    %2536 = vmatpush.msra.mxu0 0.0
    %2537 = vmatpush.msra.mxu0 0.0
    %2538 = vmatpush.msra.mxu0 %v2089
    %2539 = vmatpush.msra.mxu0 %v2087
    %2540 = vmatpush.msra.mxu0 %v2085
    %2541 = vmatpush.msra.mxu0 %v2083
    %2542 = vmatpush.msra.mxu0 %v2081
    %2543 = vmatpush.msra.mxu0 %v2079
    %2544 = vmatpush.msra.mxu0 %v2077
    %2545 = vmatpush.msra.mxu0 %v2075
    %2546 = vmatmul.f32.gmra.mxu0 %v2508
    %v2547 = vpop.f32.mrf.mxu0
    %v2548 = vadd.f32 0.0, %v2547
    %2549 = vdwg.mxu0
    %v2550 = vadd.f32 %v2135, %v2528
    %v2551 = vadd.f32 %v2136, %v2548
    %v2552 = vxor.u32 %v2550, 2147483648
    %v2553 = vxor.u32 %v2551, 2147483648
    %v2554 = vmul.f32 %v2552, 1.442695
    %v2555 = vpow.pop %v2554
    %v2556 = vmul.f32 %v2553, 1.442695
    %v2557 = vpow.pop %v2556
    %v2558 = vadd.f32 %v2555, 1.0
    %v2559 = vadd.f32 %v2557, 1.0
    %v2560 = vrcp.pop %v2558
    %v2561 = vmul.f32 %v2558, %v2560
    %v2562 = vsub.f32 1.0, %v2561
    %v2563 = vmul.f32 %v2560, %v2562
    %v2564 = vadd.f32 %v2560, %v2563
    %vm2565 = vweird.f32 %v2558
    %vm2566 = vweird.f32 %v2560
    %vm2567 = vmor %vm2565, %vm2566
    %v2568 = vsel %vm2567, %v2560, %v2564
    %v2569 = vand.u32 2147483647, %v2558
    %vm2570 = vcmp.eq.f32.partialorder %v2569, 8.507059e+37
    %v2571 = vand.u32 %v2558, 2147483648
    %v2572 = vor.u32 1.1754944e-38, %v2571
    %v2573 = vsel %vm2570, %v2572, %v2568
    %v2574 = vmul.f32 1.0, %v2573
    %v2575 = vrcp.pop %v2559
    %v2576 = vmul.f32 %v2559, %v2575
    %v2577 = vsub.f32 1.0, %v2576
    %v2578 = vmul.f32 %v2575, %v2577
    %v2579 = vadd.f32 %v2575, %v2578
    %vm2580 = vweird.f32 %v2559
    %vm2581 = vweird.f32 %v2575
    %vm2582 = vmor %vm2580, %vm2581
    %v2583 = vsel %vm2582, %v2575, %v2579
    %v2584 = vand.u32 2147483647, %v2559
    %vm2585 = vcmp.eq.f32.partialorder %v2584, 8.507059e+37
    %v2586 = vand.u32 %v2559, 2147483648
    %v2587 = vor.u32 1.1754944e-38, %v2586
    %v2588 = vsel %vm2585, %v2587, %v2583
    %v2589 = vmul.f32 1.0, %v2588
    %v2590 = vtanh.pop %v2551
    %v2591 = vmul.f32 %v2574, %v2499
    %2593 = vrot.lane.b32.xlu0 %v2590, 64
    %v2594 = vpop.permute.xlu0 %2593
    %v2596 = vmul.f32 %v2574, %v2594
    %2598 = vrot.lane.b32.xlu0 %v2596, 64
    %v2599 = vpop.permute.xlu0 %2598
    %v2601 = vadd.f32 %v2591, %v2599
    %v2602 = vtanh.pop %v2601
    %2604 = vrot.lane.b32.xlu0 %v2602, 64
    %v2605 = vpop.permute.xlu0 %2604
    %v2607 = vmul.f32 %v2589, %v2605
    %2608 = vst.msk [vmem:[#allocation2 + $0x8] sm:$0x3] %vm299, %v2607
    %v2610 = vsel %vm197, %v2607, 0
    %2612 = vmatpush.msra.mxu0 0.0
    %2613 = vmatpush.msra.mxu0 0.0
    %2614 = vmatpush.msra.mxu0 0.0
    %2615 = vmatpush.msra.mxu0 0.0
    %2616 = vmatpush.msra.mxu0 0.0
    %2617 = vmatpush.msra.mxu0 0.0
    %2618 = vmatpush.msra.mxu0 0.0
    %2619 = vmatpush.msra.mxu0 0.0
    %2620 = vmatpush.msra.mxu0 %v2088
    %2621 = vmatpush.msra.mxu0 %v2086
    %2622 = vmatpush.msra.mxu0 %v2084
    %2623 = vmatpush.msra.mxu0 %v2082
    %2624 = vmatpush.msra.mxu0 %v2080
    %2625 = vmatpush.msra.mxu0 %v2078
    %2626 = vmatpush.msra.mxu0 %v2076
    %2627 = vmatpush.msra.mxu0 %v2074
    %2628 = vmatmul.f32.gmra.mxu0 %v2610
    %v2629 = vpop.f32.mrf.mxu0
    %v2630 = vadd.f32 0.0, %v2629
    %2631 = vdwg.mxu0
    %2632 = vmatpush.msra.mxu0 0.0
    %2633 = vmatpush.msra.mxu0 0.0
    %2634 = vmatpush.msra.mxu0 0.0
    %2635 = vmatpush.msra.mxu0 0.0
    %2636 = vmatpush.msra.mxu0 0.0
    %2637 = vmatpush.msra.mxu0 0.0
    %2638 = vmatpush.msra.mxu0 0.0
    %2639 = vmatpush.msra.mxu0 0.0
    %2640 = vmatpush.msra.mxu0 %v2089
    %2641 = vmatpush.msra.mxu0 %v2087
    %2642 = vmatpush.msra.mxu0 %v2085
    %2643 = vmatpush.msra.mxu0 %v2083
    %2644 = vmatpush.msra.mxu0 %v2081
    %2645 = vmatpush.msra.mxu0 %v2079
    %2646 = vmatpush.msra.mxu0 %v2077
    %2647 = vmatpush.msra.mxu0 %v2075
    %2648 = vmatmul.f32.gmra.mxu0 %v2610
    %v2649 = vpop.f32.mrf.mxu0
    %v2650 = vadd.f32 0.0, %v2649
    %2651 = vdwg.mxu0
    %v2652 = vadd.f32 %v2135, %v2630
    %v2653 = vadd.f32 %v2136, %v2650
    %v2654 = vxor.u32 %v2652, 2147483648
    %v2655 = vxor.u32 %v2653, 2147483648
    %v2656 = vmul.f32 %v2654, 1.442695
    %v2657 = vpow.pop %v2656
    %v2658 = vmul.f32 %v2655, 1.442695
    %v2659 = vpow.pop %v2658
    %v2660 = vadd.f32 %v2657, 1.0
    %v2661 = vadd.f32 %v2659, 1.0
    %v2662 = vrcp.pop %v2660
    %v2663 = vmul.f32 %v2660, %v2662
    %v2664 = vsub.f32 1.0, %v2663
    %v2665 = vmul.f32 %v2662, %v2664
    %v2666 = vadd.f32 %v2662, %v2665
    %vm2667 = vweird.f32 %v2660
    %vm2668 = vweird.f32 %v2662
    %vm2669 = vmor %vm2667, %vm2668
    %v2670 = vsel %vm2669, %v2662, %v2666
    %v2671 = vand.u32 2147483647, %v2660
    %vm2672 = vcmp.eq.f32.partialorder %v2671, 8.507059e+37
    %v2673 = vand.u32 %v2660, 2147483648
    %v2674 = vor.u32 1.1754944e-38, %v2673
    %v2675 = vsel %vm2672, %v2674, %v2670
    %v2676 = vmul.f32 1.0, %v2675
    %v2677 = vrcp.pop %v2661
    %v2678 = vmul.f32 %v2661, %v2677
    %v2679 = vsub.f32 1.0, %v2678
    %v2680 = vmul.f32 %v2677, %v2679
    %v2681 = vadd.f32 %v2677, %v2680
    %vm2682 = vweird.f32 %v2661
    %vm2683 = vweird.f32 %v2677
    %vm2684 = vmor %vm2682, %vm2683
    %v2685 = vsel %vm2684, %v2677, %v2681
    %v2686 = vand.u32 2147483647, %v2661
    %vm2687 = vcmp.eq.f32.partialorder %v2686, 8.507059e+37
    %v2688 = vand.u32 %v2661, 2147483648
    %v2689 = vor.u32 1.1754944e-38, %v2688
    %v2690 = vsel %vm2687, %v2689, %v2685
    %v2691 = vmul.f32 1.0, %v2690
    %v2692 = vtanh.pop %v2653
    %v2693 = vmul.f32 %v2676, %v2601
    %2695 = vrot.lane.b32.xlu0 %v2692, 64
    %v2696 = vpop.permute.xlu0 %2695
    %v2698 = vmul.f32 %v2676, %v2696
    %2700 = vrot.lane.b32.xlu0 %v2698, 64
    %v2701 = vpop.permute.xlu0 %2700
    %v2703 = vadd.f32 %v2693, %v2701
    %v2704 = vtanh.pop %v2703
    %2706 = vrot.lane.b32.xlu0 %v2704, 64
    %v2707 = vpop.permute.xlu0 %2706
    %v2709 = vmul.f32 %v2691, %v2707
    %2710 = vst.msk [vmem:[#allocation2 + $0xa] sm:$0x3] %vm299, %v2709
    %v2712 = vsel %vm197, %v2709, 0
    %2714 = vmatpush.msra.mxu0 0.0
    %2715 = vmatpush.msra.mxu0 0.0
    %2716 = vmatpush.msra.mxu0 0.0
    %2717 = vmatpush.msra.mxu0 0.0
    %2718 = vmatpush.msra.mxu0 0.0
    %2719 = vmatpush.msra.mxu0 0.0
    %2720 = vmatpush.msra.mxu0 0.0
    %2721 = vmatpush.msra.mxu0 0.0
    %2722 = vmatpush.msra.mxu0 %v2088
    %2723 = vmatpush.msra.mxu0 %v2086
    %2724 = vmatpush.msra.mxu0 %v2084
    %2725 = vmatpush.msra.mxu0 %v2082
    %2726 = vmatpush.msra.mxu0 %v2080
    %2727 = vmatpush.msra.mxu0 %v2078
    %2728 = vmatpush.msra.mxu0 %v2076
    %2729 = vmatpush.msra.mxu0 %v2074
    %2730 = vmatmul.f32.gmra.mxu0 %v2712
    %v2731 = vpop.f32.mrf.mxu0
    %v2732 = vadd.f32 0.0, %v2731
    %2733 = vdwg.mxu0
    %2734 = vmatpush.msra.mxu0 0.0
    %2735 = vmatpush.msra.mxu0 0.0
    %2736 = vmatpush.msra.mxu0 0.0
    %2737 = vmatpush.msra.mxu0 0.0
    %2738 = vmatpush.msra.mxu0 0.0
    %2739 = vmatpush.msra.mxu0 0.0
    %2740 = vmatpush.msra.mxu0 0.0
    %2741 = vmatpush.msra.mxu0 0.0
    %2742 = vmatpush.msra.mxu0 %v2089
    %2743 = vmatpush.msra.mxu0 %v2087
    %2744 = vmatpush.msra.mxu0 %v2085
    %2745 = vmatpush.msra.mxu0 %v2083
    %2746 = vmatpush.msra.mxu0 %v2081
    %2747 = vmatpush.msra.mxu0 %v2079
    %2748 = vmatpush.msra.mxu0 %v2077
    %2749 = vmatpush.msra.mxu0 %v2075
    %2750 = vmatmul.f32.gmra.mxu0 %v2712
    %v2751 = vpop.f32.mrf.mxu0
    %v2752 = vadd.f32 0.0, %v2751
    %2753 = vdwg.mxu0
    %v2754 = vadd.f32 %v2135, %v2732
    %v2755 = vadd.f32 %v2136, %v2752
    %v2756 = vxor.u32 %v2754, 2147483648
    %v2757 = vxor.u32 %v2755, 2147483648
    %v2758 = vmul.f32 %v2756, 1.442695
    %v2759 = vpow.pop %v2758
    %v2760 = vmul.f32 %v2757, 1.442695
    %v2761 = vpow.pop %v2760
    %v2762 = vadd.f32 %v2759, 1.0
    %v2763 = vadd.f32 %v2761, 1.0
    %v2764 = vrcp.pop %v2762
    %v2765 = vmul.f32 %v2762, %v2764
    %v2766 = vsub.f32 1.0, %v2765
    %v2767 = vmul.f32 %v2764, %v2766
    %v2768 = vadd.f32 %v2764, %v2767
    %vm2769 = vweird.f32 %v2762
    %vm2770 = vweird.f32 %v2764
    %vm2771 = vmor %vm2769, %vm2770
    %v2772 = vsel %vm2771, %v2764, %v2768
    %v2773 = vand.u32 2147483647, %v2762
    %vm2774 = vcmp.eq.f32.partialorder %v2773, 8.507059e+37
    %v2775 = vand.u32 %v2762, 2147483648
    %v2776 = vor.u32 1.1754944e-38, %v2775
    %v2777 = vsel %vm2774, %v2776, %v2772
    %v2778 = vmul.f32 1.0, %v2777
    %v2779 = vrcp.pop %v2763
    %v2780 = vmul.f32 %v2763, %v2779
    %v2781 = vsub.f32 1.0, %v2780
    %v2782 = vmul.f32 %v2779, %v2781
    %v2783 = vadd.f32 %v2779, %v2782
    %vm2784 = vweird.f32 %v2763
    %vm2785 = vweird.f32 %v2779
    %vm2786 = vmor %vm2784, %vm2785
    %v2787 = vsel %vm2786, %v2779, %v2783
    %v2788 = vand.u32 2147483647, %v2763
    %vm2789 = vcmp.eq.f32.partialorder %v2788, 8.507059e+37
    %v2790 = vand.u32 %v2763, 2147483648
    %v2791 = vor.u32 1.1754944e-38, %v2790
    %v2792 = vsel %vm2789, %v2791, %v2787
    %v2793 = vmul.f32 1.0, %v2792
    %v2794 = vtanh.pop %v2755
    %v2795 = vmul.f32 %v2778, %v2703
    %2797 = vrot.lane.b32.xlu0 %v2794, 64
    %v2798 = vpop.permute.xlu0 %2797
    %v2800 = vmul.f32 %v2778, %v2798
    %2802 = vrot.lane.b32.xlu0 %v2800, 64
    %v2803 = vpop.permute.xlu0 %2802
    %v2805 = vadd.f32 %v2795, %v2803
    %v2806 = vtanh.pop %v2805
    %2808 = vrot.lane.b32.xlu0 %v2806, 64
    %v2809 = vpop.permute.xlu0 %2808
    %v2811 = vmul.f32 %v2793, %v2809
    %2812 = vst.msk [vmem:[#allocation2 + $0xc] sm:$0x3] %vm299, %v2811
    %v2814 = vsel %vm197, %v2811, 0
    %2816 = vmatpush.msra.mxu0 0.0
    %2817 = vmatpush.msra.mxu0 0.0
    %2818 = vmatpush.msra.mxu0 0.0
    %2819 = vmatpush.msra.mxu0 0.0
    %2820 = vmatpush.msra.mxu0 0.0
    %2821 = vmatpush.msra.mxu0 0.0
    %2822 = vmatpush.msra.mxu0 0.0
    %2823 = vmatpush.msra.mxu0 0.0
    %2824 = vmatpush.msra.mxu0 %v2088
    %2825 = vmatpush.msra.mxu0 %v2086
    %2826 = vmatpush.msra.mxu0 %v2084
    %2827 = vmatpush.msra.mxu0 %v2082
    %2828 = vmatpush.msra.mxu0 %v2080
    %2829 = vmatpush.msra.mxu0 %v2078
    %2830 = vmatpush.msra.mxu0 %v2076
    %2831 = vmatpush.msra.mxu0 %v2074
    %2832 = vmatmul.f32.gmra.mxu0 %v2814
    %v2833 = vpop.f32.mrf.mxu0
    %v2834 = vadd.f32 0.0, %v2833
    %2835 = vdwg.mxu0
    %2836 = vmatpush.msra.mxu0 0.0
    %2837 = vmatpush.msra.mxu0 0.0
    %2838 = vmatpush.msra.mxu0 0.0
    %2839 = vmatpush.msra.mxu0 0.0
    %2840 = vmatpush.msra.mxu0 0.0
    %2841 = vmatpush.msra.mxu0 0.0
    %2842 = vmatpush.msra.mxu0 0.0
    %2843 = vmatpush.msra.mxu0 0.0
    %2844 = vmatpush.msra.mxu0 %v2089
    %2845 = vmatpush.msra.mxu0 %v2087
    %2846 = vmatpush.msra.mxu0 %v2085
    %2847 = vmatpush.msra.mxu0 %v2083
    %2848 = vmatpush.msra.mxu0 %v2081
    %2849 = vmatpush.msra.mxu0 %v2079
    %2850 = vmatpush.msra.mxu0 %v2077
    %2851 = vmatpush.msra.mxu0 %v2075
    %2852 = vmatmul.f32.gmra.mxu0 %v2814
    %v2853 = vpop.f32.mrf.mxu0
    %v2854 = vadd.f32 0.0, %v2853
    %2855 = vdwg.mxu0
    %v2856 = vadd.f32 %v2135, %v2834
    %v2857 = vadd.f32 %v2136, %v2854
    %v2858 = vxor.u32 %v2856, 2147483648
    %v2859 = vxor.u32 %v2857, 2147483648
    %v2860 = vmul.f32 %v2858, 1.442695
    %v2861 = vpow.pop %v2860
    %v2862 = vmul.f32 %v2859, 1.442695
    %v2863 = vpow.pop %v2862
    %v2864 = vadd.f32 %v2861, 1.0
    %v2865 = vadd.f32 %v2863, 1.0
    %v2866 = vrcp.pop %v2864
    %v2867 = vmul.f32 %v2864, %v2866
    %v2868 = vsub.f32 1.0, %v2867
    %v2869 = vmul.f32 %v2866, %v2868
    %v2870 = vadd.f32 %v2866, %v2869
    %vm2871 = vweird.f32 %v2864
    %vm2872 = vweird.f32 %v2866
    %vm2873 = vmor %vm2871, %vm2872
    %v2874 = vsel %vm2873, %v2866, %v2870
    %v2875 = vand.u32 2147483647, %v2864
    %vm2876 = vcmp.eq.f32.partialorder %v2875, 8.507059e+37
    %v2877 = vand.u32 %v2864, 2147483648
    %v2878 = vor.u32 1.1754944e-38, %v2877
    %v2879 = vsel %vm2876, %v2878, %v2874
    %v2880 = vmul.f32 1.0, %v2879
    %v2881 = vrcp.pop %v2865
    %v2882 = vmul.f32 %v2865, %v2881
    %v2883 = vsub.f32 1.0, %v2882
    %v2884 = vmul.f32 %v2881, %v2883
    %v2885 = vadd.f32 %v2881, %v2884
    %vm2886 = vweird.f32 %v2865
    %vm2887 = vweird.f32 %v2881
    %vm2888 = vmor %vm2886, %vm2887
    %v2889 = vsel %vm2888, %v2881, %v2885
    %v2890 = vand.u32 2147483647, %v2865
    %vm2891 = vcmp.eq.f32.partialorder %v2890, 8.507059e+37
    %v2892 = vand.u32 %v2865, 2147483648
    %v2893 = vor.u32 1.1754944e-38, %v2892
    %v2894 = vsel %vm2891, %v2893, %v2889
    %v2895 = vmul.f32 1.0, %v2894
    %v2896 = vtanh.pop %v2857
    %v2897 = vmul.f32 %v2880, %v2805
    %2899 = vrot.lane.b32.xlu0 %v2896, 64
    %v2900 = vpop.permute.xlu0 %2899
    %v2902 = vmul.f32 %v2880, %v2900
    %2904 = vrot.lane.b32.xlu0 %v2902, 64
    %v2905 = vpop.permute.xlu0 %2904
    %v2907 = vadd.f32 %v2897, %v2905
    %v2908 = vtanh.pop %v2907
    %2910 = vrot.lane.b32.xlu0 %v2908, 64
    %v2911 = vpop.permute.xlu0 %2910
    %v2913 = vmul.f32 %v2895, %v2911
    %2914 = vst.msk [vmem:[#allocation2 + $0xe] sm:$0x3] %vm299, %v2913
    %v2915 = vld [vmem:[#allocation2] sm:$0xff]
    %v2916 = vld [vmem:[#allocation2 + $0x8] sm:$0xff]
    %v2917 = vld [vmem:[#allocation12] sm:$0xff]
    %v2918 = vld [vmem:[#allocation12 + $0x8] sm:$0xff]
    %v2919 = vld [vmem:[#allocation12 + $0x10] sm:$0xff]
    %v2920 = vld [vmem:[#allocation12 + $0x18] sm:$0xff]
    %v2921 = vld [vmem:[#allocation12 + $0x20] sm:$0xff]
    %v2922 = vld [vmem:[#allocation12 + $0x28] sm:$0xff]
    %v2923 = vld [vmem:[#allocation12 + $0x30] sm:$0xff]
    %v2924 = vld [vmem:[#allocation12 + $0x38] sm:$0xff]
    %v2925 = vld [vmem:[#allocation12 + $0x40] sm:$0xff]
    %v2926 = vld [vmem:[#allocation12 + $0x48] sm:$0xff]
    %v2927 = vld [vmem:[#allocation12 + $0x50] sm:$0xff]
    %v2928 = vld [vmem:[#allocation12 + $0x58] sm:$0xff]
    %v2929 = vld [vmem:[#allocation12 + $0x60] sm:$0xff]
    %v2930 = vld [vmem:[#allocation12 + $0x68] sm:$0xff]
    %v2931 = vld [vmem:[#allocation12 + $0x70] sm:$0xff]
    %v2932 = vld [vmem:[#allocation12 + $0x78] sm:$0xff]
    %v2933 = vld [vmem:[%s11] sm:$0x3]
    %v2935 = vperm.slane %v2933, 0
    %v2936 = vperm.slane %v2933, 1
    %v2940 = vsel %vm197, %v2915, 0
    %v2943 = vsel %vm197, %v2916, 0
    %2945 = vmatpush.msra.mxu0 0.0
    %2946 = vmatpush.msra.mxu0 0.0
    %2947 = vmatpush.msra.mxu0 0.0
    %2948 = vmatpush.msra.mxu0 0.0
    %2949 = vmatpush.msra.mxu0 0.0
    %2950 = vmatpush.msra.mxu0 0.0
    %2951 = vmatpush.msra.mxu0 0.0
    %2952 = vmatpush.msra.mxu0 0.0
    %2953 = vmatpush.msra.mxu0 %v2931
    %2954 = vmatpush.msra.mxu0 %v2929
    %2955 = vmatpush.msra.mxu0 %v2927
    %2956 = vmatpush.msra.mxu0 %v2925
    %2957 = vmatpush.msra.mxu0 %v2923
    %2958 = vmatpush.msra.mxu0 %v2921
    %2959 = vmatpush.msra.mxu0 %v2919
    %2960 = vmatpush.msra.mxu0 %v2917
    %2961 = vmatmul.f32.gmra.mxu0 %v2940
    %v2962 = vpop.f32.mrf.mxu0
    %v2963 = vadd.f32 %v2935, %v2962
    %2964 = vmatmul.f32.gmra.mxu0 %v2943
    %v2965 = vpop.f32.mrf.mxu0
    %v2966 = vadd.f32 %v2935, %v2965
    %2967 = vdwg.mxu0
    %2968 = vmatpush.msra.mxu0 0.0
    %2969 = vmatpush.msra.mxu0 0.0
    %2970 = vmatpush.msra.mxu0 0.0
    %2971 = vmatpush.msra.mxu0 0.0
    %2972 = vmatpush.msra.mxu0 0.0
    %2973 = vmatpush.msra.mxu0 0.0
    %2974 = vmatpush.msra.mxu0 0.0
    %2975 = vmatpush.msra.mxu0 0.0
    %2976 = vmatpush.msra.mxu0 %v2932
    %2977 = vmatpush.msra.mxu0 %v2930
    %2978 = vmatpush.msra.mxu0 %v2928
    %2979 = vmatpush.msra.mxu0 %v2926
    %2980 = vmatpush.msra.mxu0 %v2924
    %2981 = vmatpush.msra.mxu0 %v2922
    %2982 = vmatpush.msra.mxu0 %v2920
    %2983 = vmatpush.msra.mxu0 %v2918
    %2984 = vmatmul.f32.gmra.mxu0 %v2940
    %v2985 = vpop.f32.mrf.mxu0
    %v2986 = vadd.f32 %v2936, %v2985
    %2987 = vmatmul.f32.gmra.mxu0 %v2943
    %v2988 = vpop.f32.mrf.mxu0
    %v2989 = vadd.f32 %v2936, %v2988
    %2990 = vdwg.mxu0
    %2991 = vst [vmem:[#allocation3] sm:$0xff] %v2963
    %2992 = vst [vmem:[#allocation3 + $0x8] sm:$0xff] %v2986
    %2993 = vst [vmem:[#allocation3 + $0x10] sm:$0xff] %v2966
    %2994 = vst [vmem:[#allocation3 + $0x18] sm:$0xff] %v2989
    %v2995 = vld [vmem:[#allocation13] sm:$0xff]
    %v2996 = vld [vmem:[#allocation13 + $0x8] sm:$0xff]
    %v2997 = vld [vmem:[#allocation13 + $0x10] sm:$0xff]
    %v2998 = vld [vmem:[#allocation13 + $0x18] sm:$0xff]
    %v2999 = vld [vmem:[#allocation13 + $0x20] sm:$0xff]
    %v3000 = vld [vmem:[#allocation13 + $0x28] sm:$0xff]
    %v3001 = vld [vmem:[#allocation13 + $0x30] sm:$0xff]
    %v3002 = vld [vmem:[#allocation13 + $0x38] sm:$0xff]
    %v3003 = vld [vmem:[#allocation13 + $0x40] sm:$0xff]
    %v3004 = vld [vmem:[#allocation13 + $0x48] sm:$0xff]
    %v3005 = vld [vmem:[#allocation13 + $0x50] sm:$0xff]
    %v3006 = vld [vmem:[#allocation13 + $0x58] sm:$0xff]
    %v3007 = vld [vmem:[#allocation13 + $0x60] sm:$0xff]
    %v3008 = vld [vmem:[#allocation13 + $0x68] sm:$0xff]
    %v3009 = vld [vmem:[#allocation13 + $0x70] sm:$0xff]
    %v3010 = vld [vmem:[#allocation13 + $0x78] sm:$0xff]
    %v3011 = vld [vmem:[#allocation3] sm:$0x3]
    %v3012 = vld [vmem:[#allocation3 + $0x8] sm:$0x3]
    %v3014 = vrot.slane %v2072, 6
    %v3015 = vsel %vm197, %v3014, 0
    %3017 = vmatpush.msra.mxu0 0.0
    %3018 = vmatpush.msra.mxu0 0.0
    %3019 = vmatpush.msra.mxu0 0.0
    %3020 = vmatpush.msra.mxu0 0.0
    %3021 = vmatpush.msra.mxu0 0.0
    %3022 = vmatpush.msra.mxu0 0.0
    %3023 = vmatpush.msra.mxu0 0.0
    %3024 = vmatpush.msra.mxu0 0.0
    %3025 = vmatpush.msra.mxu0 %v3009
    %3026 = vmatpush.msra.mxu0 %v3007
    %3027 = vmatpush.msra.mxu0 %v3005
    %3028 = vmatpush.msra.mxu0 %v3003
    %3029 = vmatpush.msra.mxu0 %v3001
    %3030 = vmatpush.msra.mxu0 %v2999
    %3031 = vmatpush.msra.mxu0 %v2997
    %3032 = vmatpush.msra.mxu0 %v2995
    %3033 = vmatmul.f32.gmra.mxu0 %v3015
    %v3034 = vpop.f32.mrf.mxu0
    %v3035 = vadd.f32 0.0, %v3034
    %3036 = vdwg.mxu0
    %3037 = vmatpush.msra.mxu0 0.0
    %3038 = vmatpush.msra.mxu0 0.0
    %3039 = vmatpush.msra.mxu0 0.0
    %3040 = vmatpush.msra.mxu0 0.0
    %3041 = vmatpush.msra.mxu0 0.0
    %3042 = vmatpush.msra.mxu0 0.0
    %3043 = vmatpush.msra.mxu0 0.0
    %3044 = vmatpush.msra.mxu0 0.0
    %3045 = vmatpush.msra.mxu0 %v3010
    %3046 = vmatpush.msra.mxu0 %v3008
    %3047 = vmatpush.msra.mxu0 %v3006
    %3048 = vmatpush.msra.mxu0 %v3004
    %3049 = vmatpush.msra.mxu0 %v3002
    %3050 = vmatpush.msra.mxu0 %v3000
    %3051 = vmatpush.msra.mxu0 %v2998
    %3052 = vmatpush.msra.mxu0 %v2996
    %3053 = vmatmul.f32.gmra.mxu0 %v3015
    %v3054 = vpop.f32.mrf.mxu0
    %v3055 = vadd.f32 0.0, %v3054
    %3056 = vdwg.mxu0
    %v3057 = vadd.f32 %v3011, %v3035
    %v3058 = vadd.f32 %v3012, %v3055
    %v3059 = vxor.u32 %v3057, 2147483648
    %v3060 = vxor.u32 %v3058, 2147483648
    %v3061 = vmul.f32 %v3059, 1.442695
    %v3062 = vpow.pop %v3061
    %v3063 = vmul.f32 %v3060, 1.442695
    %v3064 = vpow.pop %v3063
    %v3065 = vadd.f32 %v3062, 1.0
    %v3066 = vadd.f32 %v3064, 1.0
    %v3067 = vrcp.pop %v3065
    %v3068 = vmul.f32 %v3065, %v3067
    %v3069 = vsub.f32 1.0, %v3068
    %v3070 = vmul.f32 %v3067, %v3069
    %v3071 = vadd.f32 %v3067, %v3070
    %vm3072 = vweird.f32 %v3065
    %vm3073 = vweird.f32 %v3067
    %vm3074 = vmor %vm3072, %vm3073
    %v3075 = vsel %vm3074, %v3067, %v3071
    %v3076 = vand.u32 2147483647, %v3065
    %vm3077 = vcmp.eq.f32.partialorder %v3076, 8.507059e+37
    %v3078 = vand.u32 %v3065, 2147483648
    %v3079 = vor.u32 1.1754944e-38, %v3078
    %v3080 = vsel %vm3077, %v3079, %v3075
    %v3081 = vmul.f32 1.0, %v3080
    %v3082 = vrcp.pop %v3066
    %v3083 = vmul.f32 %v3066, %v3082
    %v3084 = vsub.f32 1.0, %v3083
    %v3085 = vmul.f32 %v3082, %v3084
    %v3086 = vadd.f32 %v3082, %v3085
    %vm3087 = vweird.f32 %v3066
    %vm3088 = vweird.f32 %v3082
    %vm3089 = vmor %vm3087, %vm3088
    %v3090 = vsel %vm3089, %v3082, %v3086
    %v3091 = vand.u32 2147483647, %v3066
    %vm3092 = vcmp.eq.f32.partialorder %v3091, 8.507059e+37
    %v3093 = vand.u32 %v3066, 2147483648
    %v3094 = vor.u32 1.1754944e-38, %v3093
    %v3095 = vsel %vm3092, %v3094, %v3090
    %v3096 = vmul.f32 1.0, %v3095
    %v3097 = vtanh.pop %v3058
    %v3099 = vrot.slane %v2066, 6
    %v3101 = vmul.f32 %v3081, %v3099
    %3103 = vrot.lane.b32.xlu0 %v3097, 64
    %v3104 = vpop.permute.xlu0 %3103
    %v3106 = vmul.f32 %v3081, %v3104
    %3108 = vrot.lane.b32.xlu0 %v3106, 64
    %v3109 = vpop.permute.xlu0 %3108
    %v3111 = vadd.f32 %v3101, %v3109
    %v3112 = vtanh.pop %v3111
    %3114 = vrot.lane.b32.xlu0 %v3112, 64
    %v3115 = vpop.permute.xlu0 %3114
    %v3117 = vmul.f32 %v3096, %v3115
    %3118 = vst.msk [vmem:[#allocation2] sm:$0x3] %vm299, %v3117
    %v3119 = vld [vmem:[#allocation3] sm:$0xc]
    %v3120 = vld [vmem:[#allocation3 + $0x8] sm:$0xc]
    %v3122 = vsel %vm197, %v3117, 0
    %3124 = vmatpush.msra.mxu0 0.0
    %3125 = vmatpush.msra.mxu0 0.0
    %3126 = vmatpush.msra.mxu0 0.0
    %3127 = vmatpush.msra.mxu0 0.0
    %3128 = vmatpush.msra.mxu0 0.0
    %3129 = vmatpush.msra.mxu0 0.0
    %3130 = vmatpush.msra.mxu0 0.0
    %3131 = vmatpush.msra.mxu0 0.0
    %3132 = vmatpush.msra.mxu0 %v3009
    %3133 = vmatpush.msra.mxu0 %v3007
    %3134 = vmatpush.msra.mxu0 %v3005
    %3135 = vmatpush.msra.mxu0 %v3003
    %3136 = vmatpush.msra.mxu0 %v3001
    %3137 = vmatpush.msra.mxu0 %v2999
    %3138 = vmatpush.msra.mxu0 %v2997
    %3139 = vmatpush.msra.mxu0 %v2995
    %3140 = vmatmul.f32.gmra.mxu0 %v3122
    %v3141 = vpop.f32.mrf.mxu0
    %v3142 = vadd.f32 0.0, %v3141
    %3143 = vdwg.mxu0
    %3144 = vmatpush.msra.mxu0 0.0
    %3145 = vmatpush.msra.mxu0 0.0
    %3146 = vmatpush.msra.mxu0 0.0
    %3147 = vmatpush.msra.mxu0 0.0
    %3148 = vmatpush.msra.mxu0 0.0
    %3149 = vmatpush.msra.mxu0 0.0
    %3150 = vmatpush.msra.mxu0 0.0
    %3151 = vmatpush.msra.mxu0 0.0
    %3152 = vmatpush.msra.mxu0 %v3010
    %3153 = vmatpush.msra.mxu0 %v3008
    %3154 = vmatpush.msra.mxu0 %v3006
    %3155 = vmatpush.msra.mxu0 %v3004
    %3156 = vmatpush.msra.mxu0 %v3002
    %3157 = vmatpush.msra.mxu0 %v3000
    %3158 = vmatpush.msra.mxu0 %v2998
    %3159 = vmatpush.msra.mxu0 %v2996
    %3160 = vmatmul.f32.gmra.mxu0 %v3122
    %v3161 = vpop.f32.mrf.mxu0
    %v3162 = vadd.f32 0.0, %v3161
    %3163 = vdwg.mxu0
    %v3166 = vrot.slane %v3142, 6
    %v3167 = vrot.slane %v3162, 6
    %v3170 = vadd.f32 %v3119, %v3166
    %v3171 = vadd.f32 %v3120, %v3167
    %v3172 = vxor.u32 %v3170, 2147483648
    %v3173 = vxor.u32 %v3171, 2147483648
    %v3174 = vmul.f32 %v3172, 1.442695
    %v3175 = vpow.pop %v3174
    %v3176 = vmul.f32 %v3173, 1.442695
    %v3177 = vpow.pop %v3176
    %v3178 = vadd.f32 %v3175, 1.0
    %v3179 = vadd.f32 %v3177, 1.0
    %v3180 = vrcp.pop %v3178
    %v3181 = vmul.f32 %v3178, %v3180
    %v3182 = vsub.f32 1.0, %v3181
    %v3183 = vmul.f32 %v3180, %v3182
    %v3184 = vadd.f32 %v3180, %v3183
    %vm3185 = vweird.f32 %v3178
    %vm3186 = vweird.f32 %v3180
    %vm3187 = vmor %vm3185, %vm3186
    %v3188 = vsel %vm3187, %v3180, %v3184
    %v3189 = vand.u32 2147483647, %v3178
    %vm3190 = vcmp.eq.f32.partialorder %v3189, 8.507059e+37
    %v3191 = vand.u32 %v3178, 2147483648
    %v3192 = vor.u32 1.1754944e-38, %v3191
    %v3193 = vsel %vm3190, %v3192, %v3188
    %v3194 = vmul.f32 1.0, %v3193
    %v3195 = vrcp.pop %v3179
    %v3196 = vmul.f32 %v3179, %v3195
    %v3197 = vsub.f32 1.0, %v3196
    %v3198 = vmul.f32 %v3195, %v3197
    %v3199 = vadd.f32 %v3195, %v3198
    %vm3200 = vweird.f32 %v3179
    %vm3201 = vweird.f32 %v3195
    %vm3202 = vmor %vm3200, %vm3201
    %v3203 = vsel %vm3202, %v3195, %v3199
    %v3204 = vand.u32 2147483647, %v3179
    %vm3205 = vcmp.eq.f32.partialorder %v3204, 8.507059e+37
    %v3206 = vand.u32 %v3179, 2147483648
    %v3207 = vor.u32 1.1754944e-38, %v3206
    %v3208 = vsel %vm3205, %v3207, %v3203
    %v3209 = vmul.f32 1.0, %v3208
    %v3210 = vtanh.pop %v3171
    %v3212 = vrot.slane %v3111, 6
    %v3214 = vmul.f32 %v3194, %v3212
    %3216 = vrot.lane.b32.xlu0 %v3210, 64
    %v3217 = vpop.permute.xlu0 %3216
    %v3219 = vmul.f32 %v3194, %v3217
    %3221 = vrot.lane.b32.xlu0 %v3219, 64
    %v3222 = vpop.permute.xlu0 %3221
    %v3224 = vadd.f32 %v3214, %v3222
    %v3225 = vtanh.pop %v3224
    %3227 = vrot.lane.b32.xlu0 %v3225, 64
    %v3228 = vpop.permute.xlu0 %3227
    %v3230 = vmul.f32 %v3209, %v3228
    %3231 = vst.msk [vmem:[#allocation2] sm:$0xc] %vm413, %v3230
    %v3232 = vld [vmem:[#allocation3] sm:$0x30]
    %v3233 = vld [vmem:[#allocation3 + $0x8] sm:$0x30]
    %v3235 = vrot.slane %v3230, 2
    %v3236 = vsel %vm197, %v3235, 0
    %3238 = vmatpush.msra.mxu0 0.0
    %3239 = vmatpush.msra.mxu0 0.0
    %3240 = vmatpush.msra.mxu0 0.0
    %3241 = vmatpush.msra.mxu0 0.0
    %3242 = vmatpush.msra.mxu0 0.0
    %3243 = vmatpush.msra.mxu0 0.0
    %3244 = vmatpush.msra.mxu0 0.0
    %3245 = vmatpush.msra.mxu0 0.0
    %3246 = vmatpush.msra.mxu0 %v3009
    %3247 = vmatpush.msra.mxu0 %v3007
    %3248 = vmatpush.msra.mxu0 %v3005
    %3249 = vmatpush.msra.mxu0 %v3003
    %3250 = vmatpush.msra.mxu0 %v3001
    %3251 = vmatpush.msra.mxu0 %v2999
    %3252 = vmatpush.msra.mxu0 %v2997
    %3253 = vmatpush.msra.mxu0 %v2995
    %3254 = vmatmul.f32.gmra.mxu0 %v3236
    %v3255 = vpop.f32.mrf.mxu0
    %v3256 = vadd.f32 0.0, %v3255
    %3257 = vdwg.mxu0
    %3258 = vmatpush.msra.mxu0 0.0
    %3259 = vmatpush.msra.mxu0 0.0
    %3260 = vmatpush.msra.mxu0 0.0
    %3261 = vmatpush.msra.mxu0 0.0
    %3262 = vmatpush.msra.mxu0 0.0
    %3263 = vmatpush.msra.mxu0 0.0
    %3264 = vmatpush.msra.mxu0 0.0
    %3265 = vmatpush.msra.mxu0 0.0
    %3266 = vmatpush.msra.mxu0 %v3010
    %3267 = vmatpush.msra.mxu0 %v3008
    %3268 = vmatpush.msra.mxu0 %v3006
    %3269 = vmatpush.msra.mxu0 %v3004
    %3270 = vmatpush.msra.mxu0 %v3002
    %3271 = vmatpush.msra.mxu0 %v3000
    %3272 = vmatpush.msra.mxu0 %v2998
    %3273 = vmatpush.msra.mxu0 %v2996
    %3274 = vmatmul.f32.gmra.mxu0 %v3236
    %v3275 = vpop.f32.mrf.mxu0
    %v3276 = vadd.f32 0.0, %v3275
    %3277 = vdwg.mxu0
    %v3280 = vrot.slane %v3256, 4
    %v3281 = vrot.slane %v3276, 4
    %v3284 = vadd.f32 %v3232, %v3280
    %v3285 = vadd.f32 %v3233, %v3281
    %v3286 = vxor.u32 %v3284, 2147483648
    %v3287 = vxor.u32 %v3285, 2147483648
    %v3288 = vmul.f32 %v3286, 1.442695
    %v3289 = vpow.pop %v3288
    %v3290 = vmul.f32 %v3287, 1.442695
    %v3291 = vpow.pop %v3290
    %v3292 = vadd.f32 %v3289, 1.0
    %v3293 = vadd.f32 %v3291, 1.0
    %v3294 = vrcp.pop %v3292
    %v3295 = vmul.f32 %v3292, %v3294
    %v3296 = vsub.f32 1.0, %v3295
    %v3297 = vmul.f32 %v3294, %v3296
    %v3298 = vadd.f32 %v3294, %v3297
    %vm3299 = vweird.f32 %v3292
    %vm3300 = vweird.f32 %v3294
    %vm3301 = vmor %vm3299, %vm3300
    %v3302 = vsel %vm3301, %v3294, %v3298
    %v3303 = vand.u32 2147483647, %v3292
    %vm3304 = vcmp.eq.f32.partialorder %v3303, 8.507059e+37
    %v3305 = vand.u32 %v3292, 2147483648
    %v3306 = vor.u32 1.1754944e-38, %v3305
    %v3307 = vsel %vm3304, %v3306, %v3302
    %v3308 = vmul.f32 1.0, %v3307
    %v3309 = vrcp.pop %v3293
    %v3310 = vmul.f32 %v3293, %v3309
    %v3311 = vsub.f32 1.0, %v3310
    %v3312 = vmul.f32 %v3309, %v3311
    %v3313 = vadd.f32 %v3309, %v3312
    %vm3314 = vweird.f32 %v3293
    %vm3315 = vweird.f32 %v3309
    %vm3316 = vmor %vm3314, %vm3315
    %v3317 = vsel %vm3316, %v3309, %v3313
    %v3318 = vand.u32 2147483647, %v3293
    %vm3319 = vcmp.eq.f32.partialorder %v3318, 8.507059e+37
    %v3320 = vand.u32 %v3293, 2147483648
    %v3321 = vor.u32 1.1754944e-38, %v3320
    %v3322 = vsel %vm3319, %v3321, %v3317
    %v3323 = vmul.f32 1.0, %v3322
    %v3324 = vtanh.pop %v3285
    %v3326 = vrot.slane %v3224, 6
    %v3328 = vmul.f32 %v3308, %v3326
    %3330 = vrot.lane.b32.xlu0 %v3324, 64
    %v3331 = vpop.permute.xlu0 %3330
    %v3333 = vmul.f32 %v3308, %v3331
    %3335 = vrot.lane.b32.xlu0 %v3333, 64
    %v3336 = vpop.permute.xlu0 %3335
    %v3338 = vadd.f32 %v3328, %v3336
    %v3339 = vtanh.pop %v3338
    %3341 = vrot.lane.b32.xlu0 %v3339, 64
    %v3342 = vpop.permute.xlu0 %3341
    %v3344 = vmul.f32 %v3323, %v3342
    %3345 = vst.msk [vmem:[#allocation2] sm:$0x30] %vm528, %v3344
    %v3346 = vld [vmem:[#allocation3] sm:$0xc0]
    %v3347 = vld [vmem:[#allocation3 + $0x8] sm:$0xc0]
    %v3349 = vrot.slane %v3344, 4
    %v3350 = vsel %vm197, %v3349, 0
    %3352 = vmatpush.msra.mxu0 0.0
    %3353 = vmatpush.msra.mxu0 0.0
    %3354 = vmatpush.msra.mxu0 0.0
    %3355 = vmatpush.msra.mxu0 0.0
    %3356 = vmatpush.msra.mxu0 0.0
    %3357 = vmatpush.msra.mxu0 0.0
    %3358 = vmatpush.msra.mxu0 0.0
    %3359 = vmatpush.msra.mxu0 0.0
    %3360 = vmatpush.msra.mxu0 %v3009
    %3361 = vmatpush.msra.mxu0 %v3007
    %3362 = vmatpush.msra.mxu0 %v3005
    %3363 = vmatpush.msra.mxu0 %v3003
    %3364 = vmatpush.msra.mxu0 %v3001
    %3365 = vmatpush.msra.mxu0 %v2999
    %3366 = vmatpush.msra.mxu0 %v2997
    %3367 = vmatpush.msra.mxu0 %v2995
    %3368 = vmatmul.f32.gmra.mxu0 %v3350
    %v3369 = vpop.f32.mrf.mxu0
    %v3370 = vadd.f32 0.0, %v3369
    %3371 = vdwg.mxu0
    %3372 = vmatpush.msra.mxu0 0.0
    %3373 = vmatpush.msra.mxu0 0.0
    %3374 = vmatpush.msra.mxu0 0.0
    %3375 = vmatpush.msra.mxu0 0.0
    %3376 = vmatpush.msra.mxu0 0.0
    %3377 = vmatpush.msra.mxu0 0.0
    %3378 = vmatpush.msra.mxu0 0.0
    %3379 = vmatpush.msra.mxu0 0.0
    %3380 = vmatpush.msra.mxu0 %v3010
    %3381 = vmatpush.msra.mxu0 %v3008
    %3382 = vmatpush.msra.mxu0 %v3006
    %3383 = vmatpush.msra.mxu0 %v3004
    %3384 = vmatpush.msra.mxu0 %v3002
    %3385 = vmatpush.msra.mxu0 %v3000
    %3386 = vmatpush.msra.mxu0 %v2998
    %3387 = vmatpush.msra.mxu0 %v2996
    %3388 = vmatmul.f32.gmra.mxu0 %v3350
    %v3389 = vpop.f32.mrf.mxu0
    %v3390 = vadd.f32 0.0, %v3389
    %3391 = vdwg.mxu0
    %v3394 = vrot.slane %v3370, 2
    %v3395 = vrot.slane %v3390, 2
    %v3398 = vadd.f32 %v3346, %v3394
    %v3399 = vadd.f32 %v3347, %v3395
    %v3400 = vxor.u32 %v3398, 2147483648
    %v3401 = vxor.u32 %v3399, 2147483648
    %v3402 = vmul.f32 %v3400, 1.442695
    %v3403 = vpow.pop %v3402
    %v3404 = vmul.f32 %v3401, 1.442695
    %v3405 = vpow.pop %v3404
    %v3406 = vadd.f32 %v3403, 1.0
    %v3407 = vadd.f32 %v3405, 1.0
    %v3408 = vrcp.pop %v3406
    %v3409 = vmul.f32 %v3406, %v3408
    %v3410 = vsub.f32 1.0, %v3409
    %v3411 = vmul.f32 %v3408, %v3410
    %v3412 = vadd.f32 %v3408, %v3411
    %vm3413 = vweird.f32 %v3406
    %vm3414 = vweird.f32 %v3408
    %vm3415 = vmor %vm3413, %vm3414
    %v3416 = vsel %vm3415, %v3408, %v3412
    %v3417 = vand.u32 2147483647, %v3406
    %vm3418 = vcmp.eq.f32.partialorder %v3417, 8.507059e+37
    %v3419 = vand.u32 %v3406, 2147483648
    %v3420 = vor.u32 1.1754944e-38, %v3419
    %v3421 = vsel %vm3418, %v3420, %v3416
    %v3422 = vmul.f32 1.0, %v3421
    %v3423 = vrcp.pop %v3407
    %v3424 = vmul.f32 %v3407, %v3423
    %v3425 = vsub.f32 1.0, %v3424
    %v3426 = vmul.f32 %v3423, %v3425
    %v3427 = vadd.f32 %v3423, %v3426
    %vm3428 = vweird.f32 %v3407
    %vm3429 = vweird.f32 %v3423
    %vm3430 = vmor %vm3428, %vm3429
    %v3431 = vsel %vm3430, %v3423, %v3427
    %v3432 = vand.u32 2147483647, %v3407
    %vm3433 = vcmp.eq.f32.partialorder %v3432, 8.507059e+37
    %v3434 = vand.u32 %v3407, 2147483648
    %v3435 = vor.u32 1.1754944e-38, %v3434
    %v3436 = vsel %vm3433, %v3435, %v3431
    %v3437 = vmul.f32 1.0, %v3436
    %v3438 = vtanh.pop %v3399
    %v3440 = vrot.slane %v3338, 6
    %v3442 = vmul.f32 %v3422, %v3440
    %3444 = vrot.lane.b32.xlu0 %v3438, 64
    %v3445 = vpop.permute.xlu0 %3444
    %v3447 = vmul.f32 %v3422, %v3445
    %3449 = vrot.lane.b32.xlu0 %v3447, 64
    %v3450 = vpop.permute.xlu0 %3449
    %v3452 = vadd.f32 %v3442, %v3450
    %v3453 = vtanh.pop %v3452
    %3455 = vrot.lane.b32.xlu0 %v3453, 64
    %v3456 = vpop.permute.xlu0 %3455
    %v3458 = vmul.f32 %v3437, %v3456
    %3459 = vst.msk [vmem:[#allocation2] sm:$0xc0] %vm643, %v3458
    %v3460 = vld [vmem:[#allocation3 + $0x10] sm:$0x3]
    %v3461 = vld [vmem:[#allocation3 + $0x18] sm:$0x3]
    %v3463 = vrot.slane %v3458, 6
    %v3464 = vsel %vm197, %v3463, 0
    %3466 = vmatpush.msra.mxu0 0.0
    %3467 = vmatpush.msra.mxu0 0.0
    %3468 = vmatpush.msra.mxu0 0.0
    %3469 = vmatpush.msra.mxu0 0.0
    %3470 = vmatpush.msra.mxu0 0.0
    %3471 = vmatpush.msra.mxu0 0.0
    %3472 = vmatpush.msra.mxu0 0.0
    %3473 = vmatpush.msra.mxu0 0.0
    %3474 = vmatpush.msra.mxu0 %v3009
    %3475 = vmatpush.msra.mxu0 %v3007
    %3476 = vmatpush.msra.mxu0 %v3005
    %3477 = vmatpush.msra.mxu0 %v3003
    %3478 = vmatpush.msra.mxu0 %v3001
    %3479 = vmatpush.msra.mxu0 %v2999
    %3480 = vmatpush.msra.mxu0 %v2997
    %3481 = vmatpush.msra.mxu0 %v2995
    %3482 = vmatmul.f32.gmra.mxu0 %v3464
    %v3483 = vpop.f32.mrf.mxu0
    %v3484 = vadd.f32 0.0, %v3483
    %3485 = vdwg.mxu0
    %3486 = vmatpush.msra.mxu0 0.0
    %3487 = vmatpush.msra.mxu0 0.0
    %3488 = vmatpush.msra.mxu0 0.0
    %3489 = vmatpush.msra.mxu0 0.0
    %3490 = vmatpush.msra.mxu0 0.0
    %3491 = vmatpush.msra.mxu0 0.0
    %3492 = vmatpush.msra.mxu0 0.0
    %3493 = vmatpush.msra.mxu0 0.0
    %3494 = vmatpush.msra.mxu0 %v3010
    %3495 = vmatpush.msra.mxu0 %v3008
    %3496 = vmatpush.msra.mxu0 %v3006
    %3497 = vmatpush.msra.mxu0 %v3004
    %3498 = vmatpush.msra.mxu0 %v3002
    %3499 = vmatpush.msra.mxu0 %v3000
    %3500 = vmatpush.msra.mxu0 %v2998
    %3501 = vmatpush.msra.mxu0 %v2996
    %3502 = vmatmul.f32.gmra.mxu0 %v3464
    %v3503 = vpop.f32.mrf.mxu0
    %v3504 = vadd.f32 0.0, %v3503
    %3505 = vdwg.mxu0
    %v3506 = vadd.f32 %v3460, %v3484
    %v3507 = vadd.f32 %v3461, %v3504
    %v3508 = vxor.u32 %v3506, 2147483648
    %v3509 = vxor.u32 %v3507, 2147483648
    %v3510 = vmul.f32 %v3508, 1.442695
    %v3511 = vpow.pop %v3510
    %v3512 = vmul.f32 %v3509, 1.442695
    %v3513 = vpow.pop %v3512
    %v3514 = vadd.f32 %v3511, 1.0
    %v3515 = vadd.f32 %v3513, 1.0
    %v3516 = vrcp.pop %v3514
    %v3517 = vmul.f32 %v3514, %v3516
    %v3518 = vsub.f32 1.0, %v3517
    %v3519 = vmul.f32 %v3516, %v3518
    %v3520 = vadd.f32 %v3516, %v3519
    %vm3521 = vweird.f32 %v3514
    %vm3522 = vweird.f32 %v3516
    %vm3523 = vmor %vm3521, %vm3522
    %v3524 = vsel %vm3523, %v3516, %v3520
    %v3525 = vand.u32 2147483647, %v3514
    %vm3526 = vcmp.eq.f32.partialorder %v3525, 8.507059e+37
    %v3527 = vand.u32 %v3514, 2147483648
    %v3528 = vor.u32 1.1754944e-38, %v3527
    %v3529 = vsel %vm3526, %v3528, %v3524
    %v3530 = vmul.f32 1.0, %v3529
    %v3531 = vrcp.pop %v3515
    %v3532 = vmul.f32 %v3515, %v3531
    %v3533 = vsub.f32 1.0, %v3532
    %v3534 = vmul.f32 %v3531, %v3533
    %v3535 = vadd.f32 %v3531, %v3534
    %vm3536 = vweird.f32 %v3515
    %vm3537 = vweird.f32 %v3531
    %vm3538 = vmor %vm3536, %vm3537
    %v3539 = vsel %vm3538, %v3531, %v3535
    %v3540 = vand.u32 2147483647, %v3515
    %vm3541 = vcmp.eq.f32.partialorder %v3540, 8.507059e+37
    %v3542 = vand.u32 %v3515, 2147483648
    %v3543 = vor.u32 1.1754944e-38, %v3542
    %v3544 = vsel %vm3541, %v3543, %v3539
    %v3545 = vmul.f32 1.0, %v3544
    %v3546 = vtanh.pop %v3507
    %v3548 = vrot.slane %v3452, 6
    %v3550 = vmul.f32 %v3530, %v3548
    %3552 = vrot.lane.b32.xlu0 %v3546, 64
    %v3553 = vpop.permute.xlu0 %3552
    %v3555 = vmul.f32 %v3530, %v3553
    %3557 = vrot.lane.b32.xlu0 %v3555, 64
    %v3558 = vpop.permute.xlu0 %3557
    %v3560 = vadd.f32 %v3550, %v3558
    %v3561 = vtanh.pop %v3560
    %3563 = vrot.lane.b32.xlu0 %v3561, 64
    %v3564 = vpop.permute.xlu0 %3563
    %v3566 = vmul.f32 %v3545, %v3564
    %3567 = vst.msk [vmem:[#allocation2 + $0x8] sm:$0x3] %vm299, %v3566
    %v3568 = vld [vmem:[#allocation3 + $0x10] sm:$0xc]
    %v3569 = vld [vmem:[#allocation3 + $0x18] sm:$0xc]
    %v3571 = vsel %vm197, %v3566, 0
    %3573 = vmatpush.msra.mxu0 0.0
    %3574 = vmatpush.msra.mxu0 0.0
    %3575 = vmatpush.msra.mxu0 0.0
    %3576 = vmatpush.msra.mxu0 0.0
    %3577 = vmatpush.msra.mxu0 0.0
    %3578 = vmatpush.msra.mxu0 0.0
    %3579 = vmatpush.msra.mxu0 0.0
    %3580 = vmatpush.msra.mxu0 0.0
    %3581 = vmatpush.msra.mxu0 %v3009
    %3582 = vmatpush.msra.mxu0 %v3007
    %3583 = vmatpush.msra.mxu0 %v3005
    %3584 = vmatpush.msra.mxu0 %v3003
    %3585 = vmatpush.msra.mxu0 %v3001
    %3586 = vmatpush.msra.mxu0 %v2999
    %3587 = vmatpush.msra.mxu0 %v2997
    %3588 = vmatpush.msra.mxu0 %v2995
    %3589 = vmatmul.f32.gmra.mxu0 %v3571
    %v3590 = vpop.f32.mrf.mxu0
    %v3591 = vadd.f32 0.0, %v3590
    %3592 = vdwg.mxu0
    %3593 = vmatpush.msra.mxu0 0.0
    %3594 = vmatpush.msra.mxu0 0.0
    %3595 = vmatpush.msra.mxu0 0.0
    %3596 = vmatpush.msra.mxu0 0.0
    %3597 = vmatpush.msra.mxu0 0.0
    %3598 = vmatpush.msra.mxu0 0.0
    %3599 = vmatpush.msra.mxu0 0.0
    %3600 = vmatpush.msra.mxu0 0.0
    %3601 = vmatpush.msra.mxu0 %v3010
    %3602 = vmatpush.msra.mxu0 %v3008
    %3603 = vmatpush.msra.mxu0 %v3006
    %3604 = vmatpush.msra.mxu0 %v3004
    %3605 = vmatpush.msra.mxu0 %v3002
    %3606 = vmatpush.msra.mxu0 %v3000
    %3607 = vmatpush.msra.mxu0 %v2998
    %3608 = vmatpush.msra.mxu0 %v2996
    %3609 = vmatmul.f32.gmra.mxu0 %v3571
    %v3610 = vpop.f32.mrf.mxu0
    %v3611 = vadd.f32 0.0, %v3610
    %3612 = vdwg.mxu0
    %v3615 = vrot.slane %v3591, 6
    %v3616 = vrot.slane %v3611, 6
    %v3619 = vadd.f32 %v3568, %v3615
    %v3620 = vadd.f32 %v3569, %v3616
    %v3621 = vxor.u32 %v3619, 2147483648
    %v3622 = vxor.u32 %v3620, 2147483648
    %v3623 = vmul.f32 %v3621, 1.442695
    %v3624 = vpow.pop %v3623
    %v3625 = vmul.f32 %v3622, 1.442695
    %v3626 = vpow.pop %v3625
    %v3627 = vadd.f32 %v3624, 1.0
    %v3628 = vadd.f32 %v3626, 1.0
    %v3629 = vrcp.pop %v3627
    %v3630 = vmul.f32 %v3627, %v3629
    %v3631 = vsub.f32 1.0, %v3630
    %v3632 = vmul.f32 %v3629, %v3631
    %v3633 = vadd.f32 %v3629, %v3632
    %vm3634 = vweird.f32 %v3627
    %vm3635 = vweird.f32 %v3629
    %vm3636 = vmor %vm3634, %vm3635
    %v3637 = vsel %vm3636, %v3629, %v3633
    %v3638 = vand.u32 2147483647, %v3627
    %vm3639 = vcmp.eq.f32.partialorder %v3638, 8.507059e+37
    %v3640 = vand.u32 %v3627, 2147483648
    %v3641 = vor.u32 1.1754944e-38, %v3640
    %v3642 = vsel %vm3639, %v3641, %v3637
    %v3643 = vmul.f32 1.0, %v3642
    %v3644 = vrcp.pop %v3628
    %v3645 = vmul.f32 %v3628, %v3644
    %v3646 = vsub.f32 1.0, %v3645
    %v3647 = vmul.f32 %v3644, %v3646
    %v3648 = vadd.f32 %v3644, %v3647
    %vm3649 = vweird.f32 %v3628
    %vm3650 = vweird.f32 %v3644
    %vm3651 = vmor %vm3649, %vm3650
    %v3652 = vsel %vm3651, %v3644, %v3648
    %v3653 = vand.u32 2147483647, %v3628
    %vm3654 = vcmp.eq.f32.partialorder %v3653, 8.507059e+37
    %v3655 = vand.u32 %v3628, 2147483648
    %v3656 = vor.u32 1.1754944e-38, %v3655
    %v3657 = vsel %vm3654, %v3656, %v3652
    %v3658 = vmul.f32 1.0, %v3657
    %v3659 = vtanh.pop %v3620
    %v3661 = vrot.slane %v3560, 6
    %v3663 = vmul.f32 %v3643, %v3661
    %3665 = vrot.lane.b32.xlu0 %v3659, 64
    %v3666 = vpop.permute.xlu0 %3665
    %v3668 = vmul.f32 %v3643, %v3666
    %3670 = vrot.lane.b32.xlu0 %v3668, 64
    %v3671 = vpop.permute.xlu0 %3670
    %v3673 = vadd.f32 %v3663, %v3671
    %v3674 = vtanh.pop %v3673
    %3676 = vrot.lane.b32.xlu0 %v3674, 64
    %v3677 = vpop.permute.xlu0 %3676
    %v3679 = vmul.f32 %v3658, %v3677
    %3680 = vst.msk [vmem:[#allocation2 + $0x8] sm:$0xc] %vm413, %v3679
    %v3681 = vld [vmem:[#allocation3 + $0x10] sm:$0x30]
    %v3682 = vld [vmem:[#allocation3 + $0x18] sm:$0x30]
    %v3684 = vrot.slane %v3679, 2
    %v3685 = vsel %vm197, %v3684, 0
    %3687 = vmatpush.msra.mxu0 0.0
    %3688 = vmatpush.msra.mxu0 0.0
    %3689 = vmatpush.msra.mxu0 0.0
    %3690 = vmatpush.msra.mxu0 0.0
    %3691 = vmatpush.msra.mxu0 0.0
    %3692 = vmatpush.msra.mxu0 0.0
    %3693 = vmatpush.msra.mxu0 0.0
    %3694 = vmatpush.msra.mxu0 0.0
    %3695 = vmatpush.msra.mxu0 %v3009
    %3696 = vmatpush.msra.mxu0 %v3007
    %3697 = vmatpush.msra.mxu0 %v3005
    %3698 = vmatpush.msra.mxu0 %v3003
    %3699 = vmatpush.msra.mxu0 %v3001
    %3700 = vmatpush.msra.mxu0 %v2999
    %3701 = vmatpush.msra.mxu0 %v2997
    %3702 = vmatpush.msra.mxu0 %v2995
    %3703 = vmatmul.f32.gmra.mxu0 %v3685
    %v3704 = vpop.f32.mrf.mxu0
    %v3705 = vadd.f32 0.0, %v3704
    %3706 = vdwg.mxu0
    %3707 = vmatpush.msra.mxu0 0.0
    %3708 = vmatpush.msra.mxu0 0.0
    %3709 = vmatpush.msra.mxu0 0.0
    %3710 = vmatpush.msra.mxu0 0.0
    %3711 = vmatpush.msra.mxu0 0.0
    %3712 = vmatpush.msra.mxu0 0.0
    %3713 = vmatpush.msra.mxu0 0.0
    %3714 = vmatpush.msra.mxu0 0.0
    %3715 = vmatpush.msra.mxu0 %v3010
    %3716 = vmatpush.msra.mxu0 %v3008
    %3717 = vmatpush.msra.mxu0 %v3006
    %3718 = vmatpush.msra.mxu0 %v3004
    %3719 = vmatpush.msra.mxu0 %v3002
    %3720 = vmatpush.msra.mxu0 %v3000
    %3721 = vmatpush.msra.mxu0 %v2998
    %3722 = vmatpush.msra.mxu0 %v2996
    %3723 = vmatmul.f32.gmra.mxu0 %v3685
    %v3724 = vpop.f32.mrf.mxu0
    %v3725 = vadd.f32 0.0, %v3724
    %3726 = vdwg.mxu0
    %v3729 = vrot.slane %v3705, 4
    %v3730 = vrot.slane %v3725, 4
    %v3733 = vadd.f32 %v3681, %v3729
    %v3734 = vadd.f32 %v3682, %v3730
    %v3735 = vxor.u32 %v3733, 2147483648
    %v3736 = vxor.u32 %v3734, 2147483648
    %v3737 = vmul.f32 %v3735, 1.442695
    %v3738 = vpow.pop %v3737
    %v3739 = vmul.f32 %v3736, 1.442695
    %v3740 = vpow.pop %v3739
    %v3741 = vadd.f32 %v3738, 1.0
    %v3742 = vadd.f32 %v3740, 1.0
    %v3743 = vrcp.pop %v3741
    %v3744 = vmul.f32 %v3741, %v3743
    %v3745 = vsub.f32 1.0, %v3744
    %v3746 = vmul.f32 %v3743, %v3745
    %v3747 = vadd.f32 %v3743, %v3746
    %vm3748 = vweird.f32 %v3741
    %vm3749 = vweird.f32 %v3743
    %vm3750 = vmor %vm3748, %vm3749
    %v3751 = vsel %vm3750, %v3743, %v3747
    %v3752 = vand.u32 2147483647, %v3741
    %vm3753 = vcmp.eq.f32.partialorder %v3752, 8.507059e+37
    %v3754 = vand.u32 %v3741, 2147483648
    %v3755 = vor.u32 1.1754944e-38, %v3754
    %v3756 = vsel %vm3753, %v3755, %v3751
    %v3757 = vmul.f32 1.0, %v3756
    %v3758 = vrcp.pop %v3742
    %v3759 = vmul.f32 %v3742, %v3758
    %v3760 = vsub.f32 1.0, %v3759
    %v3761 = vmul.f32 %v3758, %v3760
    %v3762 = vadd.f32 %v3758, %v3761
    %vm3763 = vweird.f32 %v3742
    %vm3764 = vweird.f32 %v3758
    %vm3765 = vmor %vm3763, %vm3764
    %v3766 = vsel %vm3765, %v3758, %v3762
    %v3767 = vand.u32 2147483647, %v3742
    %vm3768 = vcmp.eq.f32.partialorder %v3767, 8.507059e+37
    %v3769 = vand.u32 %v3742, 2147483648
    %v3770 = vor.u32 1.1754944e-38, %v3769
    %v3771 = vsel %vm3768, %v3770, %v3766
    %v3772 = vmul.f32 1.0, %v3771
    %v3773 = vtanh.pop %v3734
    %v3775 = vrot.slane %v3673, 6
    %v3777 = vmul.f32 %v3757, %v3775
    %3779 = vrot.lane.b32.xlu0 %v3773, 64
    %v3780 = vpop.permute.xlu0 %3779
    %v3782 = vmul.f32 %v3757, %v3780
    %3784 = vrot.lane.b32.xlu0 %v3782, 64
    %v3785 = vpop.permute.xlu0 %3784
    %v3787 = vadd.f32 %v3777, %v3785
    %v3788 = vtanh.pop %v3787
    %3790 = vrot.lane.b32.xlu0 %v3788, 64
    %v3791 = vpop.permute.xlu0 %3790
    %v3793 = vmul.f32 %v3772, %v3791
    %3794 = vst.msk [vmem:[#allocation2 + $0x8] sm:$0x30] %vm528, %v3793
    %v3795 = vld [vmem:[#allocation3 + $0x10] sm:$0xc0]
    %v3796 = vld [vmem:[#allocation3 + $0x18] sm:$0xc0]
    %v3798 = vrot.slane %v3793, 4
    %v3799 = vsel %vm197, %v3798, 0
    %3801 = vmatpush.msra.mxu0 0.0
    %3802 = vmatpush.msra.mxu0 0.0
    %3803 = vmatpush.msra.mxu0 0.0
    %3804 = vmatpush.msra.mxu0 0.0
    %3805 = vmatpush.msra.mxu0 0.0
    %3806 = vmatpush.msra.mxu0 0.0
    %3807 = vmatpush.msra.mxu0 0.0
    %3808 = vmatpush.msra.mxu0 0.0
    %3809 = vmatpush.msra.mxu0 %v3009
    %3810 = vmatpush.msra.mxu0 %v3007
    %3811 = vmatpush.msra.mxu0 %v3005
    %3812 = vmatpush.msra.mxu0 %v3003
    %3813 = vmatpush.msra.mxu0 %v3001
    %3814 = vmatpush.msra.mxu0 %v2999
    %3815 = vmatpush.msra.mxu0 %v2997
    %3816 = vmatpush.msra.mxu0 %v2995
    %3817 = vmatmul.f32.gmra.mxu0 %v3799
    %v3818 = vpop.f32.mrf.mxu0
    %v3819 = vadd.f32 0.0, %v3818
    %3820 = vdwg.mxu0
    %3821 = vmatpush.msra.mxu0 0.0
    %3822 = vmatpush.msra.mxu0 0.0
    %3823 = vmatpush.msra.mxu0 0.0
    %3824 = vmatpush.msra.mxu0 0.0
    %3825 = vmatpush.msra.mxu0 0.0
    %3826 = vmatpush.msra.mxu0 0.0
    %3827 = vmatpush.msra.mxu0 0.0
    %3828 = vmatpush.msra.mxu0 0.0
    %3829 = vmatpush.msra.mxu0 %v3010
    %3830 = vmatpush.msra.mxu0 %v3008
    %3831 = vmatpush.msra.mxu0 %v3006
    %3832 = vmatpush.msra.mxu0 %v3004
    %3833 = vmatpush.msra.mxu0 %v3002
    %3834 = vmatpush.msra.mxu0 %v3000
    %3835 = vmatpush.msra.mxu0 %v2998
    %3836 = vmatpush.msra.mxu0 %v2996
    %3837 = vmatmul.f32.gmra.mxu0 %v3799
    %v3838 = vpop.f32.mrf.mxu0
    %v3839 = vadd.f32 0.0, %v3838
    %3840 = vdwg.mxu0
    %v3843 = vrot.slane %v3819, 2
    %v3844 = vrot.slane %v3839, 2
    %v3847 = vadd.f32 %v3795, %v3843
    %v3848 = vadd.f32 %v3796, %v3844
    %v3849 = vxor.u32 %v3847, 2147483648
    %v3850 = vxor.u32 %v3848, 2147483648
    %v3851 = vmul.f32 %v3849, 1.442695
    %v3852 = vpow.pop %v3851
    %v3853 = vmul.f32 %v3850, 1.442695
    %v3854 = vpow.pop %v3853
    %v3855 = vadd.f32 %v3852, 1.0
    %v3856 = vadd.f32 %v3854, 1.0
    %v3857 = vrcp.pop %v3855
    %v3858 = vmul.f32 %v3855, %v3857
    %v3859 = vsub.f32 1.0, %v3858
    %v3860 = vmul.f32 %v3857, %v3859
    %v3861 = vadd.f32 %v3857, %v3860
    %vm3862 = vweird.f32 %v3855
    %vm3863 = vweird.f32 %v3857
    %vm3864 = vmor %vm3862, %vm3863
    %v3865 = vsel %vm3864, %v3857, %v3861
    %v3866 = vand.u32 2147483647, %v3855
    %vm3867 = vcmp.eq.f32.partialorder %v3866, 8.507059e+37
    %v3868 = vand.u32 %v3855, 2147483648
    %v3869 = vor.u32 1.1754944e-38, %v3868
    %v3870 = vsel %vm3867, %v3869, %v3865
    %v3871 = vmul.f32 1.0, %v3870
    %v3872 = vrcp.pop %v3856
    %v3873 = vmul.f32 %v3856, %v3872
    %v3874 = vsub.f32 1.0, %v3873
    %v3875 = vmul.f32 %v3872, %v3874
    %v3876 = vadd.f32 %v3872, %v3875
    %vm3877 = vweird.f32 %v3856
    %vm3878 = vweird.f32 %v3872
    %vm3879 = vmor %vm3877, %vm3878
    %v3880 = vsel %vm3879, %v3872, %v3876
    %v3881 = vand.u32 2147483647, %v3856
    %vm3882 = vcmp.eq.f32.partialorder %v3881, 8.507059e+37
    %v3883 = vand.u32 %v3856, 2147483648
    %v3884 = vor.u32 1.1754944e-38, %v3883
    %v3885 = vsel %vm3882, %v3884, %v3880
    %v3886 = vmul.f32 1.0, %v3885
    %v3887 = vtanh.pop %v3848
    %v3889 = vrot.slane %v3787, 6
    %v3891 = vmul.f32 %v3871, %v3889
    %3893 = vrot.lane.b32.xlu0 %v3887, 64
    %v3894 = vpop.permute.xlu0 %3893
    %v3896 = vmul.f32 %v3871, %v3894
    %3898 = vrot.lane.b32.xlu0 %v3896, 64
    %v3899 = vpop.permute.xlu0 %3898
    %v3901 = vadd.f32 %v3891, %v3899
    %v3902 = vtanh.pop %v3901
    %3904 = vrot.lane.b32.xlu0 %v3902, 64
    %v3905 = vpop.permute.xlu0 %3904
    %v3907 = vmul.f32 %v3886, %v3905
    %3908 = vst.msk [vmem:[#allocation2 + $0x8] sm:$0xc0] %vm643, %v3907
    %v3909 = vld [vmem:[#allocation2] sm:$0xff]
    %v3910 = vld [vmem:[#allocation2 + $0x8] sm:$0xff]
    %v3911 = vld [vmem:[%s12] sm:$0x1]
    %v3913 = vperm.slane %v3911, 0
    %v3915 = vmul.f32 %v3909, %v3913
    %v3916 = vmul.f32 %v3910, %v3913
    %v3917 = vsel %vm197, %v3915, 0.0
    %3918 = vadd.xlane.f32.xlu0 %v3917
    %v3919 = vpop.xlane.xlu0 %3918
    %v3920 = vsel %vm197, %v3916, 0.0
    %3921 = vadd.xlane.f32.xlu0 %v3920
    %v3922 = vpop.xlane.xlu0 %3921
    %v3923 = vld [vmem:[#allocation4] sm:$0x1]
    %v3925 = vperm.slane %v3923, 0
    %v3927 = vadd.f32 %v3919, %v3925
    %v3928 = vadd.f32 %v3922, %v3925
    %vm3929 = vcmask 7168
    %3930 = vst.msk [vmem:[%s14] sm:$0xff] %vm3929, %v3927
    %3931 = vst.msk [vmem:[%s14 + $0x8] sm:$0xff] %vm3929, %v3928
    // Predicated region
    $region82: #{tpu_custom_call.1} parent=1 // pred_check
      _
    $region83: #{tpu_custom_call.1} parent=1 // pred_check_branch
      %3933 = sbr.rel (0) target = $region85
    $region84: #{tpu_custom_call.1} parent=1 // pred_region
      _
    $region85: #{tpu_custom_call.1} parent=1 // pred_fallthru
      _
    // Predicated region
    $region86: #{tpu_custom_call.1} parent=1 // pred_check
      _
    $region87: #{tpu_custom_call.1} parent=1 // pred_check_branch
      %3935 = sbr.rel (0) target = $region89
    $region88: #{tpu_custom_call.1} parent=1 // pred_region
      _
    $region89: #{tpu_custom_call.1} parent=1 // pred_fallthru
      _
    %3936 = vsyncpa [#allocation6], 1
    %3937 = vsyncpa [#allocation8], 1
    %3938 = vsyncpa [#allocation11], 1
    %3939 = vsyncpa [#allocation14], 1

</llo_original>
